<compile_context>
chip_gen: v7x
topology: tpu7x:2x2x1
jax: 0.10.0
libtpu: 0.0.40
codegen_flags: <defaults>
</compile_context>

<pallas_src>
import functools
import math

import jax
import jax.numpy as jnp
from jax.experimental import pallas as pl
from jax.experimental.pallas import tpu as pltpu

_LANE = 128
_BN_EPS = 1e-5
_ROW_TILE_M = 256          # target rows*width (M) fed to the MXU per grid step


def _round_up(x, m):
    return (x + m - 1) // m * m


def _pad_ch(c):
    # Network input (3 ch) is padded only to 8 lanes (review: don't pad 3->128);
    # intermediate activations are padded to a full 128-lane tile.
    return _round_up(c, 8) if c <= 8 else _round_up(c, _LANE)


def _default_vmem_limit():
    # v5e/v6e: 128 MiB physical -> 96 MiB; v7x: 64 MiB physical -> 48 MiB.
    try:
        cap = int(pltpu.get_tpu_info().vmem_capacity_bytes)
        return min((cap * 3) // 4, 96 * 1024 * 1024)
    except Exception:
        return 48 * 1024 * 1024


_VMEM_LIMIT = int(_default_vmem_limit())


# ----------------------------------------------------------------------------
# Pallas kernels
# ----------------------------------------------------------------------------
def _conv_block_kernel(*refs, taps, tr, wo, cin, cout, has_join, has_pad,
                       hsrc, wsrc, kconcat):
    """Fused 3x3 conv (+folded BN & join scale) + bias + ReLU for one row tile.

    refs = (x, w, b[, join], out[, pad_scratch][, patch_scratch])
      x     : (Hx, Wx, G*cin) bf16  whole image, resident across the row axis
      w     : (9*cin, cout)   bf16  taps stacked along K (scales pre-folded)
      b     : (1, cout)       f32
      join  : (tr, wo, cout)  f32   running fractal-column sum (optional)
      out   : (tr, wo, cout)  bf16 / f32
      pad   : (Hp, W+2, cin)  bf16  in-kernel zero-padded image (stride-1 only)
      patch : (tr, wo, 9*cin) bf16  K-concat tap patch (128-padded cin only)
    """
    refs = list(refs)
    patch_ref = refs.pop() if kconcat else None
    pad_ref = refs.pop() if has_pad else None
    if has_join:
        x_ref, w_ref, b_ref, j_ref, o_ref = refs
    else:
        x_ref, w_ref, b_ref, o_ref = refs
        j_ref = None

    r = pl.program_id(1)

    if has_pad:
        # Build the spatially zero-padded image in VMEM once per batch element
        # (r == 0) instead of materializing jnp.pad(x) in HBM before the kernel.
        @pl.when(r == 0)
        def _fill_padded():
            pad_ref[...] = jnp.zeros_like(pad_ref)
            pad_ref[pl.ds(1, hsrc), pl.ds(1, wsrc), :] = x_ref[...]

        src = pad_ref
    else:
        src = x_ref

    row0 = r * tr
    m = tr * wo

    def tap_slice(cg, qh, qw):
        return src[pl.ds(row0 + qh, tr), pl.ds(qw, wo), pl.ds(cg * cin, cin)]

    if kconcat:
        # Pack the 9 shifted tap views into one (M, 9*cin) patch and contract in
        # a single matmul: accumulation stays inside the MXU (v6e/v7x fill).
        for t, tap in enumerate(taps):
            patch_ref[:, :, pl.ds(t * cin, cin)] = tap_slice(*tap)
        acc = jnp.dot(patch_ref[...].reshape(m, 9 * cin), w_ref[...],
                      preferred_element_type=jnp.float32)
    else:
        # Tiny-K first conv (cin padded only to 8): 9 small dots, f32 accumulate.
        acc = jnp.zeros((m, cout), jnp.float32)
        for t, tap in enumerate(taps):
            acc = acc + jnp.dot(tap_slice(*tap).reshape(m, cin),
                                w_ref[pl.ds(t * cin, cin), :],
                                preferred_element_type=jnp.float32)

    y = jnp.maximum(acc + b_ref[...], 0.0)          # f32 epilogue (no bf16 VPU on v5e)
    y = y.reshape(tr, wo, cout)
    if has_join:
        y = y + j_ref[...].astype(jnp.float32)      # fractal join accumulated in f32
    o_ref[...] = y.astype(o_ref.dtype)


def _pool_fc_kernel(x_ref, w_ref, b_ref, o_ref):
    # x: (tn, HW, Cp) bf16 -> global average pool (f32) -> FC on the MXU.
    pooled = jnp.mean(x_ref[...].astype(jnp.float32), axis=1)
    o_ref[...] = (jnp.dot(pooled.astype(jnp.bfloat16), w_ref[...],
                          preferred_element_type=jnp.float32) + b_ref[...])


# ----------------------------------------------------------------------------
# Wrappers
# ----------------------------------------------------------------------------
def conv_block_apply(x, blk, *, join_acc=None, out_dtype=jnp.bfloat16):
    """ConvBlock (Conv3x3 bias=False -> BN(eval) -> ReLU) as one fused kernel.

    x : (N, H, W, cin_p) bf16, channels already lane-padded.
    Returns join_acc + scale*ReLU(BN(Conv(x))) with shape (N, Ho, Wo, cout_p).
    """
    N, H, W, cp = x.shape
    stride = blk["stride"]
    w, b = blk["w"], blk["b"]
    cin_p, cout_p = blk["cin_p"], blk["cout_p"]
    assert cp == cin_p, (cp, cin_p)

    if stride == 1:
        ho, wo = H, W
        xin = x                                   # no HBM pad: padding is in-kernel
        taps = tuple((0, kh, kw) for kh in range(3) for kw in range(3))
        has_pad = True
    else:
        assert stride == 2 and H % 2 == 0 and W % 2 == 0
        ho, wo = H // 2, W // 2
        # One fused pad + space-to-depth materialization so every in-kernel
        # slice is stride-1.  (In-kernel strided slices would remove even this.)
        xp = jnp.pad(x, ((0, 0), (1, 1), (1, 1), (0, 0)))
        xin = jnp.concatenate([xp[:, a::2, b::2, :] for a in range(2)
                               for b in range(2)], axis=-1)   # (N, ho+1, wo+1, 4cin)
        taps = tuple(((kh % 2) * 2 + (kw % 2), kh // 2, kw // 2)
                     for kh in range(3) for kw in range(3))
        has_pad = False

    kconcat = (cin_p % _LANE == 0)

    # Row tile: as many rows as fit the target M; ragged last tile allowed.
    tr = max(1, min(ho, _ROW_TILE_M // max(1, wo)))
    grid_r = pl.cdiv(ho, tr)

    scratch = []
    if has_pad:
        # Padded-image scratch; sized so a ragged last row tile never reads OOB.
        scratch.append(pltpu.VMEM((grid_r * tr + 2, W + 2, cin_p), jnp.bfloat16))
        hx, wx, gc = H, W, cin_p
        semantics = ("parallel", "arbitrary")     # scratch filled once per batch
    else:
        hx, wx, gc = xin.shape[1], xin.shape[2], xin.shape[3]
        need = grid_r * tr + 1                    # keep ragged-tile reads in bounds
        if hx < need:
            xin = jnp.pad(xin, ((0, 0), (0, need - hx), (0, 0), (0, 0)))
            hx = need
        semantics = ("parallel", "parallel")
    if kconcat:
        scratch.append(pltpu.VMEM((tr, wo, 9 * cin_p), jnp.bfloat16))

    x_spec = pl.BlockSpec((None, hx, wx, gc), lambda n, r: (n, 0, 0, 0))
    w_spec = pl.BlockSpec((9 * cin_p, cout_p), lambda n, r: (0, 0))
    b_spec = pl.BlockSpec((1, cout_p), lambda n, r: (0, 0))
    o_spec = pl.BlockSpec((None, tr, wo, cout_p), lambda n, r: (n, r, 0, 0))

    in_specs = [x_spec, w_spec, b_spec]
    operands = [xin, w, b]
    if join_acc is not None:
        in_specs.append(o_spec)
        operands.append(join_acc)

    kernel = functools.partial(
        _conv_block_kernel, taps=taps, tr=tr, wo=wo, cin=cin_p, cout=cout_p,
        has_join=join_acc is not None, has_pad=has_pad, hsrc=H, wsrc=W,
        kconcat=kconcat)

    return pl.pallas_call(
        kernel,
        out_shape=jax.ShapeDtypeStruct((N, ho, wo, cout_p), out_dtype),
        grid_spec=pltpu.PrefetchScalarGridSpec(
            num_scalar_prefetch=0, grid=(N, grid_r),
            in_specs=in_specs, out_specs=o_spec, scratch_shapes=scratch),
        compiler_params=pltpu.CompilerParams(
            dimension_semantics=semantics, vmem_limit_bytes=_VMEM_LIMIT),
    )(*operands)


def pool_fc(x, w, b, num_classes):
    """AdaptiveAvgPool2d((1,1)) + flatten + Linear, tiled over the batch."""
    N, H, W, cp = x.shape
    hw = H * W
    ncp = w.shape[1]
    x_flat = x.reshape(N, hw, cp)
    tn = max(8, min(64, _round_up(N, 8)))         # larger sublane-aligned batch tile
    npad = _round_up(N, tn)
    if npad != N:
        x_flat = jnp.pad(x_flat, ((0, npad - N), (0, 0), (0, 0)))
    out = pl.pallas_call(
        _pool_fc_kernel,
        out_shape=jax.ShapeDtypeStruct((npad, ncp), jnp.float32),
        grid_spec=pltpu.PrefetchScalarGridSpec(
            num_scalar_prefetch=0, grid=(npad // tn,),
            in_specs=[pl.BlockSpec((tn, hw, cp), lambda i: (i, 0, 0)),
                      pl.BlockSpec((cp, ncp), lambda i: (0, 0)),
                      pl.BlockSpec((1, ncp), lambda i: (0, 0))],
            out_specs=pl.BlockSpec((tn, ncp), lambda i: (i, 0))),
        compiler_params=pltpu.CompilerParams(
            dimension_semantics=("parallel",), vmem_limit_bytes=_VMEM_LIMIT),
    )(x_flat, w, b)
    return out[:N, :num_classes]


# ----------------------------------------------------------------------------
# Deterministic parameter init (mirrors _initialize_weights, eval-mode BN)
# ----------------------------------------------------------------------------
def init_conv_block(key, cin, cout, stride=1, out_scale=1.0):
    cin_p, cout_p = _pad_ch(cin), _pad_ch(cout)
    # kaiming_normal_(mode='fan_out', relu) -> std = sqrt(2 / (cout*3*3))
    std = math.sqrt(2.0 / (cout * 9))
    w = jax.random.normal(key, (3, 3, cin, cout), dtype=jnp.float32) * std
    # BatchNorm(eval): gamma=1, beta=0, running_mean=0, running_var=1.
    bn_scale = jnp.full((cout,), 1.0 / math.sqrt(1.0 + _BN_EPS), jnp.float32)
    bn_bias = jnp.zeros((cout,), jnp.float32)
    # Fold BN scale AND the fractal-join mean scale (out_scale > 0, so the fold
    # commutes with ReLU) into the conv weights / bias.
    scale = bn_scale * out_scale
    bias = bn_bias * out_scale
    w_folded = w * scale[None, None, None, :]
    w_pad = jnp.zeros((9, cin_p, cout_p), jnp.float32)
    w_pad = w_pad.at[:, :cin, :cout].set(w_folded.reshape(9, cin, cout))
    b_pad = jnp.zeros((1, cout_p), jnp.float32).at[:, :cout].set(bias[None, :])
    return {"w": w_pad.reshape(9 * cin_p, cout_p).astype(jnp.bfloat16),
            "b": b_pad, "stride": stride, "cin_p": cin_p, "cout_p": cout_p}


def build_fractalnet(key, num_classes=10, num_columns=3, channels=(64, 128)):
    keys = iter(jax.random.split(key, 256))
    params = {"conv1": init_conv_block(next(keys), 3, 64, stride=1)}
    blocks = []
    in_c = 64
    for i, out_c in enumerate(channels):
        stride = 1 if i == 0 else 2
        cols = []
        for c in range(num_columns):
            depth = 2 ** c
            col = []
            for d in range(depth):
                cin = in_c if d == 0 else out_c
                s = stride if d == 0 else 1
                last = (d == depth - 1)
                scale = (1.0 / num_columns) if (num_columns > 1 and last) else 1.0
                col.append(init_conv_block(next(keys), cin, out_c, stride=s,
                                           out_scale=scale))
            cols.append(col)
        blocks.append(cols)
        in_c = out_c
    params["blocks"] = blocks
    # fc: matches the module's init (normal(0, 0.01) weight, zero bias).
    c_p, nc_p = _pad_ch(in_c), _round_up(num_classes, _LANE)
    fc_w = jax.random.normal(next(keys), (in_c, num_classes), jnp.float32) * 0.01
    fc_w_pad = jnp.zeros((c_p, nc_p), jnp.float32).at[:in_c, :num_classes].set(fc_w)
    params["fc_w"] = fc_w_pad.astype(jnp.bfloat16)
    params["fc_b"] = jnp.zeros((1, nc_p), jnp.float32)
    params["num_classes"] = num_classes
    return params


# ----------------------------------------------------------------------------
# Forward pass (eval mode: all fractal columns active, dropout = identity)
# ----------------------------------------------------------------------------
def fractalnet_forward(x_nchw, params):
    x = jnp.transpose(x_nchw, (0, 2, 3, 1)).astype(jnp.float32)   # NCHW -> NHWC
    cin_p = params["conv1"]["cin_p"]                              # 3 -> 8 (not 128)
    x = jnp.pad(x, ((0, 0), (0, 0), (0, 0), (0, cin_p - x.shape[-1])))
    x = x.astype(jnp.bfloat16)

    x = conv_block_apply(x, params["conv1"])
    for cols in params["blocks"]:
        ncols = len(cols)
        if ncols == 1:
            out = x
            for blk in cols[0]:
                out = conv_block_apply(out, blk)
            x = out
        else:
            # torch.stack(outputs).mean(0): 1/ncols is folded into each column's
            # last-block weights; partial sums are carried in f32, cast once.
            joined = None
            for ci, col in enumerate(cols):
                out = x
                for blk in col[:-1]:
                    out = conv_block_apply(out, blk)
                last = (ci == ncols - 1)
                joined = conv_block_apply(
                    out, col[-1], join_acc=joined,
                    out_dtype=jnp.bfloat16 if last else jnp.float32)
            x = joined
    # Dropout(0.2) is identity in eval mode.
    return pool_fc(x, params["fc_w"], params["fc_b"], params["num_classes"])


# ----------------------------------------------------------------------------
if __name__ == "__main__":
    key = jax.random.PRNGKey(0)
    k_param, k_input = jax.random.split(key)

    num_classes = 10
    num_columns = 3
    channels = (64, 128)       # first two stages of the reference config (small)

    params = build_fractalnet(k_param, num_classes=num_classes,
                              num_columns=num_columns, channels=channels)

    x = jax.random.normal(k_input, (2, 3, 16, 16), dtype=jnp.float32)  # NCHW input

    logits = fractalnet_forward(x, params)
    logits = jax.block_until_ready(logits)

    assert logits.shape == (2, num_classes), logits.shape
    assert logits.dtype == jnp.float32
    assert bool(jnp.all(jnp.isfinite(logits)))
    print("KERNEL_OK")
</pallas_src>

<mosaic_0001>
module attributes {stable_mosaic.version = 11 : i64} {
  func.func @_conv_block_kernel(%arg0: i32, %arg1: i32, %arg2: memref<1x16x16x8xbf16, #tpu.memory_space<vmem>>, %arg3: memref<72x128xbf16, #tpu.memory_space<vmem>>, %arg4: memref<1x128xf32, #tpu.memory_space<vmem>>, %arg5: memref<1x16x16x128xbf16, #tpu.memory_space<vmem>>, %arg6: memref<18x18x8xbf16, #tpu.memory_space<vmem>>) attributes {dimension_semantics = [#tpu.dimension_semantics<parallel>, #tpu.dimension_semantics<arbitrary>], iteration_bounds = array<i64: 2, 1>, scalar_prefetch = 0 : i64, scratch_operands = 1 : i64, tpu.core_type = #tpu.core_type<tc>, window_params = [{transform_indices = @transform_0, window_bounds = array<i64: 1, 16, 16, 8>}, {pipeline_mode = #tpu.pipeline_mode<synchronous>, transform_indices = @transform_1, window_bounds = array<i64: 72, 128>}, {pipeline_mode = #tpu.pipeline_mode<synchronous>, transform_indices = @transform_2, window_bounds = array<i64: 1, 128>}, {transform_indices = @transform_3, window_bounds = array<i64: 1, 16, 16, 128>}]} {
    %c0_i32 = arith.constant 0 : i32
    %0 = arith.cmpi eq, %arg1, %c0_i32 : i32
    %1 = arith.extui %0 : i1 to i32
    %c0_i32_0 = arith.constant 0 : i32
    %2 = arith.cmpi ne, %1, %c0_i32_0 : i32
    scf.if %2 {
      %cst_49 = arith.constant 0.000000e+00 : bf16
      %78 = vector.broadcast %cst_49 : bf16 to vector<18x18x8xbf16>
      %c0_50 = arith.constant 0 : index
      %c0_51 = arith.constant 0 : index
      %c0_52 = arith.constant 0 : index
      %79 = vector.load %arg6[%c0_50, %c0_51, %c0_52] : memref<18x18x8xbf16, #tpu.memory_space<vmem>>, vector<18x18x8xbf16>
      tpu.vector_store %arg6[%c0_50, %c0_51, %c0_52], %78 {strides = array<i32>} : memref<18x18x8xbf16, #tpu.memory_space<vmem>>, vector<18x18x8xbf16>,
      %c0_53 = arith.constant 0 : index
      %c0_54 = arith.constant 0 : index
      %c0_55 = arith.constant 0 : index
      %c0_56 = arith.constant 0 : index
      %80 = vector.load %arg2[%c0_53, %c0_54, %c0_55, %c0_56] : memref<1x16x16x8xbf16, #tpu.memory_space<vmem>>, vector<1x16x16x8xbf16>
      %81 = vector.shape_cast %80 : vector<1x16x16x8xbf16> to vector<16x16x8xbf16>
      %c1_57 = arith.constant 1 : index
      %c1_58 = arith.constant 1 : index
      %c0_59 = arith.constant 0 : index
      %82 = vector.load %arg6[%c1_57, %c1_58, %c0_59] : memref<18x18x8xbf16, #tpu.memory_space<vmem>>, vector<16x16x8xbf16>
      tpu.vector_store %arg6[%c1_57, %c1_58, %c0_59], %81 {strides = array<i32>} : memref<18x18x8xbf16, #tpu.memory_space<vmem>>, vector<16x16x8xbf16>,
    } else {
    }
    %c16_i32 = arith.constant 16 : i32
    %3 = arith.muli %arg1, %c16_i32 : i32
    %cst = arith.constant 0.000000e+00 : f32
    %4 = vector.broadcast %cst : f32 to vector<256x128xf32>
    %c0_i32_1 = arith.constant 0 : i32
    %5 = arith.addi %3, %c0_i32_1 : i32
    %6 = arith.index_cast %5 : i32 to index
    %c0 = arith.constant 0 : index
    %c0_2 = arith.constant 0 : index
    %7 = vector.load %arg6[%6, %c0, %c0_2] : memref<18x18x8xbf16, #tpu.memory_space<vmem>>, vector<16x16x8xbf16>
    %8 = vector.shape_cast %7 : vector<16x16x8xbf16> to vector<256x8xbf16>
    %c0_3 = arith.constant 0 : index
    %c0_4 = arith.constant 0 : index
    %9 = vector.load %arg3[%c0_3, %c0_4] : memref<72x128xbf16, #tpu.memory_space<vmem>>, vector<8x128xbf16>
    %cst_5 = arith.constant dense<0.000000e+00> : vector<256x128xf32>
    %10 = tpu.matmul %8, %9, %cst_5 {dimension_numbers = #tpu.dot_dimension_numbers<[1], [0], [0], [1], [0, 0, 1, 1], [], []>} : vector<256x8xbf16>, vector<8x128xbf16>, vector<256x128xf32> -> vector<256x128xf32>
    %11 = arith.addf %4, %10 : vector<256x128xf32>
    %c0_i32_6 = arith.constant 0 : i32
    %12 = arith.addi %3, %c0_i32_6 : i32
    %13 = arith.index_cast %12 : i32 to index
    %c1 = arith.constant 1 : index
    %c0_7 = arith.constant 0 : index
    %14 = vector.load %arg6[%13, %c1, %c0_7] : memref<18x18x8xbf16, #tpu.memory_space<vmem>>, vector<16x16x8xbf16>
    %15 = vector.shape_cast %14 : vector<16x16x8xbf16> to vector<256x8xbf16>
    %c8 = arith.constant 8 : index
    %c0_8 = arith.constant 0 : index
    %16 = vector.load %arg3[%c8, %c0_8] : memref<72x128xbf16, #tpu.memory_space<vmem>>, vector<8x128xbf16>
    %cst_9 = arith.constant dense<0.000000e+00> : vector<256x128xf32>
    %17 = tpu.matmul %15, %16, %cst_9 {dimension_numbers = #tpu.dot_dimension_numbers<[1], [0], [0], [1], [0, 0, 1, 1], [], []>} : vector<256x8xbf16>, vector<8x128xbf16>, vector<256x128xf32> -> vector<256x128xf32>
    %18 = arith.addf %11, %17 : vector<256x128xf32>
    %c0_i32_10 = arith.constant 0 : i32
    %19 = arith.addi %3, %c0_i32_10 : i32
    %20 = arith.index_cast %19 : i32 to index
    %c2 = arith.constant 2 : index
    %c0_11 = arith.constant 0 : index
    %21 = vector.load %arg6[%20, %c2, %c0_11] : memref<18x18x8xbf16, #tpu.memory_space<vmem>>, vector<16x16x8xbf16>
    %22 = vector.shape_cast %21 : vector<16x16x8xbf16> to vector<256x8xbf16>
    %c16 = arith.constant 16 : index
    %c0_12 = arith.constant 0 : index
    %23 = vector.load %arg3[%c16, %c0_12] : memref<72x128xbf16, #tpu.memory_space<vmem>>, vector<8x128xbf16>
    %cst_13 = arith.constant dense<0.000000e+00> : vector<256x128xf32>
    %24 = tpu.matmul %22, %23, %cst_13 {dimension_numbers = #tpu.dot_dimension_numbers<[1], [0], [0], [1], [0, 0, 1, 1], [], []>} : vector<256x8xbf16>, vector<8x128xbf16>, vector<256x128xf32> -> vector<256x128xf32>
    %25 = arith.addf %18, %24 : vector<256x128xf32>
    %c1_i32 = arith.constant 1 : i32
    %26 = arith.addi %3, %c1_i32 : i32
    %27 = arith.index_cast %26 : i32 to index
    %c0_14 = arith.constant 0 : index
    %c0_15 = arith.constant 0 : index
    %28 = vector.load %arg6[%27, %c0_14, %c0_15] : memref<18x18x8xbf16, #tpu.memory_space<vmem>>, vector<16x16x8xbf16>
    %29 = vector.shape_cast %28 : vector<16x16x8xbf16> to vector<256x8xbf16>
    %c24 = arith.constant 24 : index
    %c0_16 = arith.constant 0 : index
    %30 = vector.load %arg3[%c24, %c0_16] : memref<72x128xbf16, #tpu.memory_space<vmem>>, vector<8x128xbf16>
    %cst_17 = arith.constant dense<0.000000e+00> : vector<256x128xf32>
    %31 = tpu.matmul %29, %30, %cst_17 {dimension_numbers = #tpu.dot_dimension_numbers<[1], [0], [0], [1], [0, 0, 1, 1], [], []>} : vector<256x8xbf16>, vector<8x128xbf16>, vector<256x128xf32> -> vector<256x128xf32>
    %32 = arith.addf %25, %31 : vector<256x128xf32>
    %c1_i32_18 = arith.constant 1 : i32
    %33 = arith.addi %3, %c1_i32_18 : i32
    %34 = arith.index_cast %33 : i32 to index
    %c1_19 = arith.constant 1 : index
    %c0_20 = arith.constant 0 : index
    %35 = vector.load %arg6[%34, %c1_19, %c0_20] : memref<18x18x8xbf16, #tpu.memory_space<vmem>>, vector<16x16x8xbf16>
    %36 = vector.shape_cast %35 : vector<16x16x8xbf16> to vector<256x8xbf16>
    %c32 = arith.constant 32 : index
    %c0_21 = arith.constant 0 : index
    %37 = vector.load %arg3[%c32, %c0_21] : memref<72x128xbf16, #tpu.memory_space<vmem>>, vector<8x128xbf16>
    %cst_22 = arith.constant dense<0.000000e+00> : vector<256x128xf32>
    %38 = tpu.matmul %36, %37, %cst_22 {dimension_numbers = #tpu.dot_dimension_numbers<[1], [0], [0], [1], [0, 0, 1, 1], [], []>} : vector<256x8xbf16>, vector<8x128xbf16>, vector<256x128xf32> -> vector<256x128xf32>
    %39 = arith.addf %32, %38 : vector<256x128xf32>
    %c1_i32_23 = arith.constant 1 : i32
    %40 = arith.addi %3, %c1_i32_23 : i32
    %41 = arith.index_cast %40 : i32 to index
    %c2_24 = arith.constant 2 : index
    %c0_25 = arith.constant 0 : index
    %42 = vector.load %arg6[%41, %c2_24, %c0_25] : memref<18x18x8xbf16, #tpu.memory_space<vmem>>, vector<16x16x8xbf16>
    %43 = vector.shape_cast %42 : vector<16x16x8xbf16> to vector<256x8xbf16>
    %c40 = arith.constant 40 : index
    %c0_26 = arith.constant 0 : index
    %44 = vector.load %arg3[%c40, %c0_26] : memref<72x128xbf16, #tpu.memory_space<vmem>>, vector<8x128xbf16>
    %cst_27 = arith.constant dense<0.000000e+00> : vector<256x128xf32>
    %45 = tpu.matmul %43, %44, %cst_27 {dimension_numbers = #tpu.dot_dimension_numbers<[1], [0], [0], [1], [0, 0, 1, 1], [], []>} : vector<256x8xbf16>, vector<8x128xbf16>, vector<256x128xf32> -> vector<256x128xf32>
    %46 = arith.addf %39, %45 : vector<256x128xf32>
    %c2_i32 = arith.constant 2 : i32
    %47 = arith.addi %3, %c2_i32 : i32
    %48 = arith.index_cast %47 : i32 to index
    %c0_28 = arith.constant 0 : index
    %c0_29 = arith.constant 0 : index
    %49 = vector.load %arg6[%48, %c0_28, %c0_29] : memref<18x18x8xbf16, #tpu.memory_space<vmem>>, vector<16x16x8xbf16>
    %50 = vector.shape_cast %49 : vector<16x16x8xbf16> to vector<256x8xbf16>
    %c48 = arith.constant 48 : index
    %c0_30 = arith.constant 0 : index
    %51 = vector.load %arg3[%c48, %c0_30] : memref<72x128xbf16, #tpu.memory_space<vmem>>, vector<8x128xbf16>
    %cst_31 = arith.constant dense<0.000000e+00> : vector<256x128xf32>
    %52 = tpu.matmul %50, %51, %cst_31 {dimension_numbers = #tpu.dot_dimension_numbers<[1], [0], [0], [1], [0, 0, 1, 1], [], []>} : vector<256x8xbf16>, vector<8x128xbf16>, vector<256x128xf32> -> vector<256x128xf32>
    %53 = arith.addf %46, %52 : vector<256x128xf32>
    %c2_i32_32 = arith.constant 2 : i32
    %54 = arith.addi %3, %c2_i32_32 : i32
    %55 = arith.index_cast %54 : i32 to index
    %c1_33 = arith.constant 1 : index
    %c0_34 = arith.constant 0 : index
    %56 = vector.load %arg6[%55, %c1_33, %c0_34] : memref<18x18x8xbf16, #tpu.memory_space<vmem>>, vector<16x16x8xbf16>
    %57 = vector.shape_cast %56 : vector<16x16x8xbf16> to vector<256x8xbf16>
    %c56 = arith.constant 56 : index
    %c0_35 = arith.constant 0 : index
    %58 = vector.load %arg3[%c56, %c0_35] : memref<72x128xbf16, #tpu.memory_space<vmem>>, vector<8x128xbf16>
    %cst_36 = arith.constant dense<0.000000e+00> : vector<256x128xf32>
    %59 = tpu.matmul %57, %58, %cst_36 {dimension_numbers = #tpu.dot_dimension_numbers<[1], [0], [0], [1], [0, 0, 1, 1], [], []>} : vector<256x8xbf16>, vector<8x128xbf16>, vector<256x128xf32> -> vector<256x128xf32>
    %60 = arith.addf %53, %59 : vector<256x128xf32>
    %c2_i32_37 = arith.constant 2 : i32
    %61 = arith.addi %3, %c2_i32_37 : i32
    %62 = arith.index_cast %61 : i32 to index
    %c2_38 = arith.constant 2 : index
    %c0_39 = arith.constant 0 : index
    %63 = vector.load %arg6[%62, %c2_38, %c0_39] : memref<18x18x8xbf16, #tpu.memory_space<vmem>>, vector<16x16x8xbf16>
    %64 = vector.shape_cast %63 : vector<16x16x8xbf16> to vector<256x8xbf16>
    %c64 = arith.constant 64 : index
    %c0_40 = arith.constant 0 : index
    %65 = vector.load %arg3[%c64, %c0_40] : memref<72x128xbf16, #tpu.memory_space<vmem>>, vector<8x128xbf16>
    %cst_41 = arith.constant dense<0.000000e+00> : vector<256x128xf32>
    %66 = tpu.matmul %64, %65, %cst_41 {dimension_numbers = #tpu.dot_dimension_numbers<[1], [0], [0], [1], [0, 0, 1, 1], [], []>} : vector<256x8xbf16>, vector<8x128xbf16>, vector<256x128xf32> -> vector<256x128xf32>
    %67 = arith.addf %60, %66 : vector<256x128xf32>
    %c0_42 = arith.constant 0 : index
    %c0_43 = arith.constant 0 : index
    %68 = vector.load %arg4[%c0_42, %c0_43] : memref<1x128xf32, #tpu.memory_space<vmem>>, vector<1x128xf32>
    %69 = vector.broadcast %68 : vector<1x128xf32> to vector<256x128xf32>
    %70 = arith.addf %67, %69 : vector<256x128xf32>
    %cst_44 = arith.constant 0.000000e+00 : f32
    %71 = vector.broadcast %cst_44 : f32 to vector<256x128xf32>
    %72 = arith.maximumf %70, %71 : vector<256x128xf32>
    %73 = vector.shape_cast %72 : vector<256x128xf32> to vector<16x16x128xf32>
    %74 = arith.truncf %73 : vector<16x16x128xf32> to vector<16x16x128xbf16>
    %c0_45 = arith.constant 0 : index
    %c0_46 = arith.constant 0 : index
    %c0_47 = arith.constant 0 : index
    %c0_48 = arith.constant 0 : index
    %75 = vector.load %arg5[%c0_45, %c0_46, %c0_47, %c0_48] : memref<1x16x16x128xbf16, #tpu.memory_space<vmem>>, vector<1x16x16x128xbf16>
    %76 = vector.shape_cast %75 : vector<1x16x16x128xbf16> to vector<16x16x128xbf16>
    %77 = vector.shape_cast %74 : vector<16x16x128xbf16> to vector<1x16x16x128xbf16>
    tpu.vector_store %arg5[%c0_45, %c0_46, %c0_47, %c0_48], %77 {strides = array<i32>} : memref<1x16x16x128xbf16, #tpu.memory_space<vmem>>, vector<1x16x16x128xbf16>,
    return
  }
  func.func @transform_0(%arg0: i32, %arg1: i32) -> (i32, i32, i32, i32) {
    %c0_i32 = arith.constant 0 : i32
    %c0_i32_0 = arith.constant 0 : i32
    %c0_i32_1 = arith.constant 0 : i32
    %c0_i32_2 = arith.constant 0 : i32
    return %arg0, %c0_i32, %c0_i32_0, %c0_i32_1 : i32, i32, i32, i32
  }
  func.func @transform_1(%arg0: i32, %arg1: i32) -> (i32, i32) {
    %c0_i32 = arith.constant 0 : i32
    %c0_i32_0 = arith.constant 0 : i32
    %c0_i32_1 = arith.constant 0 : i32
    return %c0_i32, %c0_i32_0 : i32, i32
  }
  func.func @transform_2(%arg0: i32, %arg1: i32) -> (i32, i32) {
    %c0_i32 = arith.constant 0 : i32
    %c0_i32_0 = arith.constant 0 : i32
    %c0_i32_1 = arith.constant 0 : i32
    return %c0_i32, %c0_i32_0 : i32, i32
  }
  func.func @transform_3(%arg0: i32, %arg1: i32) -> (i32, i32, i32, i32) {
    %c0_i32 = arith.constant 0 : i32
    %c0_i32_0 = arith.constant 0 : i32
    %c0_i32_1 = arith.constant 0 : i32
    return %arg0, %arg1, %c0_i32, %c0_i32_0 : i32, i32, i32, i32
  }
}

</mosaic_0001>

<llo_original>
// kernel: tpu_custom_call.1
$region0: #{tpu_custom_call.1}
  #allocation0 [shape = 'u32[]', space=smem, size = 0x4, offset = 0x4, fixed_abs, tag = 'smem constant byte address 0x4 - core index']
  #allocation1 [shape = 'u32[144,128]{1,0:T(1,128)}', space=vmem, size = 0x12000, scoped, tag = 'internal scratch']
  #allocation2 [shape = 'bf16[18,18,8]{2,1,0:T(8,128)(2,1)}', space=vmem, size = 0x1b000, scoped, tag = 'scratch operand']
  %s0 = inlined_call_operand.vmem [shape: bf16[2,16,16,8], index: 0, kind: input, shape index: {}]
  %s1 = inlined_call_operand.vmem [shape: bf16[72,128], index: 1, kind: input, shape index: {}]
  %s2 = inlined_call_operand.vmem [shape: f32[1,128], index: 2, kind: input, shape index: {}]
  %s3 = inlined_call_operand.hbm [shape: bf16[2,16,16,128], index: 3, kind: output, shape index: {}]
  %s4 = sld [smem:[#allocation0]]
  $region49: #{tpu_custom_call.1} parent=0
    _
  %s6 = ssub.s32 1, %s4
  %s7 = scalar_select 0, %s6, %s4
  $region1: #{tpu_custom_call.1} parent=0
    #allocation3 [shape = 'u8[131072]{0}', space=vmem, size = 0x20000, scoped, tag = 'output window, operand 0']
    #allocation4 [shape = 's32[2]{0}', space=sflag, size = 0x8, scoped, tag = 'scoped memory for tpu_custom_call.1']
    %8 = vsyncpa [#allocation4], 0
    %s9 = scalar_lea.sflag [#allocation4], 1
    %10 = vsyncpa %s9, 0
    loop: start=0, step=1, limit=4
    $region2: #{tpu_custom_call.1} parent=1 // loop_pre_header
      _
    $region3: #{tpu_custom_call.1} parent=1 // loop_header
      %s12 = sphi 0, %s16
      %p13 = scmp.ge.s32.totalorder %s12, 4
      %s19 = sphi 0, %s31
      %s20 = sphi 0, %s27
      %s21 = sphi 0, %s19
      %s22 = sphi 0, %s20
      %s23 = sphi 0, %s21
      %s24 = sphi 0, %s22
      %s34 = sphi 0, %s36
      %s37 = sphi 0, %s34
      %s38 = sphi 0, %s37
      %s54 = sphi 0, %s38
      %s58 = sphi 0, %s58
      %s60 = sphi 0, %s58
      %s61 = sphi 0, %s60
      %s75 = sphi 0, %s61
      %s79 = sphi 0, %s79
      %s81 = sphi 0, %s79
      %s82 = sphi 0, %s81
      %s96 = sphi 0, %s82
      %s104 = sphi 0, %s106
      %s107 = sphi 0, %s104
      %s108 = sphi 0, %s107
      %s124 = sphi 0, %s108
    $region4: #{tpu_custom_call.1} parent=1 // loop_header_branch
      %15 = sbr.rel (%p13) target = $region8
    $region5: #{tpu_custom_call.1} parent=1 // loop_body
      %s17 = ssub.s32 %s12, 1
      %s18 = ssub.s32 %s12, 2
      %s25 = sadd.s32 1, %s20
      %p26 = scmp.ge.s32.totalorder %s25, 1
      %s27 = scalar_select %p26, 0, %s25
      %s28 = sadd.s32 1, %s19
      %s29 = scalar_select %p26, %s28, %s19
      %p30 = scmp.ge.s32.totalorder %s29, 2
      %s31 = scalar_select %p30, 0, %s29
      %s32 = ssub.s32 %s19, %s31
      %p33 = scmp.eq.s32.totalorder %s32, 0
      %s35 = sadd.s32 %s34, 1
      %s36 = scalar_select %p33, %s34, %s35
      %p39 = pneg %p33
      %p40 = scmp.eq.s32.totalorder %s12, 1
      %p41 = por %p39, %p40
      %p42 = scmp.ne.s32.totalorder %s34, %s37
      %p43 = scmp.eq.s32.totalorder %s12, 0
      %p44 = por %p42, %p43
      %p45 = scmp.ne.s32.totalorder %s34, %s37
      %p46 = scmp.eq.s32.totalorder %s17, 1
      %p47 = por %p45, %p46
      %p48 = scmp.ne.s32.totalorder %s37, %s38
      %p49 = scmp.eq.s32.totalorder %s17, 0
      %p50 = por %p48, %p49
      %p51 = scmp.ne.s32.totalorder %s37, %s38
      %p52 = scmp.eq.s32.totalorder %s18, 1
      %p53 = por %p51, %p52
      %p55 = scmp.ne.s32.totalorder %s38, %s54
      %p56 = scmp.eq.s32.totalorder %s18, 0
      %p57 = por %p55, %p56
      %s59 = sadd.s32 %s58, 1
      %p62 = scmp.eq.s32.totalorder %s12, 1
      %p63 = scmp.ne.s32.totalorder %s58, %s60
      %p64 = scmp.eq.s32.totalorder %s12, 0
      %p65 = por %p63, %p64
      %p66 = scmp.ne.s32.totalorder %s58, %s60
      %p67 = scmp.eq.s32.totalorder %s17, 1
      %p68 = por %p66, %p67
      %p69 = scmp.ne.s32.totalorder %s60, %s61
      %p70 = scmp.eq.s32.totalorder %s17, 0
      %p71 = por %p69, %p70
      %p72 = scmp.ne.s32.totalorder %s60, %s61
      %p73 = scmp.eq.s32.totalorder %s18, 1
      %p74 = por %p72, %p73
      %p76 = scmp.ne.s32.totalorder %s61, %s75
      %p77 = scmp.eq.s32.totalorder %s18, 0
      %p78 = por %p76, %p77
      %s80 = sadd.s32 %s79, 1
      %p83 = scmp.eq.s32.totalorder %s12, 1
      %p84 = scmp.ne.s32.totalorder %s79, %s81
      %p85 = scmp.eq.s32.totalorder %s12, 0
      %p86 = por %p84, %p85
      %p87 = scmp.ne.s32.totalorder %s79, %s81
      %p88 = scmp.eq.s32.totalorder %s17, 1
      %p89 = por %p87, %p88
      %p90 = scmp.ne.s32.totalorder %s81, %s82
      %p91 = scmp.eq.s32.totalorder %s17, 0
      %p92 = por %p90, %p91
      %p93 = scmp.ne.s32.totalorder %s81, %s82
      %p94 = scmp.eq.s32.totalorder %s18, 1
      %p95 = por %p93, %p94
      %p97 = scmp.ne.s32.totalorder %s82, %s96
      %p98 = scmp.eq.s32.totalorder %s18, 0
      %p99 = por %p97, %p98
      %s100 = ssub.s32 %s19, %s31
      %s101 = ssub.s32 %s20, %s27
      %s102 = sor.u32 %s100, %s101
      %p103 = scmp.eq.s32.totalorder %s102, 0
      %s105 = sadd.s32 %s104, 1
      %s106 = scalar_select %p103, %s104, %s105
      %p109 = pneg %p103
      %p110 = scmp.eq.s32.totalorder %s12, 1
      %p111 = por %p109, %p110
      %p112 = scmp.ne.s32.totalorder %s104, %s107
      %p113 = scmp.eq.s32.totalorder %s12, 0
      %p114 = por %p112, %p113
      %p115 = scmp.ne.s32.totalorder %s104, %s107
      %p116 = scmp.eq.s32.totalorder %s17, 1
      %p117 = por %p115, %p116
      %p118 = scmp.ne.s32.totalorder %s107, %s108
      %p119 = scmp.eq.s32.totalorder %s17, 0
      %p120 = por %p118, %p119
      %p121 = scmp.ne.s32.totalorder %s107, %s108
      %p122 = scmp.eq.s32.totalorder %s18, 1
      %p123 = por %p121, %p122
      %p125 = scmp.ne.s32.totalorder %s108, %s124
      %p126 = scmp.eq.s32.totalorder %s18, 0
      %p127 = por %p125, %p126
      %p128 = scmp.le.s32.totalorder 1, %s12
      %p129 = scmp.lt.s32.totalorder %s12, 3
      %p130 = pnand %p128, %p129
      %p131 = pneg %p130
      // Predicated region
      $region9: #{tpu_custom_call.1} parent=5 // pred_check
        _
      $region10: #{tpu_custom_call.1} parent=5 // pred_check_branch
        %133 = sbr.rel (%p130) target = $region12
      $region11: #{tpu_custom_call.1} parent=5 // pred_region
        %s134 = ssub.s32 %s12, 1
        // Predicated region
        $region13: #{tpu_custom_call.1} parent=11 // pred_check
          %p135 = pneg %p71
        $region14: #{tpu_custom_call.1} parent=11 // pred_check_branch
          %137 = sbr.rel (%p135) target = $region16
        $region15: #{tpu_custom_call.1} parent=11 // pred_region
          _
        $region16: #{tpu_custom_call.1} parent=11 // pred_fallthru
          _
        // Predicated region
        $region17: #{tpu_custom_call.1} parent=11 // pred_check
          %p138 = pneg %p92
        $region18: #{tpu_custom_call.1} parent=11 // pred_check_branch
          %140 = sbr.rel (%p138) target = $region20
        $region19: #{tpu_custom_call.1} parent=11 // pred_region
          _
        $region20: #{tpu_custom_call.1} parent=11 // pred_fallthru
          _
      $region12: #{tpu_custom_call.1} parent=5 // pred_fallthru
        _
      %p141 = scmp.lt.s32.totalorder %s12, 2
      // Predicated region
      $region21: #{tpu_custom_call.1} parent=5 // pred_check
        %p142 = pneg %p141
      $region22: #{tpu_custom_call.1} parent=5 // pred_check_branch
        %144 = sbr.rel (%p142) target = $region24
      $region23: #{tpu_custom_call.1} parent=5 // pred_region
        // Predicated region
        $region25: #{tpu_custom_call.1} parent=23 // pred_check
          %p145 = pneg %p44
        $region26: #{tpu_custom_call.1} parent=23 // pred_check_branch
          %147 = sbr.rel (%p145) target = $region28
        $region27: #{tpu_custom_call.1} parent=23 // pred_region
          %p148 = scmp.lt.s32.totalorder %s19, 1
          %s149 = scalar_select %p148, %s19, 1
          %s150 = smul.addr %s149, 32
          %s151 = smul.addr %s150, 4
          %s152 = scalar_lea.vmem %s0, %s151
        $region28: #{tpu_custom_call.1} parent=23 // pred_fallthru
          _
      $region24: #{tpu_custom_call.1} parent=5 // pred_fallthru
        _
      %p153 = scmp.le.s32.totalorder 1, %s12
      %p154 = scmp.lt.s32.totalorder %s12, 3
      %p155 = pnand %p153, %p154
      %p156 = pneg %p155
      // Predicated region
      $region29: #{tpu_custom_call.1} parent=5 // pred_check
        _
      $region30: #{tpu_custom_call.1} parent=5 // pred_check_branch
        %158 = sbr.rel (%p155) target = $region32
      $region31: #{tpu_custom_call.1} parent=5 // pred_region
        %s159 = ssub.s32 %s12, 1
        %p160 = scmp.lt.s32.totalorder %s21, 1
        %s161 = scalar_select %p160, %s21, 1
        %s162 = smul.addr %s161, 32
        %s163 = smul.addr %s162, 4
        %s164 = scalar_lea.vmem %s0, %s163
        %p165 = pneg %p50
        %p166 = pneg %p47
        %p167 = pneg %p71
        %p168 = pneg %p68
        %p169 = pneg %p92
        %p170 = pneg %p89
        %p171 = pneg %p120
        %p172 = pneg %p117
        %s173 = sand.u32 %s107, 1
        %s174 = scalar_lea.sflag [#allocation4], %s173
        %s175 = sand.u32 %s107, 1
        %s176 = smul.addr %s175, 128
        %s177 = scalar_lea.vmem [#allocation3], %s176
        %p178 = scmp.lt.s32.totalorder %s21, 1
        %s179 = scalar_select %p178, %s21, 1
        %s180 = smul.addr %s179, 32
        %s181 = smul.addr %s180, 4
        %s182 = scalar_lea.vmem %s0, %s181
        %s183 = smul.u32 16, %s22
        %p185 = scmp.eq.s32.totalorder %s22, 0
        // Predicated region
        $region33: #{tpu_custom_call.1} parent=31 // pred_check
          %p186 = pneg %p185
        $region34: #{tpu_custom_call.1} parent=31 // pred_check_branch
          %188 = sbr.rel (%p186) target = $region36
        $region35: #{tpu_custom_call.1} parent=31 // pred_region
          %vm189 = vcmask 60416
          %190 = vst.msk [vmem:[#allocation2] sm:$0xf] %vm189, 0
          %191 = vst.msk [vmem:[#allocation2 + $0x4] sm:$0xf] %vm189, 0
          %vm192 = vcmask 57344
          %193 = vst.msk [vmem:[#allocation2 + $0x8] sm:$0x1] %vm192, 0
          %194 = vst.msk [vmem:[#allocation2 + $0xc] sm:$0xf] %vm189, 0
          %195 = vst.msk [vmem:[#allocation2 + $0x10] sm:$0xf] %vm189, 0
          %196 = vst.msk [vmem:[#allocation2 + $0x14] sm:$0x1] %vm192, 0
          %197 = vst.msk [vmem:[#allocation2 + $0x18] sm:$0xf] %vm189, 0
          %198 = vst.msk [vmem:[#allocation2 + $0x1c] sm:$0xf] %vm189, 0
          %199 = vst.msk [vmem:[#allocation2 + $0x20] sm:$0x1] %vm192, 0
          %200 = vst.msk [vmem:[#allocation2 + $0x24] sm:$0xf] %vm189, 0
          %201 = vst.msk [vmem:[#allocation2 + $0x28] sm:$0xf] %vm189, 0
          %202 = vst.msk [vmem:[#allocation2 + $0x2c] sm:$0x1] %vm192, 0
          %203 = vst.msk [vmem:[#allocation2 + $0x30] sm:$0xf] %vm189, 0
          %204 = vst.msk [vmem:[#allocation2 + $0x34] sm:$0xf] %vm189, 0
          %205 = vst.msk [vmem:[#allocation2 + $0x38] sm:$0x1] %vm192, 0
          %206 = vst.msk [vmem:[#allocation2 + $0x3c] sm:$0xf] %vm189, 0
          %207 = vst.msk [vmem:[#allocation2 + $0x40] sm:$0xf] %vm189, 0
          %208 = vst.msk [vmem:[#allocation2 + $0x44] sm:$0x1] %vm192, 0
          %209 = vst.msk [vmem:[#allocation2 + $0x48] sm:$0xf] %vm189, 0
          %210 = vst.msk [vmem:[#allocation2 + $0x4c] sm:$0xf] %vm189, 0
          %211 = vst.msk [vmem:[#allocation2 + $0x50] sm:$0x1] %vm192, 0
          %212 = vst.msk [vmem:[#allocation2 + $0x54] sm:$0xf] %vm189, 0
          %213 = vst.msk [vmem:[#allocation2 + $0x58] sm:$0xf] %vm189, 0
          %214 = vst.msk [vmem:[#allocation2 + $0x5c] sm:$0x1] %vm192, 0
          %215 = vst.msk [vmem:[#allocation2 + $0x60] sm:$0xf] %vm189, 0
          %216 = vst.msk [vmem:[#allocation2 + $0x64] sm:$0xf] %vm189, 0
          %217 = vst.msk [vmem:[#allocation2 + $0x68] sm:$0x1] %vm192, 0
          %218 = vst.msk [vmem:[#allocation2 + $0x6c] sm:$0xf] %vm189, 0
          %219 = vst.msk [vmem:[#allocation2 + $0x70] sm:$0xf] %vm189, 0
          %220 = vst.msk [vmem:[#allocation2 + $0x74] sm:$0x1] %vm192, 0
          %221 = vst.msk [vmem:[#allocation2 + $0x78] sm:$0xf] %vm189, 0
          %222 = vst.msk [vmem:[#allocation2 + $0x7c] sm:$0xf] %vm189, 0
          %223 = vst.msk [vmem:[#allocation2 + $0x80] sm:$0x1] %vm192, 0
          %224 = vst.msk [vmem:[#allocation2 + $0x84] sm:$0xf] %vm189, 0
          %225 = vst.msk [vmem:[#allocation2 + $0x88] sm:$0xf] %vm189, 0
          %226 = vst.msk [vmem:[#allocation2 + $0x8c] sm:$0x1] %vm192, 0
          %227 = vst.msk [vmem:[#allocation2 + $0x90] sm:$0xf] %vm189, 0
          %228 = vst.msk [vmem:[#allocation2 + $0x94] sm:$0xf] %vm189, 0
          %229 = vst.msk [vmem:[#allocation2 + $0x98] sm:$0x1] %vm192, 0
          %230 = vst.msk [vmem:[#allocation2 + $0x9c] sm:$0xf] %vm189, 0
          %231 = vst.msk [vmem:[#allocation2 + $0xa0] sm:$0xf] %vm189, 0
          %232 = vst.msk [vmem:[#allocation2 + $0xa4] sm:$0x1] %vm192, 0
          %233 = vst.msk [vmem:[#allocation2 + $0xa8] sm:$0xf] %vm189, 0
          %234 = vst.msk [vmem:[#allocation2 + $0xac] sm:$0xf] %vm189, 0
          %235 = vst.msk [vmem:[#allocation2 + $0xb0] sm:$0x1] %vm192, 0
          %236 = vst.msk [vmem:[#allocation2 + $0xb4] sm:$0xf] %vm189, 0
          %237 = vst.msk [vmem:[#allocation2 + $0xb8] sm:$0xf] %vm189, 0
          %238 = vst.msk [vmem:[#allocation2 + $0xbc] sm:$0x1] %vm192, 0
          %239 = vst.msk [vmem:[#allocation2 + $0xc0] sm:$0xf] %vm189, 0
          %240 = vst.msk [vmem:[#allocation2 + $0xc4] sm:$0xf] %vm189, 0
          %241 = vst.msk [vmem:[#allocation2 + $0xc8] sm:$0x1] %vm192, 0
          %242 = vst.msk [vmem:[#allocation2 + $0xcc] sm:$0xf] %vm189, 0
          %243 = vst.msk [vmem:[#allocation2 + $0xd0] sm:$0xf] %vm189, 0
          %244 = vst.msk [vmem:[#allocation2 + $0xd4] sm:$0x1] %vm192, 0
          %v245 = vld [vmem:[%s182] sm:$0xf]
          %v246 = vld [vmem:[%s182 + $0x4] sm:$0xf]
          %v247 = vld [vmem:[%s182 + $0x8] sm:$0xf]
          %v248 = vld [vmem:[%s182 + $0xc] sm:$0xf]
          %v249 = vld [vmem:[%s182 + $0x10] sm:$0xf]
          %v250 = vld [vmem:[%s182 + $0x14] sm:$0xf]
          %v251 = vld [vmem:[%s182 + $0x18] sm:$0xf]
          %v252 = vld [vmem:[%s182 + $0x1c] sm:$0xf]
          %v253 = vld [vmem:[%s182 + $0x20] sm:$0xf]
          %v254 = vld [vmem:[%s182 + $0x24] sm:$0xf]
          %v255 = vld [vmem:[%s182 + $0x28] sm:$0xf]
          %v256 = vld [vmem:[%s182 + $0x2c] sm:$0xf]
          %v257 = vld [vmem:[%s182 + $0x30] sm:$0xf]
          %v258 = vld [vmem:[%s182 + $0x34] sm:$0xf]
          %v259 = vld [vmem:[%s182 + $0x38] sm:$0xf]
          %v260 = vld [vmem:[%s182 + $0x3c] sm:$0xf]
          %v261 = vld [vmem:[%s182 + $0x40] sm:$0xf]
          %v262 = vld [vmem:[%s182 + $0x44] sm:$0xf]
          %v263 = vld [vmem:[%s182 + $0x48] sm:$0xf]
          %v264 = vld [vmem:[%s182 + $0x4c] sm:$0xf]
          %v265 = vld [vmem:[%s182 + $0x50] sm:$0xf]
          %v266 = vld [vmem:[%s182 + $0x54] sm:$0xf]
          %v267 = vld [vmem:[%s182 + $0x58] sm:$0xf]
          %v268 = vld [vmem:[%s182 + $0x5c] sm:$0xf]
          %v269 = vld [vmem:[%s182 + $0x60] sm:$0xf]
          %v270 = vld [vmem:[%s182 + $0x64] sm:$0xf]
          %v271 = vld [vmem:[%s182 + $0x68] sm:$0xf]
          %v272 = vld [vmem:[%s182 + $0x6c] sm:$0xf]
          %v273 = vld [vmem:[%s182 + $0x70] sm:$0xf]
          %v274 = vld [vmem:[%s182 + $0x74] sm:$0xf]
          %v275 = vld [vmem:[%s182 + $0x78] sm:$0xf]
          %v276 = vld [vmem:[%s182 + $0x7c] sm:$0xf]
          %vm277 = vsmask.f32 256
          %vm278 = vsmask.f32 4368
          %vm279 = vmor %vm277, %vm278
          %v281 = vshrl.u32 %v245, 16
          %v283 = vrot.slane %v281, 7
          %v284 = vshll.u32 %v245, 16
          %v286 = vor.u32 %v283, %v284
          %v287 = vrot.slane %v283, 4
          %v289 = vshrl.u32 %v246, 16
          %v291 = vrot.slane %v289, 7
          %v292 = vshll.u32 %v246, 16
          %v294 = vor.u32 %v291, %v292
          %v295 = vsel %vm279, %v287, %v294
          %v296 = vrot.slane %v291, 4
          %v298 = vshrl.u32 %v247, 16
          %v300 = vrot.slane %v298, 7
          %v301 = vshll.u32 %v247, 16
          %v303 = vor.u32 %v300, %v301
          %v304 = vrot.slane %v300, 4
          %v306 = vshrl.u32 %v248, 16
          %v308 = vrot.slane %v306, 7
          %v309 = vshll.u32 %v248, 16
          %v311 = vor.u32 %v308, %v309
          %v312 = vsel %vm279, %v304, %v311
          %v313 = vrot.slane %v308, 4
          %v315 = vshrl.u32 %v249, 16
          %v317 = vrot.slane %v315, 7
          %v318 = vshll.u32 %v249, 16
          %v320 = vor.u32 %v317, %v318
          %v321 = vrot.slane %v317, 4
          %v323 = vshrl.u32 %v250, 16
          %v325 = vrot.slane %v323, 7
          %v326 = vshll.u32 %v250, 16
          %v328 = vor.u32 %v325, %v326
          %v329 = vsel %vm279, %v321, %v328
          %v330 = vrot.slane %v325, 4
          %v332 = vshrl.u32 %v251, 16
          %v334 = vrot.slane %v332, 7
          %v335 = vshll.u32 %v251, 16
          %v337 = vor.u32 %v334, %v335
          %v338 = vrot.slane %v334, 4
          %v340 = vshrl.u32 %v252, 16
          %v342 = vrot.slane %v340, 7
          %v343 = vshll.u32 %v252, 16
          %v345 = vor.u32 %v342, %v343
          %v346 = vsel %vm279, %v338, %v345
          %v347 = vrot.slane %v342, 4
          %v349 = vshrl.u32 %v253, 16
          %v351 = vrot.slane %v349, 7
          %v352 = vshll.u32 %v253, 16
          %v354 = vor.u32 %v351, %v352
          %v355 = vrot.slane %v351, 4
          %v357 = vshrl.u32 %v254, 16
          %v359 = vrot.slane %v357, 7
          %v360 = vshll.u32 %v254, 16
          %v362 = vor.u32 %v359, %v360
          %v363 = vsel %vm279, %v355, %v362
          %v364 = vrot.slane %v359, 4
          %v366 = vshrl.u32 %v255, 16
          %v368 = vrot.slane %v366, 7
          %v369 = vshll.u32 %v255, 16
          %v371 = vor.u32 %v368, %v369
          %v372 = vrot.slane %v368, 4
          %v374 = vshrl.u32 %v256, 16
          %v376 = vrot.slane %v374, 7
          %v377 = vshll.u32 %v256, 16
          %v379 = vor.u32 %v376, %v377
          %v380 = vsel %vm279, %v372, %v379
          %v381 = vrot.slane %v376, 4
          %v383 = vshrl.u32 %v257, 16
          %v385 = vrot.slane %v383, 7
          %v386 = vshll.u32 %v257, 16
          %v388 = vor.u32 %v385, %v386
          %v389 = vrot.slane %v385, 4
          %v391 = vshrl.u32 %v258, 16
          %v393 = vrot.slane %v391, 7
          %v394 = vshll.u32 %v258, 16
          %v396 = vor.u32 %v393, %v394
          %v397 = vsel %vm279, %v389, %v396
          %v398 = vrot.slane %v393, 4
          %v400 = vshrl.u32 %v259, 16
          %v402 = vrot.slane %v400, 7
          %v403 = vshll.u32 %v259, 16
          %v405 = vor.u32 %v402, %v403
          %v406 = vrot.slane %v402, 4
          %v408 = vshrl.u32 %v260, 16
          %v410 = vrot.slane %v408, 7
          %v411 = vshll.u32 %v260, 16
          %v413 = vor.u32 %v410, %v411
          %v414 = vsel %vm279, %v406, %v413
          %v415 = vrot.slane %v410, 4
          %v417 = vshrl.u32 %v261, 16
          %v419 = vrot.slane %v417, 7
          %v420 = vshll.u32 %v261, 16
          %v422 = vor.u32 %v419, %v420
          %v423 = vrot.slane %v419, 4
          %v425 = vshrl.u32 %v262, 16
          %v427 = vrot.slane %v425, 7
          %v428 = vshll.u32 %v262, 16
          %v430 = vor.u32 %v427, %v428
          %v431 = vsel %vm279, %v423, %v430
          %v432 = vrot.slane %v427, 4
          %v434 = vshrl.u32 %v263, 16
          %v436 = vrot.slane %v434, 7
          %v437 = vshll.u32 %v263, 16
          %v439 = vor.u32 %v436, %v437
          %v440 = vrot.slane %v436, 4
          %v442 = vshrl.u32 %v264, 16
          %v444 = vrot.slane %v442, 7
          %v445 = vshll.u32 %v264, 16
          %v447 = vor.u32 %v444, %v445
          %v448 = vsel %vm279, %v440, %v447
          %v449 = vrot.slane %v444, 4
          %v451 = vshrl.u32 %v265, 16
          %v453 = vrot.slane %v451, 7
          %v454 = vshll.u32 %v265, 16
          %v456 = vor.u32 %v453, %v454
          %v457 = vrot.slane %v453, 4
          %v459 = vshrl.u32 %v266, 16
          %v461 = vrot.slane %v459, 7
          %v462 = vshll.u32 %v266, 16
          %v464 = vor.u32 %v461, %v462
          %v465 = vsel %vm279, %v457, %v464
          %v466 = vrot.slane %v461, 4
          %v468 = vshrl.u32 %v267, 16
          %v470 = vrot.slane %v468, 7
          %v471 = vshll.u32 %v267, 16
          %v473 = vor.u32 %v470, %v471
          %v474 = vrot.slane %v470, 4
          %v476 = vshrl.u32 %v268, 16
          %v478 = vrot.slane %v476, 7
          %v479 = vshll.u32 %v268, 16
          %v481 = vor.u32 %v478, %v479
          %v482 = vsel %vm279, %v474, %v481
          %v483 = vrot.slane %v478, 4
          %v485 = vshrl.u32 %v269, 16
          %v487 = vrot.slane %v485, 7
          %v488 = vshll.u32 %v269, 16
          %v490 = vor.u32 %v487, %v488
          %v491 = vrot.slane %v487, 4
          %v493 = vshrl.u32 %v270, 16
          %v495 = vrot.slane %v493, 7
          %v496 = vshll.u32 %v270, 16
          %v498 = vor.u32 %v495, %v496
          %v499 = vsel %vm279, %v491, %v498
          %v500 = vrot.slane %v495, 4
          %v502 = vshrl.u32 %v271, 16
          %v504 = vrot.slane %v502, 7
          %v505 = vshll.u32 %v271, 16
          %v507 = vor.u32 %v504, %v505
          %v508 = vrot.slane %v504, 4
          %v510 = vshrl.u32 %v272, 16
          %v512 = vrot.slane %v510, 7
          %v513 = vshll.u32 %v272, 16
          %v515 = vor.u32 %v512, %v513
          %v516 = vsel %vm279, %v508, %v515
          %v517 = vrot.slane %v512, 4
          %v519 = vshrl.u32 %v273, 16
          %v521 = vrot.slane %v519, 7
          %v522 = vshll.u32 %v273, 16
          %v524 = vor.u32 %v521, %v522
          %v525 = vrot.slane %v521, 4
          %v527 = vshrl.u32 %v274, 16
          %v529 = vrot.slane %v527, 7
          %v530 = vshll.u32 %v274, 16
          %v532 = vor.u32 %v529, %v530
          %v533 = vsel %vm279, %v525, %v532
          %v534 = vrot.slane %v529, 4
          %v536 = vshrl.u32 %v275, 16
          %v538 = vrot.slane %v536, 7
          %v539 = vshll.u32 %v275, 16
          %v541 = vor.u32 %v538, %v539
          %v542 = vrot.slane %v538, 4
          %v544 = vshrl.u32 %v276, 16
          %v546 = vrot.slane %v544, 7
          %v547 = vshll.u32 %v276, 16
          %v549 = vor.u32 %v546, %v547
          %v550 = vsel %vm279, %v542, %v549
          %v551 = vrot.slane %v546, 4
          %s600 = scalar_lea.vmem [#allocation2], 12
          %vm601 = vcmask 60416
          %vm602 = vsmask.f32 7938
          %vm603 = vmand %vm601, %vm602
          %v604 = vld [vmem:[%s600] sm:$0xf]
          %v605 = vsel %vm603, %v286, %v604
          %606 = vst [vmem:[%s600] sm:$0xf] %v605
          %607 = vst.msk [vmem:[%s600 + $0x4] sm:$0xf] %vm189, %v295
          %vm608 = vcmask 57344
          %vm609 = vmand %vm608, %vm277
          %v610 = vld [vmem:[%s600 + $0x8] sm:$0x1]
          %v611 = vsel %vm609, %v296, %v610
          %612 = vst [vmem:[%s600 + $0x8] sm:$0x1] %v611
          %v613 = vld [vmem:[%s600 + $0xc] sm:$0xf]
          %v614 = vsel %vm603, %v303, %v613
          %615 = vst [vmem:[%s600 + $0xc] sm:$0xf] %v614
          %616 = vst.msk [vmem:[%s600 + $0x10] sm:$0xf] %vm189, %v312
          %v617 = vld [vmem:[%s600 + $0x14] sm:$0x1]
          %v618 = vsel %vm609, %v313, %v617
          %619 = vst [vmem:[%s600 + $0x14] sm:$0x1] %v618
          %v620 = vld [vmem:[%s600 + $0x18] sm:$0xf]
          %v621 = vsel %vm603, %v320, %v620
          %622 = vst [vmem:[%s600 + $0x18] sm:$0xf] %v621
          %623 = vst.msk [vmem:[%s600 + $0x1c] sm:$0xf] %vm189, %v329
          %v624 = vld [vmem:[%s600 + $0x20] sm:$0x1]
          %v625 = vsel %vm609, %v330, %v624
          %626 = vst [vmem:[%s600 + $0x20] sm:$0x1] %v625
          %v627 = vld [vmem:[%s600 + $0x24] sm:$0xf]
          %v628 = vsel %vm603, %v337, %v627
          %629 = vst [vmem:[%s600 + $0x24] sm:$0xf] %v628
          %630 = vst.msk [vmem:[%s600 + $0x28] sm:$0xf] %vm189, %v346
          %v631 = vld [vmem:[%s600 + $0x2c] sm:$0x1]
          %v632 = vsel %vm609, %v347, %v631
          %633 = vst [vmem:[%s600 + $0x2c] sm:$0x1] %v632
          %v634 = vld [vmem:[%s600 + $0x30] sm:$0xf]
          %v635 = vsel %vm603, %v354, %v634
          %636 = vst [vmem:[%s600 + $0x30] sm:$0xf] %v635
          %637 = vst.msk [vmem:[%s600 + $0x34] sm:$0xf] %vm189, %v363
          %v638 = vld [vmem:[%s600 + $0x38] sm:$0x1]
          %v639 = vsel %vm609, %v364, %v638
          %640 = vst [vmem:[%s600 + $0x38] sm:$0x1] %v639
          %v641 = vld [vmem:[%s600 + $0x3c] sm:$0xf]
          %v642 = vsel %vm603, %v371, %v641
          %643 = vst [vmem:[%s600 + $0x3c] sm:$0xf] %v642
          %644 = vst.msk [vmem:[%s600 + $0x40] sm:$0xf] %vm189, %v380
          %v645 = vld [vmem:[%s600 + $0x44] sm:$0x1]
          %v646 = vsel %vm609, %v381, %v645
          %647 = vst [vmem:[%s600 + $0x44] sm:$0x1] %v646
          %v648 = vld [vmem:[%s600 + $0x48] sm:$0xf]
          %v649 = vsel %vm603, %v388, %v648
          %650 = vst [vmem:[%s600 + $0x48] sm:$0xf] %v649
          %651 = vst.msk [vmem:[%s600 + $0x4c] sm:$0xf] %vm189, %v397
          %v652 = vld [vmem:[%s600 + $0x50] sm:$0x1]
          %v653 = vsel %vm609, %v398, %v652
          %654 = vst [vmem:[%s600 + $0x50] sm:$0x1] %v653
          %v655 = vld [vmem:[%s600 + $0x54] sm:$0xf]
          %v656 = vsel %vm603, %v405, %v655
          %657 = vst [vmem:[%s600 + $0x54] sm:$0xf] %v656
          %658 = vst.msk [vmem:[%s600 + $0x58] sm:$0xf] %vm189, %v414
          %v659 = vld [vmem:[%s600 + $0x5c] sm:$0x1]
          %v660 = vsel %vm609, %v415, %v659
          %661 = vst [vmem:[%s600 + $0x5c] sm:$0x1] %v660
          %v662 = vld [vmem:[%s600 + $0x60] sm:$0xf]
          %v663 = vsel %vm603, %v422, %v662
          %664 = vst [vmem:[%s600 + $0x60] sm:$0xf] %v663
          %665 = vst.msk [vmem:[%s600 + $0x64] sm:$0xf] %vm189, %v431
          %v666 = vld [vmem:[%s600 + $0x68] sm:$0x1]
          %v667 = vsel %vm609, %v432, %v666
          %668 = vst [vmem:[%s600 + $0x68] sm:$0x1] %v667
          %v669 = vld [vmem:[%s600 + $0x6c] sm:$0xf]
          %v670 = vsel %vm603, %v439, %v669
          %671 = vst [vmem:[%s600 + $0x6c] sm:$0xf] %v670
          %672 = vst.msk [vmem:[%s600 + $0x70] sm:$0xf] %vm189, %v448
          %v673 = vld [vmem:[%s600 + $0x74] sm:$0x1]
          %v674 = vsel %vm609, %v449, %v673
          %675 = vst [vmem:[%s600 + $0x74] sm:$0x1] %v674
          %v676 = vld [vmem:[%s600 + $0x78] sm:$0xf]
          %v677 = vsel %vm603, %v456, %v676
          %678 = vst [vmem:[%s600 + $0x78] sm:$0xf] %v677
          %679 = vst.msk [vmem:[%s600 + $0x7c] sm:$0xf] %vm189, %v465
          %v680 = vld [vmem:[%s600 + $0x80] sm:$0x1]
          %v681 = vsel %vm609, %v466, %v680
          %682 = vst [vmem:[%s600 + $0x80] sm:$0x1] %v681
          %v683 = vld [vmem:[%s600 + $0x84] sm:$0xf]
          %v684 = vsel %vm603, %v473, %v683
          %685 = vst [vmem:[%s600 + $0x84] sm:$0xf] %v684
          %686 = vst.msk [vmem:[%s600 + $0x88] sm:$0xf] %vm189, %v482
          %v687 = vld [vmem:[%s600 + $0x8c] sm:$0x1]
          %v688 = vsel %vm609, %v483, %v687
          %689 = vst [vmem:[%s600 + $0x8c] sm:$0x1] %v688
          %v690 = vld [vmem:[%s600 + $0x90] sm:$0xf]
          %v691 = vsel %vm603, %v490, %v690
          %692 = vst [vmem:[%s600 + $0x90] sm:$0xf] %v691
          %693 = vst.msk [vmem:[%s600 + $0x94] sm:$0xf] %vm189, %v499
          %v694 = vld [vmem:[%s600 + $0x98] sm:$0x1]
          %v695 = vsel %vm609, %v500, %v694
          %696 = vst [vmem:[%s600 + $0x98] sm:$0x1] %v695
          %v697 = vld [vmem:[%s600 + $0x9c] sm:$0xf]
          %v698 = vsel %vm603, %v507, %v697
          %699 = vst [vmem:[%s600 + $0x9c] sm:$0xf] %v698
          %700 = vst.msk [vmem:[%s600 + $0xa0] sm:$0xf] %vm189, %v516
          %v701 = vld [vmem:[%s600 + $0xa4] sm:$0x1]
          %v702 = vsel %vm609, %v517, %v701
          %703 = vst [vmem:[%s600 + $0xa4] sm:$0x1] %v702
          %v704 = vld [vmem:[%s600 + $0xa8] sm:$0xf]
          %v705 = vsel %vm603, %v524, %v704
          %706 = vst [vmem:[%s600 + $0xa8] sm:$0xf] %v705
          %707 = vst.msk [vmem:[%s600 + $0xac] sm:$0xf] %vm189, %v533
          %v708 = vld [vmem:[%s600 + $0xb0] sm:$0x1]
          %v709 = vsel %vm609, %v534, %v708
          %710 = vst [vmem:[%s600 + $0xb0] sm:$0x1] %v709
          %v711 = vld [vmem:[%s600 + $0xb4] sm:$0xf]
          %v712 = vsel %vm603, %v541, %v711
          %713 = vst [vmem:[%s600 + $0xb4] sm:$0xf] %v712
          %714 = vst.msk [vmem:[%s600 + $0xb8] sm:$0xf] %vm189, %v550
          %v715 = vld [vmem:[%s600 + $0xbc] sm:$0x1]
          %v716 = vsel %vm609, %v551, %v715
          %717 = vst [vmem:[%s600 + $0xbc] sm:$0x1] %v716
        $region36: #{tpu_custom_call.1} parent=31 // pred_fallthru
          _
        %s718 = smul.u32 %s22, 16
        %s719 = smul.u32 %s718, 3
        %s720 = smul.addr %s719, 4
        %s721 = scalar_lea.vmem [#allocation2], %s720
        %v722 = vld [vmem:[%s721] sm:$0xf]
        %v723 = vld [vmem:[%s721 + $0x4] sm:$0xf]
        %v724 = vld [vmem:[%s721 + $0xc] sm:$0xf]
        %v725 = vld [vmem:[%s721 + $0x10] sm:$0xf]
        %v726 = vld [vmem:[%s721 + $0x18] sm:$0xf]
        %v727 = vld [vmem:[%s721 + $0x1c] sm:$0xf]
        %v728 = vld [vmem:[%s721 + $0x24] sm:$0xf]
        %v729 = vld [vmem:[%s721 + $0x28] sm:$0xf]
        %v730 = vld [vmem:[%s721 + $0x30] sm:$0xf]
        %v731 = vld [vmem:[%s721 + $0x34] sm:$0xf]
        %v732 = vld [vmem:[%s721 + $0x3c] sm:$0xf]
        %v733 = vld [vmem:[%s721 + $0x40] sm:$0xf]
        %v734 = vld [vmem:[%s721 + $0x48] sm:$0xf]
        %v735 = vld [vmem:[%s721 + $0x4c] sm:$0xf]
        %v736 = vld [vmem:[%s721 + $0x54] sm:$0xf]
        %v737 = vld [vmem:[%s721 + $0x58] sm:$0xf]
        %v738 = vld [vmem:[%s721 + $0x60] sm:$0xf]
        %v739 = vld [vmem:[%s721 + $0x64] sm:$0xf]
        %v740 = vld [vmem:[%s721 + $0x6c] sm:$0xf]
        %v741 = vld [vmem:[%s721 + $0x70] sm:$0xf]
        %v742 = vld [vmem:[%s721 + $0x78] sm:$0xf]
        %v743 = vld [vmem:[%s721 + $0x7c] sm:$0xf]
        %v744 = vld [vmem:[%s721 + $0x84] sm:$0xf]
        %v745 = vld [vmem:[%s721 + $0x88] sm:$0xf]
        %v746 = vld [vmem:[%s721 + $0x90] sm:$0xf]
        %v747 = vld [vmem:[%s721 + $0x94] sm:$0xf]
        %v748 = vld [vmem:[%s721 + $0x9c] sm:$0xf]
        %v749 = vld [vmem:[%s721 + $0xa0] sm:$0xf]
        %v750 = vld [vmem:[%s721 + $0xa8] sm:$0xf]
        %v751 = vld [vmem:[%s721 + $0xac] sm:$0xf]
        %v752 = vld [vmem:[%s721 + $0xb4] sm:$0xf]
        %v753 = vld [vmem:[%s721 + $0xb8] sm:$0xf]
        %v754 = vld [vmem:[%s1] sm:$0xf]
        %v755 = vld [vmem:[%s721 + $0x8] sm:$0x1]
        %v756 = vld [vmem:[%s721 + $0x14] sm:$0x1]
        %v757 = vld [vmem:[%s721 + $0x20] sm:$0x1]
        %v758 = vld [vmem:[%s721 + $0x2c] sm:$0x1]
        %v759 = vld [vmem:[%s721 + $0x38] sm:$0x1]
        %v760 = vld [vmem:[%s721 + $0x44] sm:$0x1]
        %v761 = vld [vmem:[%s721 + $0x50] sm:$0x1]
        %v762 = vld [vmem:[%s721 + $0x5c] sm:$0x1]
        %v763 = vld [vmem:[%s721 + $0x68] sm:$0x1]
        %v764 = vld [vmem:[%s721 + $0x74] sm:$0x1]
        %v765 = vld [vmem:[%s721 + $0x80] sm:$0x1]
        %v766 = vld [vmem:[%s721 + $0x8c] sm:$0x1]
        %v767 = vld [vmem:[%s721 + $0x98] sm:$0x1]
        %v768 = vld [vmem:[%s721 + $0xa4] sm:$0x1]
        %v769 = vld [vmem:[%s721 + $0xb0] sm:$0x1]
        %v770 = vld [vmem:[%s721 + $0xbc] sm:$0x1]
        %vm771 = vsmask.f32 3328
        %vm772 = vsmask.f32 7440
        %vm773 = vmor %vm771, %vm772
        %v775 = vshrl.u32 %v722, 16
        %v777 = vrot.slane %v775, 4
        %v778 = vshll.u32 %v722, 16
        %v780 = vrot.slane %v778, 5
        %v781 = vor.u32 %v777, %v780
        %v782 = vrot.slane %v781, 4
        %v784 = vshll.u32 %v723, 16
        %v786 = vrot.slane %v784, 5
        %v787 = vsel %vm773, %v782, %v786
        %v788 = vshrl.u32 %v723, 16
        %v790 = vrot.slane %v788, 4
        %v791 = vor.u32 %v790, %v786
        %v792 = vrot.slane %v791, 4
        %v794 = vshll.u32 %v755, 16
        %v796 = vrot.slane %v794, 5
        %v797 = vsel %vm773, %v792, %v796
        %v799 = vshrl.u32 %v724, 16
        %v801 = vrot.slane %v799, 4
        %v802 = vshll.u32 %v724, 16
        %v804 = vrot.slane %v802, 5
        %v805 = vor.u32 %v801, %v804
        %v806 = vrot.slane %v805, 4
        %v808 = vshll.u32 %v725, 16
        %v810 = vrot.slane %v808, 5
        %v811 = vsel %vm773, %v806, %v810
        %v812 = vshrl.u32 %v725, 16
        %v814 = vrot.slane %v812, 4
        %v815 = vor.u32 %v814, %v810
        %v816 = vrot.slane %v815, 4
        %v818 = vshll.u32 %v756, 16
        %v820 = vrot.slane %v818, 5
        %v821 = vsel %vm773, %v816, %v820
        %v823 = vshrl.u32 %v726, 16
        %v825 = vrot.slane %v823, 4
        %v826 = vshll.u32 %v726, 16
        %v828 = vrot.slane %v826, 5
        %v829 = vor.u32 %v825, %v828
        %v830 = vrot.slane %v829, 4
        %v832 = vshll.u32 %v727, 16
        %v834 = vrot.slane %v832, 5
        %v835 = vsel %vm773, %v830, %v834
        %v836 = vshrl.u32 %v727, 16
        %v838 = vrot.slane %v836, 4
        %v839 = vor.u32 %v838, %v834
        %v840 = vrot.slane %v839, 4
        %v842 = vshll.u32 %v757, 16
        %v844 = vrot.slane %v842, 5
        %v845 = vsel %vm773, %v840, %v844
        %v847 = vshrl.u32 %v728, 16
        %v849 = vrot.slane %v847, 4
        %v850 = vshll.u32 %v728, 16
        %v852 = vrot.slane %v850, 5
        %v853 = vor.u32 %v849, %v852
        %v854 = vrot.slane %v853, 4
        %v856 = vshll.u32 %v729, 16
        %v858 = vrot.slane %v856, 5
        %v859 = vsel %vm773, %v854, %v858
        %v860 = vshrl.u32 %v729, 16
        %v862 = vrot.slane %v860, 4
        %v863 = vor.u32 %v862, %v858
        %v864 = vrot.slane %v863, 4
        %v866 = vshll.u32 %v758, 16
        %v868 = vrot.slane %v866, 5
        %v869 = vsel %vm773, %v864, %v868
        %v871 = vshrl.u32 %v730, 16
        %v873 = vrot.slane %v871, 4
        %v874 = vshll.u32 %v730, 16
        %v876 = vrot.slane %v874, 5
        %v877 = vor.u32 %v873, %v876
        %v878 = vrot.slane %v877, 4
        %v880 = vshll.u32 %v731, 16
        %v882 = vrot.slane %v880, 5
        %v883 = vsel %vm773, %v878, %v882
        %v884 = vshrl.u32 %v731, 16
        %v886 = vrot.slane %v884, 4
        %v887 = vor.u32 %v886, %v882
        %v888 = vrot.slane %v887, 4
        %v890 = vshll.u32 %v759, 16
        %v892 = vrot.slane %v890, 5
        %v893 = vsel %vm773, %v888, %v892
        %v895 = vshrl.u32 %v732, 16
        %v897 = vrot.slane %v895, 4
        %v898 = vshll.u32 %v732, 16
        %v900 = vrot.slane %v898, 5
        %v901 = vor.u32 %v897, %v900
        %v902 = vrot.slane %v901, 4
        %v904 = vshll.u32 %v733, 16
        %v906 = vrot.slane %v904, 5
        %v907 = vsel %vm773, %v902, %v906
        %v908 = vshrl.u32 %v733, 16
        %v910 = vrot.slane %v908, 4
        %v911 = vor.u32 %v910, %v906
        %v912 = vrot.slane %v911, 4
        %v914 = vshll.u32 %v760, 16
        %v916 = vrot.slane %v914, 5
        %v917 = vsel %vm773, %v912, %v916
        %v919 = vshrl.u32 %v734, 16
        %v921 = vrot.slane %v919, 4
        %v922 = vshll.u32 %v734, 16
        %v924 = vrot.slane %v922, 5
        %v925 = vor.u32 %v921, %v924
        %v926 = vrot.slane %v925, 4
        %v928 = vshll.u32 %v735, 16
        %v930 = vrot.slane %v928, 5
        %v931 = vsel %vm773, %v926, %v930
        %v932 = vshrl.u32 %v735, 16
        %v934 = vrot.slane %v932, 4
        %v935 = vor.u32 %v934, %v930
        %v936 = vrot.slane %v935, 4
        %v938 = vshll.u32 %v761, 16
        %v940 = vrot.slane %v938, 5
        %v941 = vsel %vm773, %v936, %v940
        %v943 = vshrl.u32 %v736, 16
        %v945 = vrot.slane %v943, 4
        %v946 = vshll.u32 %v736, 16
        %v948 = vrot.slane %v946, 5
        %v949 = vor.u32 %v945, %v948
        %v950 = vrot.slane %v949, 4
        %v952 = vshll.u32 %v737, 16
        %v954 = vrot.slane %v952, 5
        %v955 = vsel %vm773, %v950, %v954
        %v956 = vshrl.u32 %v737, 16
        %v958 = vrot.slane %v956, 4
        %v959 = vor.u32 %v958, %v954
        %v960 = vrot.slane %v959, 4
        %v962 = vshll.u32 %v762, 16
        %v964 = vrot.slane %v962, 5
        %v965 = vsel %vm773, %v960, %v964
        %v967 = vshrl.u32 %v738, 16
        %v969 = vrot.slane %v967, 4
        %v970 = vshll.u32 %v738, 16
        %v972 = vrot.slane %v970, 5
        %v973 = vor.u32 %v969, %v972
        %v974 = vrot.slane %v973, 4
        %v976 = vshll.u32 %v739, 16
        %v978 = vrot.slane %v976, 5
        %v979 = vsel %vm773, %v974, %v978
        %v980 = vshrl.u32 %v739, 16
        %v982 = vrot.slane %v980, 4
        %v983 = vor.u32 %v982, %v978
        %v984 = vrot.slane %v983, 4
        %v986 = vshll.u32 %v763, 16
        %v988 = vrot.slane %v986, 5
        %v989 = vsel %vm773, %v984, %v988
        %v991 = vshrl.u32 %v740, 16
        %v993 = vrot.slane %v991, 4
        %v994 = vshll.u32 %v740, 16
        %v996 = vrot.slane %v994, 5
        %v997 = vor.u32 %v993, %v996
        %v998 = vrot.slane %v997, 4
        %v1000 = vshll.u32 %v741, 16
        %v1002 = vrot.slane %v1000, 5
        %v1003 = vsel %vm773, %v998, %v1002
        %v1004 = vshrl.u32 %v741, 16
        %v1006 = vrot.slane %v1004, 4
        %v1007 = vor.u32 %v1006, %v1002
        %v1008 = vrot.slane %v1007, 4
        %v1010 = vshll.u32 %v764, 16
        %v1012 = vrot.slane %v1010, 5
        %v1013 = vsel %vm773, %v1008, %v1012
        %v1015 = vshrl.u32 %v742, 16
        %v1017 = vrot.slane %v1015, 4
        %v1018 = vshll.u32 %v742, 16
        %v1020 = vrot.slane %v1018, 5
        %v1021 = vor.u32 %v1017, %v1020
        %v1022 = vrot.slane %v1021, 4
        %v1024 = vshll.u32 %v743, 16
        %v1026 = vrot.slane %v1024, 5
        %v1027 = vsel %vm773, %v1022, %v1026
        %v1028 = vshrl.u32 %v743, 16
        %v1030 = vrot.slane %v1028, 4
        %v1031 = vor.u32 %v1030, %v1026
        %v1032 = vrot.slane %v1031, 4
        %v1034 = vshll.u32 %v765, 16
        %v1036 = vrot.slane %v1034, 5
        %v1037 = vsel %vm773, %v1032, %v1036
        %v1039 = vshrl.u32 %v744, 16
        %v1041 = vrot.slane %v1039, 4
        %v1042 = vshll.u32 %v744, 16
        %v1044 = vrot.slane %v1042, 5
        %v1045 = vor.u32 %v1041, %v1044
        %v1046 = vrot.slane %v1045, 4
        %v1048 = vshll.u32 %v745, 16
        %v1050 = vrot.slane %v1048, 5
        %v1051 = vsel %vm773, %v1046, %v1050
        %v1052 = vshrl.u32 %v745, 16
        %v1054 = vrot.slane %v1052, 4
        %v1055 = vor.u32 %v1054, %v1050
        %v1056 = vrot.slane %v1055, 4
        %v1058 = vshll.u32 %v766, 16
        %v1060 = vrot.slane %v1058, 5
        %v1061 = vsel %vm773, %v1056, %v1060
        %v1063 = vshrl.u32 %v746, 16
        %v1065 = vrot.slane %v1063, 4
        %v1066 = vshll.u32 %v746, 16
        %v1068 = vrot.slane %v1066, 5
        %v1069 = vor.u32 %v1065, %v1068
        %v1070 = vrot.slane %v1069, 4
        %v1072 = vshll.u32 %v747, 16
        %v1074 = vrot.slane %v1072, 5
        %v1075 = vsel %vm773, %v1070, %v1074
        %v1076 = vshrl.u32 %v747, 16
        %v1078 = vrot.slane %v1076, 4
        %v1079 = vor.u32 %v1078, %v1074
        %v1080 = vrot.slane %v1079, 4
        %v1082 = vshll.u32 %v767, 16
        %v1084 = vrot.slane %v1082, 5
        %v1085 = vsel %vm773, %v1080, %v1084
        %v1087 = vshrl.u32 %v748, 16
        %v1089 = vrot.slane %v1087, 4
        %v1090 = vshll.u32 %v748, 16
        %v1092 = vrot.slane %v1090, 5
        %v1093 = vor.u32 %v1089, %v1092
        %v1094 = vrot.slane %v1093, 4
        %v1096 = vshll.u32 %v749, 16
        %v1098 = vrot.slane %v1096, 5
        %v1099 = vsel %vm773, %v1094, %v1098
        %v1100 = vshrl.u32 %v749, 16
        %v1102 = vrot.slane %v1100, 4
        %v1103 = vor.u32 %v1102, %v1098
        %v1104 = vrot.slane %v1103, 4
        %v1106 = vshll.u32 %v768, 16
        %v1108 = vrot.slane %v1106, 5
        %v1109 = vsel %vm773, %v1104, %v1108
        %v1111 = vshrl.u32 %v750, 16
        %v1113 = vrot.slane %v1111, 4
        %v1114 = vshll.u32 %v750, 16
        %v1116 = vrot.slane %v1114, 5
        %v1117 = vor.u32 %v1113, %v1116
        %v1118 = vrot.slane %v1117, 4
        %v1120 = vshll.u32 %v751, 16
        %v1122 = vrot.slane %v1120, 5
        %v1123 = vsel %vm773, %v1118, %v1122
        %v1124 = vshrl.u32 %v751, 16
        %v1126 = vrot.slane %v1124, 4
        %v1127 = vor.u32 %v1126, %v1122
        %v1128 = vrot.slane %v1127, 4
        %v1130 = vshll.u32 %v769, 16
        %v1132 = vrot.slane %v1130, 5
        %v1133 = vsel %vm773, %v1128, %v1132
        %v1135 = vshrl.u32 %v752, 16
        %v1137 = vrot.slane %v1135, 4
        %v1138 = vshll.u32 %v752, 16
        %v1140 = vrot.slane %v1138, 5
        %v1141 = vor.u32 %v1137, %v1140
        %v1142 = vrot.slane %v1141, 4
        %v1144 = vshll.u32 %v753, 16
        %v1146 = vrot.slane %v1144, 5
        %v1147 = vsel %vm773, %v1142, %v1146
        %v1148 = vshrl.u32 %v753, 16
        %v1150 = vrot.slane %v1148, 4
        %v1151 = vor.u32 %v1150, %v1146
        %v1152 = vrot.slane %v1151, 4
        %v1154 = vshll.u32 %v770, 16
        %v1156 = vrot.slane %v1154, 5
        %v1157 = vsel %vm773, %v1152, %v1156
        %v1158 = vld [vmem:[%s1 + $0x4] sm:$0xf]
        %v1159 = vunpack.c.l.b16 %v787
        %v1160 = vunpack.c.l.b16 %v797
        %v1161 = vunpack.c.l.b16 %v811
        %v1162 = vunpack.c.l.b16 %v821
        %v1163 = vunpack.c.l.b16 %v835
        %v1164 = vunpack.c.l.b16 %v845
        %v1165 = vunpack.c.l.b16 %v859
        %v1166 = vunpack.c.l.b16 %v869
        %v1167 = vunpack.c.l.b16 %v883
        %v1168 = vunpack.c.l.b16 %v893
        %v1169 = vunpack.c.l.b16 %v907
        %v1170 = vunpack.c.l.b16 %v917
        %v1171 = vunpack.c.l.b16 %v931
        %v1172 = vunpack.c.l.b16 %v941
        %v1173 = vunpack.c.l.b16 %v955
        %v1174 = vunpack.c.l.b16 %v965
        %v1175 = vunpack.c.l.b16 %v979
        %v1176 = vunpack.c.l.b16 %v989
        %v1177 = vunpack.c.l.b16 %v1003
        %v1178 = vunpack.c.l.b16 %v1013
        %v1179 = vunpack.c.l.b16 %v1027
        %v1180 = vunpack.c.l.b16 %v1037
        %v1181 = vunpack.c.l.b16 %v1051
        %v1182 = vunpack.c.l.b16 %v1061
        %v1183 = vunpack.c.l.b16 %v1075
        %v1184 = vunpack.c.l.b16 %v1085
        %v1185 = vunpack.c.l.b16 %v1099
        %v1186 = vunpack.c.l.b16 %v1109
        %v1187 = vunpack.c.l.b16 %v1123
        %v1188 = vunpack.c.l.b16 %v1133
        %v1189 = vunpack.c.l.b16 %v1147
        %v1190 = vunpack.c.l.b16 %v1157
        %v1191 = vpack.c.b16 %v1160, %v1159
        %v1192 = vpack.c.b16 %v1162, %v1161
        %v1193 = vpack.c.b16 %v1164, %v1163
        %v1194 = vpack.c.b16 %v1166, %v1165
        %v1195 = vpack.c.b16 %v1168, %v1167
        %v1196 = vpack.c.b16 %v1170, %v1169
        %v1197 = vpack.c.b16 %v1172, %v1171
        %v1198 = vpack.c.b16 %v1174, %v1173
        %v1199 = vpack.c.b16 %v1176, %v1175
        %v1200 = vpack.c.b16 %v1178, %v1177
        %v1201 = vpack.c.b16 %v1180, %v1179
        %v1202 = vpack.c.b16 %v1182, %v1181
        %v1203 = vpack.c.b16 %v1184, %v1183
        %v1204 = vpack.c.b16 %v1186, %v1185
        %v1205 = vpack.c.b16 %v1188, %v1187
        %v1206 = vpack.c.b16 %v1190, %v1189
        %vm1207 = vcmask 64512
        %v1209 = vsel %vm1207, %v1191, 0
        %v1212 = vsel %vm1207, %v1192, 0
        %v1215 = vsel %vm1207, %v1193, 0
        %v1218 = vsel %vm1207, %v1194, 0
        %v1221 = vsel %vm1207, %v1195, 0
        %v1224 = vsel %vm1207, %v1196, 0
        %v1227 = vsel %vm1207, %v1197, 0
        %v1230 = vsel %vm1207, %v1198, 0
        %v1233 = vsel %vm1207, %v1199, 0
        %v1236 = vsel %vm1207, %v1200, 0
        %v1239 = vsel %vm1207, %v1201, 0
        %v1242 = vsel %vm1207, %v1202, 0
        %v1245 = vsel %vm1207, %v1203, 0
        %v1248 = vsel %vm1207, %v1204, 0
        %v1251 = vsel %vm1207, %v1205, 0
        %v1254 = vsel %vm1207, %v1206, 0
        %vm1256 = vcmask 1043456
        %v1258 = vsel %vm1256, %v1158, 0
        %1260 = vmatprep.subr.bf16.mxu0 0
        %1261 = vmatpush1.bf16.msra.mxu0 %v1258
        %1262 = vmatprep.subr.bf16.mxu0 0
        %1263 = vmatpush1.bf16.msra.mxu0 0
        %1264 = vmatprep.subr.bf16.mxu0 0
        %1265 = vmatpush1.bf16.msra.mxu0 0
        %1266 = vmatprep.subr.bf16.mxu0 0
        %1267 = vmatpush1.bf16.msra.mxu0 0
        %1268 = vmatprep.subr.bf16.mxu0 0
        %1269 = vmatpush1.bf16.msra.mxu0 0
        %1270 = vmatprep.subr.bf16.mxu0 0
        %1271 = vmatpush1.bf16.msra.mxu0 0
        %1272 = vmatprep.subr.bf16.mxu0 0
        %1273 = vmatpush1.bf16.msra.mxu0 0
        %1274 = vmatprep.subr.bf16.mxu0 0
        %1275 = vmatpush1.bf16.msra.mxu0 0
        %1276 = vmatprep.subr.bf16.mxu0 0
        %1277 = vmatpush1.bf16.msra.mxu0 0
        %1278 = vmatprep.subr.bf16.mxu0 0
        %1279 = vmatpush1.bf16.msra.mxu0 0
        %1280 = vmatprep.subr.bf16.mxu0 0
        %1281 = vmatpush1.bf16.msra.mxu0 0
        %1282 = vmatprep.subr.bf16.mxu0 0
        %1283 = vmatpush1.bf16.msra.mxu0 0
        %1284 = vmatprep.subr.bf16.mxu0 0
        %1285 = vmatpush1.bf16.msra.mxu0 0
        %1286 = vmatprep.subr.bf16.mxu0 0
        %1287 = vmatpush1.bf16.msra.mxu0 0
        %1288 = vmatprep.subr.bf16.mxu0 0
        %1289 = vmatpush1.bf16.msra.mxu0 0
        %1290 = vmatprep.subr.bf16.mxu0 0
        %1291 = vmatpush1.bf16.msra.mxu0 0
        %1292 = vmatprep.mubr.bf16.mxu0 0
        %1293 = vmatmul.mubr.bf16.gmra.mrb[0].mxu0 %v1209
        %v1294 = vpop.f32.mrb[0].mxu0
        %v1295 = vadd.f32 0.0, %v1294
        %v1296 = vpop.f32.mrb[0].mxu0
        %v1297 = vpop.f32.mrb[0].mxu0
        %v1298 = vadd.f32 0.0, %v1297
        %v1299 = vpop.f32.mrb[0].mxu0
        %1300 = vmatprep.mubr.bf16.mxu0 0
        %1301 = vmatmul.mubr.bf16.gmra.mrb[0].mxu0 %v1212
        %v1302 = vpop.f32.mrb[0].mxu0
        %v1303 = vadd.f32 0.0, %v1302
        %v1304 = vpop.f32.mrb[0].mxu0
        %v1305 = vpop.f32.mrb[0].mxu0
        %v1306 = vadd.f32 0.0, %v1305
        %v1307 = vpop.f32.mrb[0].mxu0
        %1308 = vmatprep.mubr.bf16.mxu0 0
        %1309 = vmatmul.mubr.bf16.gmra.mrb[0].mxu0 %v1215
        %v1310 = vpop.f32.mrb[0].mxu0
        %v1311 = vadd.f32 0.0, %v1310
        %v1312 = vpop.f32.mrb[0].mxu0
        %v1313 = vpop.f32.mrb[0].mxu0
        %v1314 = vadd.f32 0.0, %v1313
        %v1315 = vpop.f32.mrb[0].mxu0
        %1316 = vmatprep.mubr.bf16.mxu0 0
        %1317 = vmatmul.mubr.bf16.gmra.mrb[0].mxu0 %v1218
        %v1318 = vpop.f32.mrb[0].mxu0
        %v1319 = vadd.f32 0.0, %v1318
        %v1320 = vpop.f32.mrb[0].mxu0
        %v1321 = vpop.f32.mrb[0].mxu0
        %v1322 = vadd.f32 0.0, %v1321
        %v1323 = vpop.f32.mrb[0].mxu0
        %1324 = vmatprep.mubr.bf16.mxu0 0
        %1325 = vmatmul.mubr.bf16.gmra.mrb[0].mxu0 %v1221
        %v1326 = vpop.f32.mrb[0].mxu0
        %v1327 = vadd.f32 0.0, %v1326
        %v1328 = vpop.f32.mrb[0].mxu0
        %v1329 = vpop.f32.mrb[0].mxu0
        %v1330 = vadd.f32 0.0, %v1329
        %v1331 = vpop.f32.mrb[0].mxu0
        %1332 = vmatprep.mubr.bf16.mxu0 0
        %1333 = vmatmul.mubr.bf16.gmra.mrb[0].mxu0 %v1224
        %v1334 = vpop.f32.mrb[0].mxu0
        %v1335 = vadd.f32 0.0, %v1334
        %v1336 = vpop.f32.mrb[0].mxu0
        %v1337 = vpop.f32.mrb[0].mxu0
        %v1338 = vadd.f32 0.0, %v1337
        %v1339 = vpop.f32.mrb[0].mxu0
        %1340 = vmatprep.mubr.bf16.mxu0 0
        %1341 = vmatmul.mubr.bf16.gmra.mrb[0].mxu0 %v1227
        %v1342 = vpop.f32.mrb[0].mxu0
        %v1343 = vadd.f32 0.0, %v1342
        %v1344 = vpop.f32.mrb[0].mxu0
        %v1345 = vpop.f32.mrb[0].mxu0
        %v1346 = vadd.f32 0.0, %v1345
        %v1347 = vpop.f32.mrb[0].mxu0
        %1348 = vmatprep.mubr.bf16.mxu0 0
        %1349 = vmatmul.mubr.bf16.gmra.mrb[0].mxu0 %v1230
        %v1350 = vpop.f32.mrb[0].mxu0
        %v1351 = vadd.f32 0.0, %v1350
        %v1352 = vpop.f32.mrb[0].mxu0
        %v1353 = vpop.f32.mrb[0].mxu0
        %v1354 = vadd.f32 0.0, %v1353
        %v1355 = vpop.f32.mrb[0].mxu0
        %1356 = vmatprep.mubr.bf16.mxu0 0
        %1357 = vmatmul.mubr.bf16.gmra.mrb[0].mxu0 %v1233
        %v1358 = vpop.f32.mrb[0].mxu0
        %v1359 = vadd.f32 0.0, %v1358
        %v1360 = vpop.f32.mrb[0].mxu0
        %v1361 = vpop.f32.mrb[0].mxu0
        %v1362 = vadd.f32 0.0, %v1361
        %v1363 = vpop.f32.mrb[0].mxu0
        %1364 = vmatprep.mubr.bf16.mxu0 0
        %1365 = vmatmul.mubr.bf16.gmra.mrb[0].mxu0 %v1236
        %v1366 = vpop.f32.mrb[0].mxu0
        %v1367 = vadd.f32 0.0, %v1366
        %v1368 = vpop.f32.mrb[0].mxu0
        %v1369 = vpop.f32.mrb[0].mxu0
        %v1370 = vadd.f32 0.0, %v1369
        %v1371 = vpop.f32.mrb[0].mxu0
        %1372 = vmatprep.mubr.bf16.mxu0 0
        %1373 = vmatmul.mubr.bf16.gmra.mrb[0].mxu0 %v1239
        %v1374 = vpop.f32.mrb[0].mxu0
        %v1375 = vadd.f32 0.0, %v1374
        %v1376 = vpop.f32.mrb[0].mxu0
        %v1377 = vpop.f32.mrb[0].mxu0
        %v1378 = vadd.f32 0.0, %v1377
        %v1379 = vpop.f32.mrb[0].mxu0
        %1380 = vmatprep.mubr.bf16.mxu0 0
        %1381 = vmatmul.mubr.bf16.gmra.mrb[0].mxu0 %v1242
        %v1382 = vpop.f32.mrb[0].mxu0
        %v1383 = vadd.f32 0.0, %v1382
        %v1384 = vpop.f32.mrb[0].mxu0
        %v1385 = vpop.f32.mrb[0].mxu0
        %v1386 = vadd.f32 0.0, %v1385
        %v1387 = vpop.f32.mrb[0].mxu0
        %1388 = vmatprep.mubr.bf16.mxu0 0
        %1389 = vmatmul.mubr.bf16.gmra.mrb[0].mxu0 %v1245
        %v1390 = vpop.f32.mrb[0].mxu0
        %v1391 = vadd.f32 0.0, %v1390
        %v1392 = vpop.f32.mrb[0].mxu0
        %v1393 = vpop.f32.mrb[0].mxu0
        %v1394 = vadd.f32 0.0, %v1393
        %v1395 = vpop.f32.mrb[0].mxu0
        %1396 = vmatprep.mubr.bf16.mxu0 0
        %1397 = vmatmul.mubr.bf16.gmra.mrb[0].mxu0 %v1248
        %v1398 = vpop.f32.mrb[0].mxu0
        %v1399 = vadd.f32 0.0, %v1398
        %v1400 = vpop.f32.mrb[0].mxu0
        %v1401 = vpop.f32.mrb[0].mxu0
        %v1402 = vadd.f32 0.0, %v1401
        %v1403 = vpop.f32.mrb[0].mxu0
        %1404 = vmatprep.mubr.bf16.mxu0 0
        %1405 = vmatmul.mubr.bf16.gmra.mrb[0].mxu0 %v1251
        %v1406 = vpop.f32.mrb[0].mxu0
        %v1407 = vadd.f32 0.0, %v1406
        %v1408 = vpop.f32.mrb[0].mxu0
        %v1409 = vpop.f32.mrb[0].mxu0
        %v1410 = vadd.f32 0.0, %v1409
        %v1411 = vpop.f32.mrb[0].mxu0
        %1412 = vmatprep.mubr.bf16.mxu0 0
        %1413 = vmatmul.mubr.bf16.gmra.mrb[0].mxu0 %v1254
        %v1414 = vpop.f32.mrb[0].mxu0
        %v1415 = vadd.f32 0.0, %v1414
        %v1416 = vpop.f32.mrb[0].mxu0
        %v1417 = vpop.f32.mrb[0].mxu0
        %v1418 = vadd.f32 0.0, %v1417
        %v1419 = vpop.f32.mrb[0].mxu0
        %1420 = vdwg.mxu0
        %v1453 = vunpack.c.l.b16 %v722
        %v1454 = vunpack.c.l.b16 %v723
        %v1455 = vunpack.c.l.b16 %v724
        %v1456 = vunpack.c.l.b16 %v725
        %v1457 = vunpack.c.l.b16 %v726
        %v1458 = vunpack.c.l.b16 %v727
        %v1459 = vunpack.c.l.b16 %v728
        %v1460 = vunpack.c.l.b16 %v729
        %v1461 = vunpack.c.l.b16 %v730
        %v1462 = vunpack.c.l.b16 %v731
        %v1463 = vunpack.c.l.b16 %v732
        %v1464 = vunpack.c.l.b16 %v733
        %v1465 = vunpack.c.l.b16 %v734
        %v1466 = vunpack.c.l.b16 %v735
        %v1467 = vunpack.c.l.b16 %v736
        %v1468 = vunpack.c.l.b16 %v737
        %v1469 = vunpack.c.l.b16 %v738
        %v1470 = vunpack.c.l.b16 %v739
        %v1471 = vunpack.c.l.b16 %v740
        %v1472 = vunpack.c.l.b16 %v741
        %v1473 = vunpack.c.l.b16 %v742
        %v1474 = vunpack.c.l.b16 %v743
        %v1475 = vunpack.c.l.b16 %v744
        %v1476 = vunpack.c.l.b16 %v745
        %v1477 = vunpack.c.l.b16 %v746
        %v1478 = vunpack.c.l.b16 %v747
        %v1479 = vunpack.c.l.b16 %v748
        %v1480 = vunpack.c.l.b16 %v749
        %v1481 = vunpack.c.l.b16 %v750
        %v1482 = vunpack.c.l.b16 %v751
        %v1483 = vunpack.c.l.b16 %v752
        %v1484 = vunpack.c.l.b16 %v753
        %v1485 = vpack.c.b16 %v1454, %v1453
        %v1486 = vpack.c.b16 %v1456, %v1455
        %v1487 = vpack.c.b16 %v1458, %v1457
        %v1488 = vpack.c.b16 %v1460, %v1459
        %v1489 = vpack.c.b16 %v1462, %v1461
        %v1490 = vpack.c.b16 %v1464, %v1463
        %v1491 = vpack.c.b16 %v1466, %v1465
        %v1492 = vpack.c.b16 %v1468, %v1467
        %v1493 = vpack.c.b16 %v1470, %v1469
        %v1494 = vpack.c.b16 %v1472, %v1471
        %v1495 = vpack.c.b16 %v1474, %v1473
        %v1496 = vpack.c.b16 %v1476, %v1475
        %v1497 = vpack.c.b16 %v1478, %v1477
        %v1498 = vpack.c.b16 %v1480, %v1479
        %v1499 = vpack.c.b16 %v1482, %v1481
        %v1500 = vpack.c.b16 %v1484, %v1483
        %v1502 = vsel %vm1207, %v1485, 0
        %v1505 = vsel %vm1207, %v1486, 0
        %v1508 = vsel %vm1207, %v1487, 0
        %v1511 = vsel %vm1207, %v1488, 0
        %v1514 = vsel %vm1207, %v1489, 0
        %v1517 = vsel %vm1207, %v1490, 0
        %v1520 = vsel %vm1207, %v1491, 0
        %v1523 = vsel %vm1207, %v1492, 0
        %v1526 = vsel %vm1207, %v1493, 0
        %v1529 = vsel %vm1207, %v1494, 0
        %v1532 = vsel %vm1207, %v1495, 0
        %v1535 = vsel %vm1207, %v1496, 0
        %v1538 = vsel %vm1207, %v1497, 0
        %v1541 = vsel %vm1207, %v1498, 0
        %v1544 = vsel %vm1207, %v1499, 0
        %v1547 = vsel %vm1207, %v1500, 0
        %v1550 = vsel %vm1256, %v754, 0
        %1552 = vmatprep.subr.bf16.mxu0 0
        %1553 = vmatpush1.bf16.msra.mxu0 %v1550
        %1554 = vmatprep.subr.bf16.mxu0 0
        %1555 = vmatpush1.bf16.msra.mxu0 0
        %1556 = vmatprep.subr.bf16.mxu0 0
        %1557 = vmatpush1.bf16.msra.mxu0 0
        %1558 = vmatprep.subr.bf16.mxu0 0
        %1559 = vmatpush1.bf16.msra.mxu0 0
        %1560 = vmatprep.subr.bf16.mxu0 0
        %1561 = vmatpush1.bf16.msra.mxu0 0
        %1562 = vmatprep.subr.bf16.mxu0 0
        %1563 = vmatpush1.bf16.msra.mxu0 0
        %1564 = vmatprep.subr.bf16.mxu0 0
        %1565 = vmatpush1.bf16.msra.mxu0 0
        %1566 = vmatprep.subr.bf16.mxu0 0
        %1567 = vmatpush1.bf16.msra.mxu0 0
        %1568 = vmatprep.subr.bf16.mxu0 0
        %1569 = vmatpush1.bf16.msra.mxu0 0
        %1570 = vmatprep.subr.bf16.mxu0 0
        %1571 = vmatpush1.bf16.msra.mxu0 0
        %1572 = vmatprep.subr.bf16.mxu0 0
        %1573 = vmatpush1.bf16.msra.mxu0 0
        %1574 = vmatprep.subr.bf16.mxu0 0
        %1575 = vmatpush1.bf16.msra.mxu0 0
        %1576 = vmatprep.subr.bf16.mxu0 0
        %1577 = vmatpush1.bf16.msra.mxu0 0
        %1578 = vmatprep.subr.bf16.mxu0 0
        %1579 = vmatpush1.bf16.msra.mxu0 0
        %1580 = vmatprep.subr.bf16.mxu0 0
        %1581 = vmatpush1.bf16.msra.mxu0 0
        %1582 = vmatprep.subr.bf16.mxu0 0
        %1583 = vmatpush1.bf16.msra.mxu0 0
        %1584 = vmatprep.mubr.bf16.mxu0 0
        %1585 = vmatmul.mubr.bf16.gmra.mrb[0].mxu0 %v1502
        %v1586 = vpop.f32.mrb[0].mxu0
        %v1587 = vadd.f32 %v1295, %v1586
        %v1588 = vpop.f32.mrb[0].mxu0
        %v1589 = vpop.f32.mrb[0].mxu0
        %v1590 = vadd.f32 %v1298, %v1589
        %v1591 = vpop.f32.mrb[0].mxu0
        %1592 = vmatprep.mubr.bf16.mxu0 0
        %1593 = vmatmul.mubr.bf16.gmra.mrb[0].mxu0 %v1505
        %v1594 = vpop.f32.mrb[0].mxu0
        %v1595 = vadd.f32 %v1303, %v1594
        %v1596 = vpop.f32.mrb[0].mxu0
        %v1597 = vpop.f32.mrb[0].mxu0
        %v1598 = vadd.f32 %v1306, %v1597
        %v1599 = vpop.f32.mrb[0].mxu0
        %1600 = vmatprep.mubr.bf16.mxu0 0
        %1601 = vmatmul.mubr.bf16.gmra.mrb[0].mxu0 %v1508
        %v1602 = vpop.f32.mrb[0].mxu0
        %v1603 = vadd.f32 %v1311, %v1602
        %v1604 = vpop.f32.mrb[0].mxu0
        %v1605 = vpop.f32.mrb[0].mxu0
        %v1606 = vadd.f32 %v1314, %v1605
        %v1607 = vpop.f32.mrb[0].mxu0
        %1608 = vmatprep.mubr.bf16.mxu0 0
        %1609 = vmatmul.mubr.bf16.gmra.mrb[0].mxu0 %v1511
        %v1610 = vpop.f32.mrb[0].mxu0
        %v1611 = vadd.f32 %v1319, %v1610
        %v1612 = vpop.f32.mrb[0].mxu0
        %v1613 = vpop.f32.mrb[0].mxu0
        %v1614 = vadd.f32 %v1322, %v1613
        %v1615 = vpop.f32.mrb[0].mxu0
        %1616 = vmatprep.mubr.bf16.mxu0 0
        %1617 = vmatmul.mubr.bf16.gmra.mrb[0].mxu0 %v1514
        %v1618 = vpop.f32.mrb[0].mxu0
        %v1619 = vadd.f32 %v1327, %v1618
        %v1620 = vpop.f32.mrb[0].mxu0
        %v1621 = vpop.f32.mrb[0].mxu0
        %v1622 = vadd.f32 %v1330, %v1621
        %v1623 = vpop.f32.mrb[0].mxu0
        %1624 = vmatprep.mubr.bf16.mxu0 0
        %1625 = vmatmul.mubr.bf16.gmra.mrb[0].mxu0 %v1517
        %v1626 = vpop.f32.mrb[0].mxu0
        %v1627 = vadd.f32 %v1335, %v1626
        %v1628 = vpop.f32.mrb[0].mxu0
        %v1629 = vpop.f32.mrb[0].mxu0
        %v1630 = vadd.f32 %v1338, %v1629
        %v1631 = vpop.f32.mrb[0].mxu0
        %1632 = vmatprep.mubr.bf16.mxu0 0
        %1633 = vmatmul.mubr.bf16.gmra.mrb[0].mxu0 %v1520
        %v1634 = vpop.f32.mrb[0].mxu0
        %v1635 = vadd.f32 %v1343, %v1634
        %v1636 = vpop.f32.mrb[0].mxu0
        %v1637 = vpop.f32.mrb[0].mxu0
        %v1638 = vadd.f32 %v1346, %v1637
        %v1639 = vpop.f32.mrb[0].mxu0
        %1640 = vmatprep.mubr.bf16.mxu0 0
        %1641 = vmatmul.mubr.bf16.gmra.mrb[0].mxu0 %v1523
        %v1642 = vpop.f32.mrb[0].mxu0
        %v1643 = vadd.f32 %v1351, %v1642
        %v1644 = vpop.f32.mrb[0].mxu0
        %v1645 = vpop.f32.mrb[0].mxu0
        %v1646 = vadd.f32 %v1354, %v1645
        %v1647 = vpop.f32.mrb[0].mxu0
        %1648 = vmatprep.mubr.bf16.mxu0 0
        %1649 = vmatmul.mubr.bf16.gmra.mrb[0].mxu0 %v1526
        %v1650 = vpop.f32.mrb[0].mxu0
        %v1651 = vadd.f32 %v1359, %v1650
        %v1652 = vpop.f32.mrb[0].mxu0
        %v1653 = vpop.f32.mrb[0].mxu0
        %v1654 = vadd.f32 %v1362, %v1653
        %v1655 = vpop.f32.mrb[0].mxu0
        %1656 = vmatprep.mubr.bf16.mxu0 0
        %1657 = vmatmul.mubr.bf16.gmra.mrb[0].mxu0 %v1529
        %v1658 = vpop.f32.mrb[0].mxu0
        %v1659 = vadd.f32 %v1367, %v1658
        %v1660 = vpop.f32.mrb[0].mxu0
        %v1661 = vpop.f32.mrb[0].mxu0
        %v1662 = vadd.f32 %v1370, %v1661
        %v1663 = vpop.f32.mrb[0].mxu0
        %1664 = vmatprep.mubr.bf16.mxu0 0
        %1665 = vmatmul.mubr.bf16.gmra.mrb[0].mxu0 %v1532
        %v1666 = vpop.f32.mrb[0].mxu0
        %v1667 = vadd.f32 %v1375, %v1666
        %v1668 = vpop.f32.mrb[0].mxu0
        %v1669 = vpop.f32.mrb[0].mxu0
        %v1670 = vadd.f32 %v1378, %v1669
        %v1671 = vpop.f32.mrb[0].mxu0
        %1672 = vmatprep.mubr.bf16.mxu0 0
        %1673 = vmatmul.mubr.bf16.gmra.mrb[0].mxu0 %v1535
        %v1674 = vpop.f32.mrb[0].mxu0
        %v1675 = vadd.f32 %v1383, %v1674
        %v1676 = vpop.f32.mrb[0].mxu0
        %v1677 = vpop.f32.mrb[0].mxu0
        %v1678 = vadd.f32 %v1386, %v1677
        %v1679 = vpop.f32.mrb[0].mxu0
        %1680 = vmatprep.mubr.bf16.mxu0 0
        %1681 = vmatmul.mubr.bf16.gmra.mrb[0].mxu0 %v1538
        %v1682 = vpop.f32.mrb[0].mxu0
        %v1683 = vadd.f32 %v1391, %v1682
        %v1684 = vpop.f32.mrb[0].mxu0
        %v1685 = vpop.f32.mrb[0].mxu0
        %v1686 = vadd.f32 %v1394, %v1685
        %v1687 = vpop.f32.mrb[0].mxu0
        %1688 = vmatprep.mubr.bf16.mxu0 0
        %1689 = vmatmul.mubr.bf16.gmra.mrb[0].mxu0 %v1541
        %v1690 = vpop.f32.mrb[0].mxu0
        %v1691 = vadd.f32 %v1399, %v1690
        %v1692 = vpop.f32.mrb[0].mxu0
        %v1693 = vpop.f32.mrb[0].mxu0
        %v1694 = vadd.f32 %v1402, %v1693
        %v1695 = vpop.f32.mrb[0].mxu0
        %1696 = vmatprep.mubr.bf16.mxu0 0
        %1697 = vmatmul.mubr.bf16.gmra.mrb[0].mxu0 %v1544
        %v1698 = vpop.f32.mrb[0].mxu0
        %v1699 = vadd.f32 %v1407, %v1698
        %v1700 = vpop.f32.mrb[0].mxu0
        %v1701 = vpop.f32.mrb[0].mxu0
        %v1702 = vadd.f32 %v1410, %v1701
        %v1703 = vpop.f32.mrb[0].mxu0
        %1704 = vmatprep.mubr.bf16.mxu0 0
        %1705 = vmatmul.mubr.bf16.gmra.mrb[0].mxu0 %v1547
        %v1706 = vpop.f32.mrb[0].mxu0
        %v1707 = vadd.f32 %v1415, %v1706
        %v1708 = vpop.f32.mrb[0].mxu0
        %v1709 = vpop.f32.mrb[0].mxu0
        %v1710 = vadd.f32 %v1418, %v1709
        %v1711 = vpop.f32.mrb[0].mxu0
        %1712 = vdwg.mxu0
        %v1713 = vld [vmem:[%s721] sm:$0xe]
        %v1714 = vld [vmem:[%s721 + $0xc] sm:$0xe]
        %v1715 = vld [vmem:[%s721 + $0x18] sm:$0xe]
        %v1716 = vld [vmem:[%s721 + $0x24] sm:$0xe]
        %v1717 = vld [vmem:[%s721 + $0x30] sm:$0xe]
        %v1718 = vld [vmem:[%s721 + $0x3c] sm:$0xe]
        %v1719 = vld [vmem:[%s721 + $0x48] sm:$0xe]
        %v1720 = vld [vmem:[%s721 + $0x54] sm:$0xe]
        %v1721 = vld [vmem:[%s721 + $0x60] sm:$0xe]
        %v1722 = vld [vmem:[%s721 + $0x6c] sm:$0xe]
        %v1723 = vld [vmem:[%s721 + $0x78] sm:$0xe]
        %v1724 = vld [vmem:[%s721 + $0x84] sm:$0xe]
        %v1725 = vld [vmem:[%s721 + $0x90] sm:$0xe]
        %v1726 = vld [vmem:[%s721 + $0x9c] sm:$0xe]
        %v1727 = vld [vmem:[%s721 + $0xa8] sm:$0xe]
        %v1728 = vld [vmem:[%s721 + $0xb4] sm:$0xe]
        %vm1761 = vcmask 1042432
        %vm1762 = vcmask 1046532
        %vm1763 = vmor %vm1761, %vm1762
        %v1764 = vrot.slane %v1713, 5
        %v1765 = vrot.slane %v1764, 4
        %v1766 = vrot.slane %v723, 5
        %v1767 = vsel %vm1763, %v1765, %v1766
        %v1768 = vrot.slane %v1766, 4
        %v1769 = vrot.slane %v755, 5
        %v1770 = vsel %vm1763, %v1768, %v1769
        %v1771 = vrot.slane %v1714, 5
        %v1772 = vrot.slane %v1771, 4
        %v1773 = vrot.slane %v725, 5
        %v1774 = vsel %vm1763, %v1772, %v1773
        %v1775 = vrot.slane %v1773, 4
        %v1776 = vrot.slane %v756, 5
        %v1777 = vsel %vm1763, %v1775, %v1776
        %v1778 = vrot.slane %v1715, 5
        %v1779 = vrot.slane %v1778, 4
        %v1780 = vrot.slane %v727, 5
        %v1781 = vsel %vm1763, %v1779, %v1780
        %v1782 = vrot.slane %v1780, 4
        %v1783 = vrot.slane %v757, 5
        %v1784 = vsel %vm1763, %v1782, %v1783
        %v1785 = vrot.slane %v1716, 5
        %v1786 = vrot.slane %v1785, 4
        %v1787 = vrot.slane %v729, 5
        %v1788 = vsel %vm1763, %v1786, %v1787
        %v1789 = vrot.slane %v1787, 4
        %v1790 = vrot.slane %v758, 5
        %v1791 = vsel %vm1763, %v1789, %v1790
        %v1792 = vrot.slane %v1717, 5
        %v1793 = vrot.slane %v1792, 4
        %v1794 = vrot.slane %v731, 5
        %v1795 = vsel %vm1763, %v1793, %v1794
        %v1796 = vrot.slane %v1794, 4
        %v1797 = vrot.slane %v759, 5
        %v1798 = vsel %vm1763, %v1796, %v1797
        %v1799 = vrot.slane %v1718, 5
        %v1800 = vrot.slane %v1799, 4
        %v1801 = vrot.slane %v733, 5
        %v1802 = vsel %vm1763, %v1800, %v1801
        %v1803 = vrot.slane %v1801, 4
        %v1804 = vrot.slane %v760, 5
        %v1805 = vsel %vm1763, %v1803, %v1804
        %v1806 = vrot.slane %v1719, 5
        %v1807 = vrot.slane %v1806, 4
        %v1808 = vrot.slane %v735, 5
        %v1809 = vsel %vm1763, %v1807, %v1808
        %v1810 = vrot.slane %v1808, 4
        %v1811 = vrot.slane %v761, 5
        %v1812 = vsel %vm1763, %v1810, %v1811
        %v1813 = vrot.slane %v1720, 5
        %v1814 = vrot.slane %v1813, 4
        %v1815 = vrot.slane %v737, 5
        %v1816 = vsel %vm1763, %v1814, %v1815
        %v1817 = vrot.slane %v1815, 4
        %v1818 = vrot.slane %v762, 5
        %v1819 = vsel %vm1763, %v1817, %v1818
        %v1820 = vrot.slane %v1721, 5
        %v1821 = vrot.slane %v1820, 4
        %v1822 = vrot.slane %v739, 5
        %v1823 = vsel %vm1763, %v1821, %v1822
        %v1824 = vrot.slane %v1822, 4
        %v1825 = vrot.slane %v763, 5
        %v1826 = vsel %vm1763, %v1824, %v1825
        %v1827 = vrot.slane %v1722, 5
        %v1828 = vrot.slane %v1827, 4
        %v1829 = vrot.slane %v741, 5
        %v1830 = vsel %vm1763, %v1828, %v1829
        %v1831 = vrot.slane %v1829, 4
        %v1832 = vrot.slane %v764, 5
        %v1833 = vsel %vm1763, %v1831, %v1832
        %v1834 = vrot.slane %v1723, 5
        %v1835 = vrot.slane %v1834, 4
        %v1836 = vrot.slane %v743, 5
        %v1837 = vsel %vm1763, %v1835, %v1836
        %v1838 = vrot.slane %v1836, 4
        %v1839 = vrot.slane %v765, 5
        %v1840 = vsel %vm1763, %v1838, %v1839
        %v1841 = vrot.slane %v1724, 5
        %v1842 = vrot.slane %v1841, 4
        %v1843 = vrot.slane %v745, 5
        %v1844 = vsel %vm1763, %v1842, %v1843
        %v1845 = vrot.slane %v1843, 4
        %v1846 = vrot.slane %v766, 5
        %v1847 = vsel %vm1763, %v1845, %v1846
        %v1848 = vrot.slane %v1725, 5
        %v1849 = vrot.slane %v1848, 4
        %v1850 = vrot.slane %v747, 5
        %v1851 = vsel %vm1763, %v1849, %v1850
        %v1852 = vrot.slane %v1850, 4
        %v1853 = vrot.slane %v767, 5
        %v1854 = vsel %vm1763, %v1852, %v1853
        %v1855 = vrot.slane %v1726, 5
        %v1856 = vrot.slane %v1855, 4
        %v1857 = vrot.slane %v749, 5
        %v1858 = vsel %vm1763, %v1856, %v1857
        %v1859 = vrot.slane %v1857, 4
        %v1860 = vrot.slane %v768, 5
        %v1861 = vsel %vm1763, %v1859, %v1860
        %v1862 = vrot.slane %v1727, 5
        %v1863 = vrot.slane %v1862, 4
        %v1864 = vrot.slane %v751, 5
        %v1865 = vsel %vm1763, %v1863, %v1864
        %v1866 = vrot.slane %v1864, 4
        %v1867 = vrot.slane %v769, 5
        %v1868 = vsel %vm1763, %v1866, %v1867
        %v1869 = vrot.slane %v1728, 5
        %v1870 = vrot.slane %v1869, 4
        %v1871 = vrot.slane %v753, 5
        %v1872 = vsel %vm1763, %v1870, %v1871
        %v1873 = vrot.slane %v1871, 4
        %v1874 = vrot.slane %v770, 5
        %v1875 = vsel %vm1763, %v1873, %v1874
        %v1876 = vld [vmem:[%s1 + $0x8] sm:$0xf]
        %v1877 = vunpack.c.l.b16 %v1767
        %v1878 = vunpack.c.l.b16 %v1770
        %v1879 = vunpack.c.l.b16 %v1774
        %v1880 = vunpack.c.l.b16 %v1777
        %v1881 = vunpack.c.l.b16 %v1781
        %v1882 = vunpack.c.l.b16 %v1784
        %v1883 = vunpack.c.l.b16 %v1788
        %v1884 = vunpack.c.l.b16 %v1791
        %v1885 = vunpack.c.l.b16 %v1795
        %v1886 = vunpack.c.l.b16 %v1798
        %v1887 = vunpack.c.l.b16 %v1802
        %v1888 = vunpack.c.l.b16 %v1805
        %v1889 = vunpack.c.l.b16 %v1809
        %v1890 = vunpack.c.l.b16 %v1812
        %v1891 = vunpack.c.l.b16 %v1816
        %v1892 = vunpack.c.l.b16 %v1819
        %v1893 = vunpack.c.l.b16 %v1823
        %v1894 = vunpack.c.l.b16 %v1826
        %v1895 = vunpack.c.l.b16 %v1830
        %v1896 = vunpack.c.l.b16 %v1833
        %v1897 = vunpack.c.l.b16 %v1837
        %v1898 = vunpack.c.l.b16 %v1840
        %v1899 = vunpack.c.l.b16 %v1844
        %v1900 = vunpack.c.l.b16 %v1847
        %v1901 = vunpack.c.l.b16 %v1851
        %v1902 = vunpack.c.l.b16 %v1854
        %v1903 = vunpack.c.l.b16 %v1858
        %v1904 = vunpack.c.l.b16 %v1861
        %v1905 = vunpack.c.l.b16 %v1865
        %v1906 = vunpack.c.l.b16 %v1868
        %v1907 = vunpack.c.l.b16 %v1872
        %v1908 = vunpack.c.l.b16 %v1875
        %v1909 = vpack.c.b16 %v1878, %v1877
        %v1910 = vpack.c.b16 %v1880, %v1879
        %v1911 = vpack.c.b16 %v1882, %v1881
        %v1912 = vpack.c.b16 %v1884, %v1883
        %v1913 = vpack.c.b16 %v1886, %v1885
        %v1914 = vpack.c.b16 %v1888, %v1887
        %v1915 = vpack.c.b16 %v1890, %v1889
        %v1916 = vpack.c.b16 %v1892, %v1891
        %v1917 = vpack.c.b16 %v1894, %v1893
        %v1918 = vpack.c.b16 %v1896, %v1895
        %v1919 = vpack.c.b16 %v1898, %v1897
        %v1920 = vpack.c.b16 %v1900, %v1899
        %v1921 = vpack.c.b16 %v1902, %v1901
        %v1922 = vpack.c.b16 %v1904, %v1903
        %v1923 = vpack.c.b16 %v1906, %v1905
        %v1924 = vpack.c.b16 %v1908, %v1907
        %v1926 = vsel %vm1207, %v1909, 0
        %v1929 = vsel %vm1207, %v1910, 0
        %v1932 = vsel %vm1207, %v1911, 0
        %v1935 = vsel %vm1207, %v1912, 0
        %v1938 = vsel %vm1207, %v1913, 0
        %v1941 = vsel %vm1207, %v1914, 0
        %v1944 = vsel %vm1207, %v1915, 0
        %v1947 = vsel %vm1207, %v1916, 0
        %v1950 = vsel %vm1207, %v1917, 0
        %v1953 = vsel %vm1207, %v1918, 0
        %v1956 = vsel %vm1207, %v1919, 0
        %v1959 = vsel %vm1207, %v1920, 0
        %v1962 = vsel %vm1207, %v1921, 0
        %v1965 = vsel %vm1207, %v1922, 0
        %v1968 = vsel %vm1207, %v1923, 0
        %v1971 = vsel %vm1207, %v1924, 0
        %v1974 = vsel %vm1256, %v1876, 0
        %1976 = vmatprep.subr.bf16.mxu0 0
        %1977 = vmatpush1.bf16.msra.mxu0 %v1974
        %1978 = vmatprep.subr.bf16.mxu0 0
        %1979 = vmatpush1.bf16.msra.mxu0 0
        %1980 = vmatprep.subr.bf16.mxu0 0
        %1981 = vmatpush1.bf16.msra.mxu0 0
        %1982 = vmatprep.subr.bf16.mxu0 0
        %1983 = vmatpush1.bf16.msra.mxu0 0
        %1984 = vmatprep.subr.bf16.mxu0 0
        %1985 = vmatpush1.bf16.msra.mxu0 0
        %1986 = vmatprep.subr.bf16.mxu0 0
        %1987 = vmatpush1.bf16.msra.mxu0 0
        %1988 = vmatprep.subr.bf16.mxu0 0
        %1989 = vmatpush1.bf16.msra.mxu0 0
        %1990 = vmatprep.subr.bf16.mxu0 0
        %1991 = vmatpush1.bf16.msra.mxu0 0
        %1992 = vmatprep.subr.bf16.mxu0 0
        %1993 = vmatpush1.bf16.msra.mxu0 0
        %1994 = vmatprep.subr.bf16.mxu0 0
        %1995 = vmatpush1.bf16.msra.mxu0 0
        %1996 = vmatprep.subr.bf16.mxu0 0
        %1997 = vmatpush1.bf16.msra.mxu0 0
        %1998 = vmatprep.subr.bf16.mxu0 0
        %1999 = vmatpush1.bf16.msra.mxu0 0
        %2000 = vmatprep.subr.bf16.mxu0 0
        %2001 = vmatpush1.bf16.msra.mxu0 0
        %2002 = vmatprep.subr.bf16.mxu0 0
        %2003 = vmatpush1.bf16.msra.mxu0 0
        %2004 = vmatprep.subr.bf16.mxu0 0
        %2005 = vmatpush1.bf16.msra.mxu0 0
        %2006 = vmatprep.subr.bf16.mxu0 0
        %2007 = vmatpush1.bf16.msra.mxu0 0
        %2008 = vmatprep.mubr.bf16.mxu0 0
        %2009 = vmatmul.mubr.bf16.gmra.mrb[0].mxu0 %v1926
        %v2010 = vpop.f32.mrb[0].mxu0
        %v2011 = vadd.f32 0.0, %v2010
        %v2012 = vpop.f32.mrb[0].mxu0
        %v2013 = vpop.f32.mrb[0].mxu0
        %v2014 = vadd.f32 0.0, %v2013
        %v2015 = vpop.f32.mrb[0].mxu0
        %2016 = vmatprep.mubr.bf16.mxu0 0
        %2017 = vmatmul.mubr.bf16.gmra.mrb[0].mxu0 %v1929
        %v2018 = vpop.f32.mrb[0].mxu0
        %v2019 = vadd.f32 0.0, %v2018
        %v2020 = vpop.f32.mrb[0].mxu0
        %v2021 = vpop.f32.mrb[0].mxu0
        %v2022 = vadd.f32 0.0, %v2021
        %v2023 = vpop.f32.mrb[0].mxu0
        %2024 = vmatprep.mubr.bf16.mxu0 0
        %2025 = vmatmul.mubr.bf16.gmra.mrb[0].mxu0 %v1932
        %v2026 = vpop.f32.mrb[0].mxu0
        %v2027 = vadd.f32 0.0, %v2026
        %v2028 = vpop.f32.mrb[0].mxu0
        %v2029 = vpop.f32.mrb[0].mxu0
        %v2030 = vadd.f32 0.0, %v2029
        %v2031 = vpop.f32.mrb[0].mxu0
        %2032 = vmatprep.mubr.bf16.mxu0 0
        %2033 = vmatmul.mubr.bf16.gmra.mrb[0].mxu0 %v1935
        %v2034 = vpop.f32.mrb[0].mxu0
        %v2035 = vadd.f32 0.0, %v2034
        %v2036 = vpop.f32.mrb[0].mxu0
        %v2037 = vpop.f32.mrb[0].mxu0
        %v2038 = vadd.f32 0.0, %v2037
        %v2039 = vpop.f32.mrb[0].mxu0
        %2040 = vmatprep.mubr.bf16.mxu0 0
        %2041 = vmatmul.mubr.bf16.gmra.mrb[0].mxu0 %v1938
        %v2042 = vpop.f32.mrb[0].mxu0
        %v2043 = vadd.f32 0.0, %v2042
        %v2044 = vpop.f32.mrb[0].mxu0
        %v2045 = vpop.f32.mrb[0].mxu0
        %v2046 = vadd.f32 0.0, %v2045
        %v2047 = vpop.f32.mrb[0].mxu0
        %2048 = vmatprep.mubr.bf16.mxu0 0
        %2049 = vmatmul.mubr.bf16.gmra.mrb[0].mxu0 %v1941
        %v2050 = vpop.f32.mrb[0].mxu0
        %v2051 = vadd.f32 0.0, %v2050
        %v2052 = vpop.f32.mrb[0].mxu0
        %v2053 = vpop.f32.mrb[0].mxu0
        %v2054 = vadd.f32 0.0, %v2053
        %v2055 = vpop.f32.mrb[0].mxu0
        %2056 = vmatprep.mubr.bf16.mxu0 0
        %2057 = vmatmul.mubr.bf16.gmra.mrb[0].mxu0 %v1944
        %v2058 = vpop.f32.mrb[0].mxu0
        %v2059 = vadd.f32 0.0, %v2058
        %v2060 = vpop.f32.mrb[0].mxu0
        %v2061 = vpop.f32.mrb[0].mxu0
        %v2062 = vadd.f32 0.0, %v2061
        %v2063 = vpop.f32.mrb[0].mxu0
        %2064 = vmatprep.mubr.bf16.mxu0 0
        %2065 = vmatmul.mubr.bf16.gmra.mrb[0].mxu0 %v1947
        %v2066 = vpop.f32.mrb[0].mxu0
        %v2067 = vadd.f32 0.0, %v2066
        %v2068 = vpop.f32.mrb[0].mxu0
        %v2069 = vpop.f32.mrb[0].mxu0
        %v2070 = vadd.f32 0.0, %v2069
        %v2071 = vpop.f32.mrb[0].mxu0
        %2072 = vmatprep.mubr.bf16.mxu0 0
        %2073 = vmatmul.mubr.bf16.gmra.mrb[0].mxu0 %v1950
        %v2074 = vpop.f32.mrb[0].mxu0
        %v2075 = vadd.f32 0.0, %v2074
        %v2076 = vpop.f32.mrb[0].mxu0
        %v2077 = vpop.f32.mrb[0].mxu0
        %v2078 = vadd.f32 0.0, %v2077
        %v2079 = vpop.f32.mrb[0].mxu0
        %2080 = vmatprep.mubr.bf16.mxu0 0
        %2081 = vmatmul.mubr.bf16.gmra.mrb[0].mxu0 %v1953
        %v2082 = vpop.f32.mrb[0].mxu0
        %v2083 = vadd.f32 0.0, %v2082
        %v2084 = vpop.f32.mrb[0].mxu0
        %v2085 = vpop.f32.mrb[0].mxu0
        %v2086 = vadd.f32 0.0, %v2085
        %v2087 = vpop.f32.mrb[0].mxu0
        %2088 = vmatprep.mubr.bf16.mxu0 0
        %2089 = vmatmul.mubr.bf16.gmra.mrb[0].mxu0 %v1956
        %v2090 = vpop.f32.mrb[0].mxu0
        %v2091 = vadd.f32 0.0, %v2090
        %v2092 = vpop.f32.mrb[0].mxu0
        %v2093 = vpop.f32.mrb[0].mxu0
        %v2094 = vadd.f32 0.0, %v2093
        %v2095 = vpop.f32.mrb[0].mxu0
        %2096 = vmatprep.mubr.bf16.mxu0 0
        %2097 = vmatmul.mubr.bf16.gmra.mrb[0].mxu0 %v1959
        %v2098 = vpop.f32.mrb[0].mxu0
        %v2099 = vadd.f32 0.0, %v2098
        %v2100 = vpop.f32.mrb[0].mxu0
        %v2101 = vpop.f32.mrb[0].mxu0
        %v2102 = vadd.f32 0.0, %v2101
        %v2103 = vpop.f32.mrb[0].mxu0
        %2104 = vmatprep.mubr.bf16.mxu0 0
        %2105 = vmatmul.mubr.bf16.gmra.mrb[0].mxu0 %v1962
        %v2106 = vpop.f32.mrb[0].mxu0
        %v2107 = vadd.f32 0.0, %v2106
        %v2108 = vpop.f32.mrb[0].mxu0
        %v2109 = vpop.f32.mrb[0].mxu0
        %v2110 = vadd.f32 0.0, %v2109
        %v2111 = vpop.f32.mrb[0].mxu0
        %2112 = vmatprep.mubr.bf16.mxu0 0
        %2113 = vmatmul.mubr.bf16.gmra.mrb[0].mxu0 %v1965
        %v2114 = vpop.f32.mrb[0].mxu0
        %v2115 = vadd.f32 0.0, %v2114
        %v2116 = vpop.f32.mrb[0].mxu0
        %v2117 = vpop.f32.mrb[0].mxu0
        %v2118 = vadd.f32 0.0, %v2117
        %v2119 = vpop.f32.mrb[0].mxu0
        %2120 = vmatprep.mubr.bf16.mxu0 0
        %2121 = vmatmul.mubr.bf16.gmra.mrb[0].mxu0 %v1968
        %v2122 = vpop.f32.mrb[0].mxu0
        %v2123 = vadd.f32 0.0, %v2122
        %v2124 = vpop.f32.mrb[0].mxu0
        %v2125 = vpop.f32.mrb[0].mxu0
        %v2126 = vadd.f32 0.0, %v2125
        %v2127 = vpop.f32.mrb[0].mxu0
        %2128 = vmatprep.mubr.bf16.mxu0 0
        %2129 = vmatmul.mubr.bf16.gmra.mrb[0].mxu0 %v1971
        %v2130 = vpop.f32.mrb[0].mxu0
        %v2131 = vadd.f32 0.0, %v2130
        %v2132 = vpop.f32.mrb[0].mxu0
        %v2133 = vpop.f32.mrb[0].mxu0
        %v2134 = vadd.f32 0.0, %v2133
        %v2135 = vpop.f32.mrb[0].mxu0
        %2136 = vdwg.mxu0
        %v2137 = vadd.f32 %v1587, %v2011
        %v2138 = vadd.f32 %v1590, %v2014
        %v2139 = vadd.f32 %v1595, %v2019
        %v2140 = vadd.f32 %v1598, %v2022
        %v2141 = vadd.f32 %v1603, %v2027
        %v2142 = vadd.f32 %v1606, %v2030
        %v2143 = vadd.f32 %v1611, %v2035
        %v2144 = vadd.f32 %v1614, %v2038
        %v2145 = vadd.f32 %v1619, %v2043
        %v2146 = vadd.f32 %v1622, %v2046
        %v2147 = vadd.f32 %v1627, %v2051
        %v2148 = vadd.f32 %v1630, %v2054
        %v2149 = vadd.f32 %v1635, %v2059
        %v2150 = vadd.f32 %v1638, %v2062
        %v2151 = vadd.f32 %v1643, %v2067
        %v2152 = vadd.f32 %v1646, %v2070
        %v2153 = vadd.f32 %v1651, %v2075
        %v2154 = vadd.f32 %v1654, %v2078
        %v2155 = vadd.f32 %v1659, %v2083
        %v2156 = vadd.f32 %v1662, %v2086
        %v2157 = vadd.f32 %v1667, %v2091
        %v2158 = vadd.f32 %v1670, %v2094
        %v2159 = vadd.f32 %v1675, %v2099
        %v2160 = vadd.f32 %v1678, %v2102
        %v2161 = vadd.f32 %v1683, %v2107
        %v2162 = vadd.f32 %v1686, %v2110
        %v2163 = vadd.f32 %v1691, %v2115
        %v2164 = vadd.f32 %v1694, %v2118
        %v2165 = vadd.f32 %v1699, %v2123
        %v2166 = vadd.f32 %v1702, %v2126
        %v2167 = vadd.f32 %v1707, %v2131
        %v2168 = vadd.f32 %v1710, %v2134
        %s2169 = sadd.s32 %s718, 1
        %s2170 = smul.u32 %s2169, 3
        %s2171 = smul.addr %s2170, 4
        %s2172 = scalar_lea.vmem [#allocation2], %s2171
        %v2173 = vld [vmem:[%s2172] sm:$0xf]
        %v2174 = vld [vmem:[%s2172 + $0x4] sm:$0xf]
        %v2175 = vld [vmem:[%s2172 + $0xc] sm:$0xf]
        %v2176 = vld [vmem:[%s2172 + $0x10] sm:$0xf]
        %v2177 = vld [vmem:[%s2172 + $0x18] sm:$0xf]
        %v2178 = vld [vmem:[%s2172 + $0x1c] sm:$0xf]
        %v2179 = vld [vmem:[%s2172 + $0x24] sm:$0xf]
        %v2180 = vld [vmem:[%s2172 + $0x28] sm:$0xf]
        %v2181 = vld [vmem:[%s2172 + $0x30] sm:$0xf]
        %v2182 = vld [vmem:[%s2172 + $0x34] sm:$0xf]
        %v2183 = vld [vmem:[%s2172 + $0x3c] sm:$0xf]
        %v2184 = vld [vmem:[%s2172 + $0x40] sm:$0xf]
        %v2185 = vld [vmem:[%s2172 + $0x48] sm:$0xf]
        %v2186 = vld [vmem:[%s2172 + $0x4c] sm:$0xf]
        %v2187 = vld [vmem:[%s2172 + $0x54] sm:$0xf]
        %v2188 = vld [vmem:[%s2172 + $0x58] sm:$0xf]
        %v2189 = vld [vmem:[%s2172 + $0x60] sm:$0xf]
        %v2190 = vld [vmem:[%s2172 + $0x64] sm:$0xf]
        %v2191 = vld [vmem:[%s2172 + $0x6c] sm:$0xf]
        %v2192 = vld [vmem:[%s2172 + $0x70] sm:$0xf]
        %v2193 = vld [vmem:[%s2172 + $0x78] sm:$0xf]
        %v2194 = vld [vmem:[%s2172 + $0x7c] sm:$0xf]
        %v2195 = vld [vmem:[%s2172 + $0x84] sm:$0xf]
        %v2196 = vld [vmem:[%s2172 + $0x88] sm:$0xf]
        %v2197 = vld [vmem:[%s2172 + $0x90] sm:$0xf]
        %v2198 = vld [vmem:[%s2172 + $0x94] sm:$0xf]
        %v2199 = vld [vmem:[%s2172 + $0x9c] sm:$0xf]
        %v2200 = vld [vmem:[%s2172 + $0xa0] sm:$0xf]
        %v2201 = vld [vmem:[%s2172 + $0xa8] sm:$0xf]
        %v2202 = vld [vmem:[%s2172 + $0xac] sm:$0xf]
        %v2203 = vld [vmem:[%s2172 + $0xb4] sm:$0xf]
        %v2204 = vld [vmem:[%s2172 + $0xb8] sm:$0xf]
        %v2205 = vld [vmem:[%s1 + $0xc] sm:$0xf]
        %v2238 = vunpack.c.l.b16 %v2173
        %v2239 = vunpack.c.l.b16 %v2174
        %v2240 = vunpack.c.l.b16 %v2175
        %v2241 = vunpack.c.l.b16 %v2176
        %v2242 = vunpack.c.l.b16 %v2177
        %v2243 = vunpack.c.l.b16 %v2178
        %v2244 = vunpack.c.l.b16 %v2179
        %v2245 = vunpack.c.l.b16 %v2180
        %v2246 = vunpack.c.l.b16 %v2181
        %v2247 = vunpack.c.l.b16 %v2182
        %v2248 = vunpack.c.l.b16 %v2183
        %v2249 = vunpack.c.l.b16 %v2184
        %v2250 = vunpack.c.l.b16 %v2185
        %v2251 = vunpack.c.l.b16 %v2186
        %v2252 = vunpack.c.l.b16 %v2187
        %v2253 = vunpack.c.l.b16 %v2188
        %v2254 = vunpack.c.l.b16 %v2189
        %v2255 = vunpack.c.l.b16 %v2190
        %v2256 = vunpack.c.l.b16 %v2191
        %v2257 = vunpack.c.l.b16 %v2192
        %v2258 = vunpack.c.l.b16 %v2193
        %v2259 = vunpack.c.l.b16 %v2194
        %v2260 = vunpack.c.l.b16 %v2195
        %v2261 = vunpack.c.l.b16 %v2196
        %v2262 = vunpack.c.l.b16 %v2197
        %v2263 = vunpack.c.l.b16 %v2198
        %v2264 = vunpack.c.l.b16 %v2199
        %v2265 = vunpack.c.l.b16 %v2200
        %v2266 = vunpack.c.l.b16 %v2201
        %v2267 = vunpack.c.l.b16 %v2202
        %v2268 = vunpack.c.l.b16 %v2203
        %v2269 = vunpack.c.l.b16 %v2204
        %v2270 = vpack.c.b16 %v2239, %v2238
        %v2271 = vpack.c.b16 %v2241, %v2240
        %v2272 = vpack.c.b16 %v2243, %v2242
        %v2273 = vpack.c.b16 %v2245, %v2244
        %v2274 = vpack.c.b16 %v2247, %v2246
        %v2275 = vpack.c.b16 %v2249, %v2248
        %v2276 = vpack.c.b16 %v2251, %v2250
        %v2277 = vpack.c.b16 %v2253, %v2252
        %v2278 = vpack.c.b16 %v2255, %v2254
        %v2279 = vpack.c.b16 %v2257, %v2256
        %v2280 = vpack.c.b16 %v2259, %v2258
        %v2281 = vpack.c.b16 %v2261, %v2260
        %v2282 = vpack.c.b16 %v2263, %v2262
        %v2283 = vpack.c.b16 %v2265, %v2264
        %v2284 = vpack.c.b16 %v2267, %v2266
        %v2285 = vpack.c.b16 %v2269, %v2268
        %v2287 = vsel %vm1207, %v2270, 0
        %v2290 = vsel %vm1207, %v2271, 0
        %v2293 = vsel %vm1207, %v2272, 0
        %v2296 = vsel %vm1207, %v2273, 0
        %v2299 = vsel %vm1207, %v2274, 0
        %v2302 = vsel %vm1207, %v2275, 0
        %v2305 = vsel %vm1207, %v2276, 0
        %v2308 = vsel %vm1207, %v2277, 0
        %v2311 = vsel %vm1207, %v2278, 0
        %v2314 = vsel %vm1207, %v2279, 0
        %v2317 = vsel %vm1207, %v2280, 0
        %v2320 = vsel %vm1207, %v2281, 0
        %v2323 = vsel %vm1207, %v2282, 0
        %v2326 = vsel %vm1207, %v2283, 0
        %v2329 = vsel %vm1207, %v2284, 0
        %v2332 = vsel %vm1207, %v2285, 0
        %v2335 = vsel %vm1256, %v2205, 0
        %2337 = vmatprep.subr.bf16.mxu0 0
        %2338 = vmatpush1.bf16.msra.mxu0 %v2335
        %2339 = vmatprep.subr.bf16.mxu0 0
        %2340 = vmatpush1.bf16.msra.mxu0 0
        %2341 = vmatprep.subr.bf16.mxu0 0
        %2342 = vmatpush1.bf16.msra.mxu0 0
        %2343 = vmatprep.subr.bf16.mxu0 0
        %2344 = vmatpush1.bf16.msra.mxu0 0
        %2345 = vmatprep.subr.bf16.mxu0 0
        %2346 = vmatpush1.bf16.msra.mxu0 0
        %2347 = vmatprep.subr.bf16.mxu0 0
        %2348 = vmatpush1.bf16.msra.mxu0 0
        %2349 = vmatprep.subr.bf16.mxu0 0
        %2350 = vmatpush1.bf16.msra.mxu0 0
        %2351 = vmatprep.subr.bf16.mxu0 0
        %2352 = vmatpush1.bf16.msra.mxu0 0
        %2353 = vmatprep.subr.bf16.mxu0 0
        %2354 = vmatpush1.bf16.msra.mxu0 0
        %2355 = vmatprep.subr.bf16.mxu0 0
        %2356 = vmatpush1.bf16.msra.mxu0 0
        %2357 = vmatprep.subr.bf16.mxu0 0
        %2358 = vmatpush1.bf16.msra.mxu0 0
        %2359 = vmatprep.subr.bf16.mxu0 0
        %2360 = vmatpush1.bf16.msra.mxu0 0
        %2361 = vmatprep.subr.bf16.mxu0 0
        %2362 = vmatpush1.bf16.msra.mxu0 0
        %2363 = vmatprep.subr.bf16.mxu0 0
        %2364 = vmatpush1.bf16.msra.mxu0 0
        %2365 = vmatprep.subr.bf16.mxu0 0
        %2366 = vmatpush1.bf16.msra.mxu0 0
        %2367 = vmatprep.subr.bf16.mxu0 0
        %2368 = vmatpush1.bf16.msra.mxu0 0
        %2369 = vmatprep.mubr.bf16.mxu0 0
        %2370 = vmatmul.mubr.bf16.gmra.mrb[0].mxu0 %v2287
        %v2371 = vpop.f32.mrb[0].mxu0
        %v2372 = vadd.f32 0.0, %v2371
        %v2373 = vpop.f32.mrb[0].mxu0
        %v2374 = vpop.f32.mrb[0].mxu0
        %v2375 = vadd.f32 0.0, %v2374
        %v2376 = vpop.f32.mrb[0].mxu0
        %2377 = vmatprep.mubr.bf16.mxu0 0
        %2378 = vmatmul.mubr.bf16.gmra.mrb[0].mxu0 %v2290
        %v2379 = vpop.f32.mrb[0].mxu0
        %v2380 = vadd.f32 0.0, %v2379
        %v2381 = vpop.f32.mrb[0].mxu0
        %v2382 = vpop.f32.mrb[0].mxu0
        %v2383 = vadd.f32 0.0, %v2382
        %v2384 = vpop.f32.mrb[0].mxu0
        %2385 = vmatprep.mubr.bf16.mxu0 0
        %2386 = vmatmul.mubr.bf16.gmra.mrb[0].mxu0 %v2293
        %v2387 = vpop.f32.mrb[0].mxu0
        %v2388 = vadd.f32 0.0, %v2387
        %v2389 = vpop.f32.mrb[0].mxu0
        %v2390 = vpop.f32.mrb[0].mxu0
        %v2391 = vadd.f32 0.0, %v2390
        %v2392 = vpop.f32.mrb[0].mxu0
        %2393 = vmatprep.mubr.bf16.mxu0 0
        %2394 = vmatmul.mubr.bf16.gmra.mrb[0].mxu0 %v2296
        %v2395 = vpop.f32.mrb[0].mxu0
        %v2396 = vadd.f32 0.0, %v2395
        %v2397 = vpop.f32.mrb[0].mxu0
        %v2398 = vpop.f32.mrb[0].mxu0
        %v2399 = vadd.f32 0.0, %v2398
        %v2400 = vpop.f32.mrb[0].mxu0
        %2401 = vmatprep.mubr.bf16.mxu0 0
        %2402 = vmatmul.mubr.bf16.gmra.mrb[0].mxu0 %v2299
        %v2403 = vpop.f32.mrb[0].mxu0
        %v2404 = vadd.f32 0.0, %v2403
        %v2405 = vpop.f32.mrb[0].mxu0
        %v2406 = vpop.f32.mrb[0].mxu0
        %v2407 = vadd.f32 0.0, %v2406
        %v2408 = vpop.f32.mrb[0].mxu0
        %2409 = vmatprep.mubr.bf16.mxu0 0
        %2410 = vmatmul.mubr.bf16.gmra.mrb[0].mxu0 %v2302
        %v2411 = vpop.f32.mrb[0].mxu0
        %v2412 = vadd.f32 0.0, %v2411
        %v2413 = vpop.f32.mrb[0].mxu0
        %v2414 = vpop.f32.mrb[0].mxu0
        %v2415 = vadd.f32 0.0, %v2414
        %v2416 = vpop.f32.mrb[0].mxu0
        %2417 = vmatprep.mubr.bf16.mxu0 0
        %2418 = vmatmul.mubr.bf16.gmra.mrb[0].mxu0 %v2305
        %v2419 = vpop.f32.mrb[0].mxu0
        %v2420 = vadd.f32 0.0, %v2419
        %v2421 = vpop.f32.mrb[0].mxu0
        %v2422 = vpop.f32.mrb[0].mxu0
        %v2423 = vadd.f32 0.0, %v2422
        %v2424 = vpop.f32.mrb[0].mxu0
        %2425 = vmatprep.mubr.bf16.mxu0 0
        %2426 = vmatmul.mubr.bf16.gmra.mrb[0].mxu0 %v2308
        %v2427 = vpop.f32.mrb[0].mxu0
        %v2428 = vadd.f32 0.0, %v2427
        %v2429 = vpop.f32.mrb[0].mxu0
        %v2430 = vpop.f32.mrb[0].mxu0
        %v2431 = vadd.f32 0.0, %v2430
        %v2432 = vpop.f32.mrb[0].mxu0
        %2433 = vmatprep.mubr.bf16.mxu0 0
        %2434 = vmatmul.mubr.bf16.gmra.mrb[0].mxu0 %v2311
        %v2435 = vpop.f32.mrb[0].mxu0
        %v2436 = vadd.f32 0.0, %v2435
        %v2437 = vpop.f32.mrb[0].mxu0
        %v2438 = vpop.f32.mrb[0].mxu0
        %v2439 = vadd.f32 0.0, %v2438
        %v2440 = vpop.f32.mrb[0].mxu0
        %2441 = vmatprep.mubr.bf16.mxu0 0
        %2442 = vmatmul.mubr.bf16.gmra.mrb[0].mxu0 %v2314
        %v2443 = vpop.f32.mrb[0].mxu0
        %v2444 = vadd.f32 0.0, %v2443
        %v2445 = vpop.f32.mrb[0].mxu0
        %v2446 = vpop.f32.mrb[0].mxu0
        %v2447 = vadd.f32 0.0, %v2446
        %v2448 = vpop.f32.mrb[0].mxu0
        %2449 = vmatprep.mubr.bf16.mxu0 0
        %2450 = vmatmul.mubr.bf16.gmra.mrb[0].mxu0 %v2317
        %v2451 = vpop.f32.mrb[0].mxu0
        %v2452 = vadd.f32 0.0, %v2451
        %v2453 = vpop.f32.mrb[0].mxu0
        %v2454 = vpop.f32.mrb[0].mxu0
        %v2455 = vadd.f32 0.0, %v2454
        %v2456 = vpop.f32.mrb[0].mxu0
        %2457 = vmatprep.mubr.bf16.mxu0 0
        %2458 = vmatmul.mubr.bf16.gmra.mrb[0].mxu0 %v2320
        %v2459 = vpop.f32.mrb[0].mxu0
        %v2460 = vadd.f32 0.0, %v2459
        %v2461 = vpop.f32.mrb[0].mxu0
        %v2462 = vpop.f32.mrb[0].mxu0
        %v2463 = vadd.f32 0.0, %v2462
        %v2464 = vpop.f32.mrb[0].mxu0
        %2465 = vmatprep.mubr.bf16.mxu0 0
        %2466 = vmatmul.mubr.bf16.gmra.mrb[0].mxu0 %v2323
        %v2467 = vpop.f32.mrb[0].mxu0
        %v2468 = vadd.f32 0.0, %v2467
        %v2469 = vpop.f32.mrb[0].mxu0
        %v2470 = vpop.f32.mrb[0].mxu0
        %v2471 = vadd.f32 0.0, %v2470
        %v2472 = vpop.f32.mrb[0].mxu0
        %2473 = vmatprep.mubr.bf16.mxu0 0
        %2474 = vmatmul.mubr.bf16.gmra.mrb[0].mxu0 %v2326
        %v2475 = vpop.f32.mrb[0].mxu0
        %v2476 = vadd.f32 0.0, %v2475
        %v2477 = vpop.f32.mrb[0].mxu0
        %v2478 = vpop.f32.mrb[0].mxu0
        %v2479 = vadd.f32 0.0, %v2478
        %v2480 = vpop.f32.mrb[0].mxu0
        %2481 = vmatprep.mubr.bf16.mxu0 0
        %2482 = vmatmul.mubr.bf16.gmra.mrb[0].mxu0 %v2329
        %v2483 = vpop.f32.mrb[0].mxu0
        %v2484 = vadd.f32 0.0, %v2483
        %v2485 = vpop.f32.mrb[0].mxu0
        %v2486 = vpop.f32.mrb[0].mxu0
        %v2487 = vadd.f32 0.0, %v2486
        %v2488 = vpop.f32.mrb[0].mxu0
        %2489 = vmatprep.mubr.bf16.mxu0 0
        %2490 = vmatmul.mubr.bf16.gmra.mrb[0].mxu0 %v2332
        %v2491 = vpop.f32.mrb[0].mxu0
        %v2492 = vadd.f32 0.0, %v2491
        %v2493 = vpop.f32.mrb[0].mxu0
        %v2494 = vpop.f32.mrb[0].mxu0
        %v2495 = vadd.f32 0.0, %v2494
        %v2496 = vpop.f32.mrb[0].mxu0
        %2497 = vdwg.mxu0
        %v2498 = vadd.f32 %v2137, %v2372
        %v2499 = vadd.f32 %v2138, %v2375
        %v2500 = vadd.f32 %v2139, %v2380
        %v2501 = vadd.f32 %v2140, %v2383
        %v2502 = vadd.f32 %v2141, %v2388
        %v2503 = vadd.f32 %v2142, %v2391
        %v2504 = vadd.f32 %v2143, %v2396
        %v2505 = vadd.f32 %v2144, %v2399
        %v2506 = vadd.f32 %v2145, %v2404
        %v2507 = vadd.f32 %v2146, %v2407
        %v2508 = vadd.f32 %v2147, %v2412
        %v2509 = vadd.f32 %v2148, %v2415
        %v2510 = vadd.f32 %v2149, %v2420
        %v2511 = vadd.f32 %v2150, %v2423
        %v2512 = vadd.f32 %v2151, %v2428
        %v2513 = vadd.f32 %v2152, %v2431
        %v2514 = vadd.f32 %v2153, %v2436
        %v2515 = vadd.f32 %v2154, %v2439
        %v2516 = vadd.f32 %v2155, %v2444
        %v2517 = vadd.f32 %v2156, %v2447
        %v2518 = vadd.f32 %v2157, %v2452
        %v2519 = vadd.f32 %v2158, %v2455
        %v2520 = vadd.f32 %v2159, %v2460
        %v2521 = vadd.f32 %v2160, %v2463
        %v2522 = vadd.f32 %v2161, %v2468
        %v2523 = vadd.f32 %v2162, %v2471
        %v2524 = vadd.f32 %v2163, %v2476
        %v2525 = vadd.f32 %v2164, %v2479
        %v2526 = vadd.f32 %v2165, %v2484
        %v2527 = vadd.f32 %v2166, %v2487
        %v2528 = vadd.f32 %v2167, %v2492
        %v2529 = vadd.f32 %v2168, %v2495
        %v2530 = vld [vmem:[%s2172] sm:$0xf]
        %v2531 = vld [vmem:[%s2172 + $0x4] sm:$0xf]
        %v2532 = vld [vmem:[%s2172 + $0x8] sm:$0x1]
        %v2533 = vld [vmem:[%s2172 + $0xc] sm:$0xf]
        %v2534 = vld [vmem:[%s2172 + $0x10] sm:$0xf]
        %v2535 = vld [vmem:[%s2172 + $0x14] sm:$0x1]
        %v2536 = vld [vmem:[%s2172 + $0x18] sm:$0xf]
        %v2537 = vld [vmem:[%s2172 + $0x1c] sm:$0xf]
        %v2538 = vld [vmem:[%s2172 + $0x20] sm:$0x1]
        %v2539 = vld [vmem:[%s2172 + $0x24] sm:$0xf]
        %v2540 = vld [vmem:[%s2172 + $0x28] sm:$0xf]
        %v2541 = vld [vmem:[%s2172 + $0x2c] sm:$0x1]
        %v2542 = vld [vmem:[%s2172 + $0x30] sm:$0xf]
        %v2543 = vld [vmem:[%s2172 + $0x34] sm:$0xf]
        %v2544 = vld [vmem:[%s2172 + $0x38] sm:$0x1]
        %v2545 = vld [vmem:[%s2172 + $0x3c] sm:$0xf]
        %v2546 = vld [vmem:[%s2172 + $0x40] sm:$0xf]
        %v2547 = vld [vmem:[%s2172 + $0x44] sm:$0x1]
        %v2548 = vld [vmem:[%s2172 + $0x48] sm:$0xf]
        %v2549 = vld [vmem:[%s2172 + $0x4c] sm:$0xf]
        %v2550 = vld [vmem:[%s2172 + $0x50] sm:$0x1]
        %v2551 = vld [vmem:[%s2172 + $0x54] sm:$0xf]
        %v2552 = vld [vmem:[%s2172 + $0x58] sm:$0xf]
        %v2553 = vld [vmem:[%s2172 + $0x5c] sm:$0x1]
        %v2554 = vld [vmem:[%s2172 + $0x60] sm:$0xf]
        %v2555 = vld [vmem:[%s2172 + $0x64] sm:$0xf]
        %v2556 = vld [vmem:[%s2172 + $0x68] sm:$0x1]
        %v2557 = vld [vmem:[%s2172 + $0x6c] sm:$0xf]
        %v2558 = vld [vmem:[%s2172 + $0x70] sm:$0xf]
        %v2559 = vld [vmem:[%s2172 + $0x74] sm:$0x1]
        %v2560 = vld [vmem:[%s2172 + $0x78] sm:$0xf]
        %v2561 = vld [vmem:[%s2172 + $0x7c] sm:$0xf]
        %v2562 = vld [vmem:[%s2172 + $0x80] sm:$0x1]
        %v2563 = vld [vmem:[%s2172 + $0x84] sm:$0xf]
        %v2564 = vld [vmem:[%s2172 + $0x88] sm:$0xf]
        %v2565 = vld [vmem:[%s2172 + $0x8c] sm:$0x1]
        %v2566 = vld [vmem:[%s2172 + $0x90] sm:$0xf]
        %v2567 = vld [vmem:[%s2172 + $0x94] sm:$0xf]
        %v2568 = vld [vmem:[%s2172 + $0x98] sm:$0x1]
        %v2569 = vld [vmem:[%s2172 + $0x9c] sm:$0xf]
        %v2570 = vld [vmem:[%s2172 + $0xa0] sm:$0xf]
        %v2571 = vld [vmem:[%s2172 + $0xa4] sm:$0x1]
        %v2572 = vld [vmem:[%s2172 + $0xa8] sm:$0xf]
        %v2573 = vld [vmem:[%s2172 + $0xac] sm:$0xf]
        %v2574 = vld [vmem:[%s2172 + $0xb0] sm:$0x1]
        %v2575 = vld [vmem:[%s2172 + $0xb4] sm:$0xf]
        %v2576 = vld [vmem:[%s2172 + $0xb8] sm:$0xf]
        %v2577 = vld [vmem:[%s2172 + $0xbc] sm:$0x1]
        %v2579 = vshrl.u32 %v2530, 16
        %v2581 = vrot.slane %v2579, 4
        %v2582 = vshll.u32 %v2530, 16
        %v2584 = vrot.slane %v2582, 5
        %v2585 = vor.u32 %v2581, %v2584
        %v2586 = vrot.slane %v2585, 4
        %v2588 = vshll.u32 %v2531, 16
        %v2590 = vrot.slane %v2588, 5
        %v2591 = vsel %vm773, %v2586, %v2590
        %v2592 = vshrl.u32 %v2531, 16
        %v2594 = vrot.slane %v2592, 4
        %v2595 = vor.u32 %v2594, %v2590
        %v2596 = vrot.slane %v2595, 4
        %v2598 = vshll.u32 %v2532, 16
        %v2600 = vrot.slane %v2598, 5
        %v2601 = vsel %vm773, %v2596, %v2600
        %v2603 = vshrl.u32 %v2533, 16
        %v2605 = vrot.slane %v2603, 4
        %v2606 = vshll.u32 %v2533, 16
        %v2608 = vrot.slane %v2606, 5
        %v2609 = vor.u32 %v2605, %v2608
        %v2610 = vrot.slane %v2609, 4
        %v2612 = vshll.u32 %v2534, 16
        %v2614 = vrot.slane %v2612, 5
        %v2615 = vsel %vm773, %v2610, %v2614
        %v2616 = vshrl.u32 %v2534, 16
        %v2618 = vrot.slane %v2616, 4
        %v2619 = vor.u32 %v2618, %v2614
        %v2620 = vrot.slane %v2619, 4
        %v2622 = vshll.u32 %v2535, 16
        %v2624 = vrot.slane %v2622, 5
        %v2625 = vsel %vm773, %v2620, %v2624
        %v2627 = vshrl.u32 %v2536, 16
        %v2629 = vrot.slane %v2627, 4
        %v2630 = vshll.u32 %v2536, 16
        %v2632 = vrot.slane %v2630, 5
        %v2633 = vor.u32 %v2629, %v2632
        %v2634 = vrot.slane %v2633, 4
        %v2636 = vshll.u32 %v2537, 16
        %v2638 = vrot.slane %v2636, 5
        %v2639 = vsel %vm773, %v2634, %v2638
        %v2640 = vshrl.u32 %v2537, 16
        %v2642 = vrot.slane %v2640, 4
        %v2643 = vor.u32 %v2642, %v2638
        %v2644 = vrot.slane %v2643, 4
        %v2646 = vshll.u32 %v2538, 16
        %v2648 = vrot.slane %v2646, 5
        %v2649 = vsel %vm773, %v2644, %v2648
        %v2651 = vshrl.u32 %v2539, 16
        %v2653 = vrot.slane %v2651, 4
        %v2654 = vshll.u32 %v2539, 16
        %v2656 = vrot.slane %v2654, 5
        %v2657 = vor.u32 %v2653, %v2656
        %v2658 = vrot.slane %v2657, 4
        %v2660 = vshll.u32 %v2540, 16
        %v2662 = vrot.slane %v2660, 5
        %v2663 = vsel %vm773, %v2658, %v2662
        %v2664 = vshrl.u32 %v2540, 16
        %v2666 = vrot.slane %v2664, 4
        %v2667 = vor.u32 %v2666, %v2662
        %v2668 = vrot.slane %v2667, 4
        %v2670 = vshll.u32 %v2541, 16
        %v2672 = vrot.slane %v2670, 5
        %v2673 = vsel %vm773, %v2668, %v2672
        %v2675 = vshrl.u32 %v2542, 16
        %v2677 = vrot.slane %v2675, 4
        %v2678 = vshll.u32 %v2542, 16
        %v2680 = vrot.slane %v2678, 5
        %v2681 = vor.u32 %v2677, %v2680
        %v2682 = vrot.slane %v2681, 4
        %v2684 = vshll.u32 %v2543, 16
        %v2686 = vrot.slane %v2684, 5
        %v2687 = vsel %vm773, %v2682, %v2686
        %v2688 = vshrl.u32 %v2543, 16
        %v2690 = vrot.slane %v2688, 4
        %v2691 = vor.u32 %v2690, %v2686
        %v2692 = vrot.slane %v2691, 4
        %v2694 = vshll.u32 %v2544, 16
        %v2696 = vrot.slane %v2694, 5
        %v2697 = vsel %vm773, %v2692, %v2696
        %v2699 = vshrl.u32 %v2545, 16
        %v2701 = vrot.slane %v2699, 4
        %v2702 = vshll.u32 %v2545, 16
        %v2704 = vrot.slane %v2702, 5
        %v2705 = vor.u32 %v2701, %v2704
        %v2706 = vrot.slane %v2705, 4
        %v2708 = vshll.u32 %v2546, 16
        %v2710 = vrot.slane %v2708, 5
        %v2711 = vsel %vm773, %v2706, %v2710
        %v2712 = vshrl.u32 %v2546, 16
        %v2714 = vrot.slane %v2712, 4
        %v2715 = vor.u32 %v2714, %v2710
        %v2716 = vrot.slane %v2715, 4
        %v2718 = vshll.u32 %v2547, 16
        %v2720 = vrot.slane %v2718, 5
        %v2721 = vsel %vm773, %v2716, %v2720
        %v2723 = vshrl.u32 %v2548, 16
        %v2725 = vrot.slane %v2723, 4
        %v2726 = vshll.u32 %v2548, 16
        %v2728 = vrot.slane %v2726, 5
        %v2729 = vor.u32 %v2725, %v2728
        %v2730 = vrot.slane %v2729, 4
        %v2732 = vshll.u32 %v2549, 16
        %v2734 = vrot.slane %v2732, 5
        %v2735 = vsel %vm773, %v2730, %v2734
        %v2736 = vshrl.u32 %v2549, 16
        %v2738 = vrot.slane %v2736, 4
        %v2739 = vor.u32 %v2738, %v2734
        %v2740 = vrot.slane %v2739, 4
        %v2742 = vshll.u32 %v2550, 16
        %v2744 = vrot.slane %v2742, 5
        %v2745 = vsel %vm773, %v2740, %v2744
        %v2747 = vshrl.u32 %v2551, 16
        %v2749 = vrot.slane %v2747, 4
        %v2750 = vshll.u32 %v2551, 16
        %v2752 = vrot.slane %v2750, 5
        %v2753 = vor.u32 %v2749, %v2752
        %v2754 = vrot.slane %v2753, 4
        %v2756 = vshll.u32 %v2552, 16
        %v2758 = vrot.slane %v2756, 5
        %v2759 = vsel %vm773, %v2754, %v2758
        %v2760 = vshrl.u32 %v2552, 16
        %v2762 = vrot.slane %v2760, 4
        %v2763 = vor.u32 %v2762, %v2758
        %v2764 = vrot.slane %v2763, 4
        %v2766 = vshll.u32 %v2553, 16
        %v2768 = vrot.slane %v2766, 5
        %v2769 = vsel %vm773, %v2764, %v2768
        %v2771 = vshrl.u32 %v2554, 16
        %v2773 = vrot.slane %v2771, 4
        %v2774 = vshll.u32 %v2554, 16
        %v2776 = vrot.slane %v2774, 5
        %v2777 = vor.u32 %v2773, %v2776
        %v2778 = vrot.slane %v2777, 4
        %v2780 = vshll.u32 %v2555, 16
        %v2782 = vrot.slane %v2780, 5
        %v2783 = vsel %vm773, %v2778, %v2782
        %v2784 = vshrl.u32 %v2555, 16
        %v2786 = vrot.slane %v2784, 4
        %v2787 = vor.u32 %v2786, %v2782
        %v2788 = vrot.slane %v2787, 4
        %v2790 = vshll.u32 %v2556, 16
        %v2792 = vrot.slane %v2790, 5
        %v2793 = vsel %vm773, %v2788, %v2792
        %v2795 = vshrl.u32 %v2557, 16
        %v2797 = vrot.slane %v2795, 4
        %v2798 = vshll.u32 %v2557, 16
        %v2800 = vrot.slane %v2798, 5
        %v2801 = vor.u32 %v2797, %v2800
        %v2802 = vrot.slane %v2801, 4
        %v2804 = vshll.u32 %v2558, 16
        %v2806 = vrot.slane %v2804, 5
        %v2807 = vsel %vm773, %v2802, %v2806
        %v2808 = vshrl.u32 %v2558, 16
        %v2810 = vrot.slane %v2808, 4
        %v2811 = vor.u32 %v2810, %v2806
        %v2812 = vrot.slane %v2811, 4
        %v2814 = vshll.u32 %v2559, 16
        %v2816 = vrot.slane %v2814, 5
        %v2817 = vsel %vm773, %v2812, %v2816
        %v2819 = vshrl.u32 %v2560, 16
        %v2821 = vrot.slane %v2819, 4
        %v2822 = vshll.u32 %v2560, 16
        %v2824 = vrot.slane %v2822, 5
        %v2825 = vor.u32 %v2821, %v2824
        %v2826 = vrot.slane %v2825, 4
        %v2828 = vshll.u32 %v2561, 16
        %v2830 = vrot.slane %v2828, 5
        %v2831 = vsel %vm773, %v2826, %v2830
        %v2832 = vshrl.u32 %v2561, 16
        %v2834 = vrot.slane %v2832, 4
        %v2835 = vor.u32 %v2834, %v2830
        %v2836 = vrot.slane %v2835, 4
        %v2838 = vshll.u32 %v2562, 16
        %v2840 = vrot.slane %v2838, 5
        %v2841 = vsel %vm773, %v2836, %v2840
        %v2843 = vshrl.u32 %v2563, 16
        %v2845 = vrot.slane %v2843, 4
        %v2846 = vshll.u32 %v2563, 16
        %v2848 = vrot.slane %v2846, 5
        %v2849 = vor.u32 %v2845, %v2848
        %v2850 = vrot.slane %v2849, 4
        %v2852 = vshll.u32 %v2564, 16
        %v2854 = vrot.slane %v2852, 5
        %v2855 = vsel %vm773, %v2850, %v2854
        %v2856 = vshrl.u32 %v2564, 16
        %v2858 = vrot.slane %v2856, 4
        %v2859 = vor.u32 %v2858, %v2854
        %v2860 = vrot.slane %v2859, 4
        %v2862 = vshll.u32 %v2565, 16
        %v2864 = vrot.slane %v2862, 5
        %v2865 = vsel %vm773, %v2860, %v2864
        %v2867 = vshrl.u32 %v2566, 16
        %v2869 = vrot.slane %v2867, 4
        %v2870 = vshll.u32 %v2566, 16
        %v2872 = vrot.slane %v2870, 5
        %v2873 = vor.u32 %v2869, %v2872
        %v2874 = vrot.slane %v2873, 4
        %v2876 = vshll.u32 %v2567, 16
        %v2878 = vrot.slane %v2876, 5
        %v2879 = vsel %vm773, %v2874, %v2878
        %v2880 = vshrl.u32 %v2567, 16
        %v2882 = vrot.slane %v2880, 4
        %v2883 = vor.u32 %v2882, %v2878
        %v2884 = vrot.slane %v2883, 4
        %v2886 = vshll.u32 %v2568, 16
        %v2888 = vrot.slane %v2886, 5
        %v2889 = vsel %vm773, %v2884, %v2888
        %v2891 = vshrl.u32 %v2569, 16
        %v2893 = vrot.slane %v2891, 4
        %v2894 = vshll.u32 %v2569, 16
        %v2896 = vrot.slane %v2894, 5
        %v2897 = vor.u32 %v2893, %v2896
        %v2898 = vrot.slane %v2897, 4
        %v2900 = vshll.u32 %v2570, 16
        %v2902 = vrot.slane %v2900, 5
        %v2903 = vsel %vm773, %v2898, %v2902
        %v2904 = vshrl.u32 %v2570, 16
        %v2906 = vrot.slane %v2904, 4
        %v2907 = vor.u32 %v2906, %v2902
        %v2908 = vrot.slane %v2907, 4
        %v2910 = vshll.u32 %v2571, 16
        %v2912 = vrot.slane %v2910, 5
        %v2913 = vsel %vm773, %v2908, %v2912
        %v2915 = vshrl.u32 %v2572, 16
        %v2917 = vrot.slane %v2915, 4
        %v2918 = vshll.u32 %v2572, 16
        %v2920 = vrot.slane %v2918, 5
        %v2921 = vor.u32 %v2917, %v2920
        %v2922 = vrot.slane %v2921, 4
        %v2924 = vshll.u32 %v2573, 16
        %v2926 = vrot.slane %v2924, 5
        %v2927 = vsel %vm773, %v2922, %v2926
        %v2928 = vshrl.u32 %v2573, 16
        %v2930 = vrot.slane %v2928, 4
        %v2931 = vor.u32 %v2930, %v2926
        %v2932 = vrot.slane %v2931, 4
        %v2934 = vshll.u32 %v2574, 16
        %v2936 = vrot.slane %v2934, 5
        %v2937 = vsel %vm773, %v2932, %v2936
        %v2939 = vshrl.u32 %v2575, 16
        %v2941 = vrot.slane %v2939, 4
        %v2942 = vshll.u32 %v2575, 16
        %v2944 = vrot.slane %v2942, 5
        %v2945 = vor.u32 %v2941, %v2944
        %v2946 = vrot.slane %v2945, 4
        %v2948 = vshll.u32 %v2576, 16
        %v2950 = vrot.slane %v2948, 5
        %v2951 = vsel %vm773, %v2946, %v2950
        %v2952 = vshrl.u32 %v2576, 16
        %v2954 = vrot.slane %v2952, 4
        %v2955 = vor.u32 %v2954, %v2950
        %v2956 = vrot.slane %v2955, 4
        %v2958 = vshll.u32 %v2577, 16
        %v2960 = vrot.slane %v2958, 5
        %v2961 = vsel %vm773, %v2956, %v2960
        %v2962 = vld [vmem:[%s1 + $0x10] sm:$0xf]
        %v2963 = vunpack.c.l.b16 %v2591
        %v2964 = vunpack.c.l.b16 %v2601
        %v2965 = vunpack.c.l.b16 %v2615
        %v2966 = vunpack.c.l.b16 %v2625
        %v2967 = vunpack.c.l.b16 %v2639
        %v2968 = vunpack.c.l.b16 %v2649
        %v2969 = vunpack.c.l.b16 %v2663
        %v2970 = vunpack.c.l.b16 %v2673
        %v2971 = vunpack.c.l.b16 %v2687
        %v2972 = vunpack.c.l.b16 %v2697
        %v2973 = vunpack.c.l.b16 %v2711
        %v2974 = vunpack.c.l.b16 %v2721
        %v2975 = vunpack.c.l.b16 %v2735
        %v2976 = vunpack.c.l.b16 %v2745
        %v2977 = vunpack.c.l.b16 %v2759
        %v2978 = vunpack.c.l.b16 %v2769
        %v2979 = vunpack.c.l.b16 %v2783
        %v2980 = vunpack.c.l.b16 %v2793
        %v2981 = vunpack.c.l.b16 %v2807
        %v2982 = vunpack.c.l.b16 %v2817
        %v2983 = vunpack.c.l.b16 %v2831
        %v2984 = vunpack.c.l.b16 %v2841
        %v2985 = vunpack.c.l.b16 %v2855
        %v2986 = vunpack.c.l.b16 %v2865
        %v2987 = vunpack.c.l.b16 %v2879
        %v2988 = vunpack.c.l.b16 %v2889
        %v2989 = vunpack.c.l.b16 %v2903
        %v2990 = vunpack.c.l.b16 %v2913
        %v2991 = vunpack.c.l.b16 %v2927
        %v2992 = vunpack.c.l.b16 %v2937
        %v2993 = vunpack.c.l.b16 %v2951
        %v2994 = vunpack.c.l.b16 %v2961
        %v2995 = vpack.c.b16 %v2964, %v2963
        %v2996 = vpack.c.b16 %v2966, %v2965
        %v2997 = vpack.c.b16 %v2968, %v2967
        %v2998 = vpack.c.b16 %v2970, %v2969
        %v2999 = vpack.c.b16 %v2972, %v2971
        %v3000 = vpack.c.b16 %v2974, %v2973
        %v3001 = vpack.c.b16 %v2976, %v2975
        %v3002 = vpack.c.b16 %v2978, %v2977
        %v3003 = vpack.c.b16 %v2980, %v2979
        %v3004 = vpack.c.b16 %v2982, %v2981
        %v3005 = vpack.c.b16 %v2984, %v2983
        %v3006 = vpack.c.b16 %v2986, %v2985
        %v3007 = vpack.c.b16 %v2988, %v2987
        %v3008 = vpack.c.b16 %v2990, %v2989
        %v3009 = vpack.c.b16 %v2992, %v2991
        %v3010 = vpack.c.b16 %v2994, %v2993
        %v3012 = vsel %vm1207, %v2995, 0
        %v3015 = vsel %vm1207, %v2996, 0
        %v3018 = vsel %vm1207, %v2997, 0
        %v3021 = vsel %vm1207, %v2998, 0
        %v3024 = vsel %vm1207, %v2999, 0
        %v3027 = vsel %vm1207, %v3000, 0
        %v3030 = vsel %vm1207, %v3001, 0
        %v3033 = vsel %vm1207, %v3002, 0
        %v3036 = vsel %vm1207, %v3003, 0
        %v3039 = vsel %vm1207, %v3004, 0
        %v3042 = vsel %vm1207, %v3005, 0
        %v3045 = vsel %vm1207, %v3006, 0
        %v3048 = vsel %vm1207, %v3007, 0
        %v3051 = vsel %vm1207, %v3008, 0
        %v3054 = vsel %vm1207, %v3009, 0
        %v3057 = vsel %vm1207, %v3010, 0
        %v3060 = vsel %vm1256, %v2962, 0
        %3062 = vmatprep.subr.bf16.mxu0 0
        %3063 = vmatpush1.bf16.msra.mxu0 %v3060
        %3064 = vmatprep.subr.bf16.mxu0 0
        %3065 = vmatpush1.bf16.msra.mxu0 0
        %3066 = vmatprep.subr.bf16.mxu0 0
        %3067 = vmatpush1.bf16.msra.mxu0 0
        %3068 = vmatprep.subr.bf16.mxu0 0
        %3069 = vmatpush1.bf16.msra.mxu0 0
        %3070 = vmatprep.subr.bf16.mxu0 0
        %3071 = vmatpush1.bf16.msra.mxu0 0
        %3072 = vmatprep.subr.bf16.mxu0 0
        %3073 = vmatpush1.bf16.msra.mxu0 0
        %3074 = vmatprep.subr.bf16.mxu0 0
        %3075 = vmatpush1.bf16.msra.mxu0 0
        %3076 = vmatprep.subr.bf16.mxu0 0
        %3077 = vmatpush1.bf16.msra.mxu0 0
        %3078 = vmatprep.subr.bf16.mxu0 0
        %3079 = vmatpush1.bf16.msra.mxu0 0
        %3080 = vmatprep.subr.bf16.mxu0 0
        %3081 = vmatpush1.bf16.msra.mxu0 0
        %3082 = vmatprep.subr.bf16.mxu0 0
        %3083 = vmatpush1.bf16.msra.mxu0 0
        %3084 = vmatprep.subr.bf16.mxu0 0
        %3085 = vmatpush1.bf16.msra.mxu0 0
        %3086 = vmatprep.subr.bf16.mxu0 0
        %3087 = vmatpush1.bf16.msra.mxu0 0
        %3088 = vmatprep.subr.bf16.mxu0 0
        %3089 = vmatpush1.bf16.msra.mxu0 0
        %3090 = vmatprep.subr.bf16.mxu0 0
        %3091 = vmatpush1.bf16.msra.mxu0 0
        %3092 = vmatprep.subr.bf16.mxu0 0
        %3093 = vmatpush1.bf16.msra.mxu0 0
        %3094 = vmatprep.mubr.bf16.mxu0 0
        %3095 = vmatmul.mubr.bf16.gmra.mrb[0].mxu0 %v3012
        %v3096 = vpop.f32.mrb[0].mxu0
        %v3097 = vadd.f32 0.0, %v3096
        %v3098 = vpop.f32.mrb[0].mxu0
        %v3099 = vpop.f32.mrb[0].mxu0
        %v3100 = vadd.f32 0.0, %v3099
        %v3101 = vpop.f32.mrb[0].mxu0
        %3102 = vmatprep.mubr.bf16.mxu0 0
        %3103 = vmatmul.mubr.bf16.gmra.mrb[0].mxu0 %v3015
        %v3104 = vpop.f32.mrb[0].mxu0
        %v3105 = vadd.f32 0.0, %v3104
        %v3106 = vpop.f32.mrb[0].mxu0
        %v3107 = vpop.f32.mrb[0].mxu0
        %v3108 = vadd.f32 0.0, %v3107
        %v3109 = vpop.f32.mrb[0].mxu0
        %3110 = vmatprep.mubr.bf16.mxu0 0
        %3111 = vmatmul.mubr.bf16.gmra.mrb[0].mxu0 %v3018
        %v3112 = vpop.f32.mrb[0].mxu0
        %v3113 = vadd.f32 0.0, %v3112
        %v3114 = vpop.f32.mrb[0].mxu0
        %v3115 = vpop.f32.mrb[0].mxu0
        %v3116 = vadd.f32 0.0, %v3115
        %v3117 = vpop.f32.mrb[0].mxu0
        %3118 = vmatprep.mubr.bf16.mxu0 0
        %3119 = vmatmul.mubr.bf16.gmra.mrb[0].mxu0 %v3021
        %v3120 = vpop.f32.mrb[0].mxu0
        %v3121 = vadd.f32 0.0, %v3120
        %v3122 = vpop.f32.mrb[0].mxu0
        %v3123 = vpop.f32.mrb[0].mxu0
        %v3124 = vadd.f32 0.0, %v3123
        %v3125 = vpop.f32.mrb[0].mxu0
        %3126 = vmatprep.mubr.bf16.mxu0 0
        %3127 = vmatmul.mubr.bf16.gmra.mrb[0].mxu0 %v3024
        %v3128 = vpop.f32.mrb[0].mxu0
        %v3129 = vadd.f32 0.0, %v3128
        %v3130 = vpop.f32.mrb[0].mxu0
        %v3131 = vpop.f32.mrb[0].mxu0
        %v3132 = vadd.f32 0.0, %v3131
        %v3133 = vpop.f32.mrb[0].mxu0
        %3134 = vmatprep.mubr.bf16.mxu0 0
        %3135 = vmatmul.mubr.bf16.gmra.mrb[0].mxu0 %v3027
        %v3136 = vpop.f32.mrb[0].mxu0
        %v3137 = vadd.f32 0.0, %v3136
        %v3138 = vpop.f32.mrb[0].mxu0
        %v3139 = vpop.f32.mrb[0].mxu0
        %v3140 = vadd.f32 0.0, %v3139
        %v3141 = vpop.f32.mrb[0].mxu0
        %3142 = vmatprep.mubr.bf16.mxu0 0
        %3143 = vmatmul.mubr.bf16.gmra.mrb[0].mxu0 %v3030
        %v3144 = vpop.f32.mrb[0].mxu0
        %v3145 = vadd.f32 0.0, %v3144
        %v3146 = vpop.f32.mrb[0].mxu0
        %v3147 = vpop.f32.mrb[0].mxu0
        %v3148 = vadd.f32 0.0, %v3147
        %v3149 = vpop.f32.mrb[0].mxu0
        %3150 = vmatprep.mubr.bf16.mxu0 0
        %3151 = vmatmul.mubr.bf16.gmra.mrb[0].mxu0 %v3033
        %v3152 = vpop.f32.mrb[0].mxu0
        %v3153 = vadd.f32 0.0, %v3152
        %v3154 = vpop.f32.mrb[0].mxu0
        %v3155 = vpop.f32.mrb[0].mxu0
        %v3156 = vadd.f32 0.0, %v3155
        %v3157 = vpop.f32.mrb[0].mxu0
        %3158 = vmatprep.mubr.bf16.mxu0 0
        %3159 = vmatmul.mubr.bf16.gmra.mrb[0].mxu0 %v3036
        %v3160 = vpop.f32.mrb[0].mxu0
        %v3161 = vadd.f32 0.0, %v3160
        %v3162 = vpop.f32.mrb[0].mxu0
        %v3163 = vpop.f32.mrb[0].mxu0
        %v3164 = vadd.f32 0.0, %v3163
        %v3165 = vpop.f32.mrb[0].mxu0
        %3166 = vmatprep.mubr.bf16.mxu0 0
        %3167 = vmatmul.mubr.bf16.gmra.mrb[0].mxu0 %v3039
        %v3168 = vpop.f32.mrb[0].mxu0
        %v3169 = vadd.f32 0.0, %v3168
        %v3170 = vpop.f32.mrb[0].mxu0
        %v3171 = vpop.f32.mrb[0].mxu0
        %v3172 = vadd.f32 0.0, %v3171
        %v3173 = vpop.f32.mrb[0].mxu0
        %3174 = vmatprep.mubr.bf16.mxu0 0
        %3175 = vmatmul.mubr.bf16.gmra.mrb[0].mxu0 %v3042
        %v3176 = vpop.f32.mrb[0].mxu0
        %v3177 = vadd.f32 0.0, %v3176
        %v3178 = vpop.f32.mrb[0].mxu0
        %v3179 = vpop.f32.mrb[0].mxu0
        %v3180 = vadd.f32 0.0, %v3179
        %v3181 = vpop.f32.mrb[0].mxu0
        %3182 = vmatprep.mubr.bf16.mxu0 0
        %3183 = vmatmul.mubr.bf16.gmra.mrb[0].mxu0 %v3045
        %v3184 = vpop.f32.mrb[0].mxu0
        %v3185 = vadd.f32 0.0, %v3184
        %v3186 = vpop.f32.mrb[0].mxu0
        %v3187 = vpop.f32.mrb[0].mxu0
        %v3188 = vadd.f32 0.0, %v3187
        %v3189 = vpop.f32.mrb[0].mxu0
        %3190 = vmatprep.mubr.bf16.mxu0 0
        %3191 = vmatmul.mubr.bf16.gmra.mrb[0].mxu0 %v3048
        %v3192 = vpop.f32.mrb[0].mxu0
        %v3193 = vadd.f32 0.0, %v3192
        %v3194 = vpop.f32.mrb[0].mxu0
        %v3195 = vpop.f32.mrb[0].mxu0
        %v3196 = vadd.f32 0.0, %v3195
        %v3197 = vpop.f32.mrb[0].mxu0
        %3198 = vmatprep.mubr.bf16.mxu0 0
        %3199 = vmatmul.mubr.bf16.gmra.mrb[0].mxu0 %v3051
        %v3200 = vpop.f32.mrb[0].mxu0
        %v3201 = vadd.f32 0.0, %v3200
        %v3202 = vpop.f32.mrb[0].mxu0
        %v3203 = vpop.f32.mrb[0].mxu0
        %v3204 = vadd.f32 0.0, %v3203
        %v3205 = vpop.f32.mrb[0].mxu0
        %3206 = vmatprep.mubr.bf16.mxu0 0
        %3207 = vmatmul.mubr.bf16.gmra.mrb[0].mxu0 %v3054
        %v3208 = vpop.f32.mrb[0].mxu0
        %v3209 = vadd.f32 0.0, %v3208
        %v3210 = vpop.f32.mrb[0].mxu0
        %v3211 = vpop.f32.mrb[0].mxu0
        %v3212 = vadd.f32 0.0, %v3211
        %v3213 = vpop.f32.mrb[0].mxu0
        %3214 = vmatprep.mubr.bf16.mxu0 0
        %3215 = vmatmul.mubr.bf16.gmra.mrb[0].mxu0 %v3057
        %v3216 = vpop.f32.mrb[0].mxu0
        %v3217 = vadd.f32 0.0, %v3216
        %v3218 = vpop.f32.mrb[0].mxu0
        %v3219 = vpop.f32.mrb[0].mxu0
        %v3220 = vadd.f32 0.0, %v3219
        %v3221 = vpop.f32.mrb[0].mxu0
        %3222 = vdwg.mxu0
        %v3223 = vadd.f32 %v2498, %v3097
        %v3224 = vadd.f32 %v2499, %v3100
        %v3225 = vadd.f32 %v2500, %v3105
        %v3226 = vadd.f32 %v2501, %v3108
        %v3227 = vadd.f32 %v2502, %v3113
        %v3228 = vadd.f32 %v2503, %v3116
        %v3229 = vadd.f32 %v2504, %v3121
        %v3230 = vadd.f32 %v2505, %v3124
        %v3231 = vadd.f32 %v2506, %v3129
        %v3232 = vadd.f32 %v2507, %v3132
        %v3233 = vadd.f32 %v2508, %v3137
        %v3234 = vadd.f32 %v2509, %v3140
        %v3235 = vadd.f32 %v2510, %v3145
        %v3236 = vadd.f32 %v2511, %v3148
        %v3237 = vadd.f32 %v2512, %v3153
        %v3238 = vadd.f32 %v2513, %v3156
        %v3239 = vadd.f32 %v2514, %v3161
        %v3240 = vadd.f32 %v2515, %v3164
        %v3241 = vadd.f32 %v2516, %v3169
        %v3242 = vadd.f32 %v2517, %v3172
        %v3243 = vadd.f32 %v2518, %v3177
        %v3244 = vadd.f32 %v2519, %v3180
        %v3245 = vadd.f32 %v2520, %v3185
        %v3246 = vadd.f32 %v2521, %v3188
        %v3247 = vadd.f32 %v2522, %v3193
        %v3248 = vadd.f32 %v2523, %v3196
        %v3249 = vadd.f32 %v2524, %v3201
        %v3250 = vadd.f32 %v2525, %v3204
        %v3251 = vadd.f32 %v2526, %v3209
        %v3252 = vadd.f32 %v2527, %v3212
        %v3253 = vadd.f32 %v2528, %v3217
        %v3254 = vadd.f32 %v2529, %v3220
        %v3255 = vld [vmem:[%s2172] sm:$0xe]
        %v3256 = vld [vmem:[%s2172 + $0xc] sm:$0xe]
        %v3257 = vld [vmem:[%s2172 + $0x18] sm:$0xe]
        %v3258 = vld [vmem:[%s2172 + $0x24] sm:$0xe]
        %v3259 = vld [vmem:[%s2172 + $0x30] sm:$0xe]
        %v3260 = vld [vmem:[%s2172 + $0x3c] sm:$0xe]
        %v3261 = vld [vmem:[%s2172 + $0x48] sm:$0xe]
        %v3262 = vld [vmem:[%s2172 + $0x54] sm:$0xe]
        %v3263 = vld [vmem:[%s2172 + $0x60] sm:$0xe]
        %v3264 = vld [vmem:[%s2172 + $0x6c] sm:$0xe]
        %v3265 = vld [vmem:[%s2172 + $0x78] sm:$0xe]
        %v3266 = vld [vmem:[%s2172 + $0x84] sm:$0xe]
        %v3267 = vld [vmem:[%s2172 + $0x90] sm:$0xe]
        %v3268 = vld [vmem:[%s2172 + $0x9c] sm:$0xe]
        %v3269 = vld [vmem:[%s2172 + $0xa8] sm:$0xe]
        %v3270 = vld [vmem:[%s2172 + $0xb4] sm:$0xe]
        %v3319 = vrot.slane %v3255, 5
        %v3320 = vrot.slane %v3319, 4
        %v3321 = vrot.slane %v2531, 5
        %v3322 = vsel %vm1763, %v3320, %v3321
        %v3323 = vrot.slane %v3321, 4
        %v3324 = vrot.slane %v2532, 5
        %v3325 = vsel %vm1763, %v3323, %v3324
        %v3326 = vrot.slane %v3256, 5
        %v3327 = vrot.slane %v3326, 4
        %v3328 = vrot.slane %v2534, 5
        %v3329 = vsel %vm1763, %v3327, %v3328
        %v3330 = vrot.slane %v3328, 4
        %v3331 = vrot.slane %v2535, 5
        %v3332 = vsel %vm1763, %v3330, %v3331
        %v3333 = vrot.slane %v3257, 5
        %v3334 = vrot.slane %v3333, 4
        %v3335 = vrot.slane %v2537, 5
        %v3336 = vsel %vm1763, %v3334, %v3335
        %v3337 = vrot.slane %v3335, 4
        %v3338 = vrot.slane %v2538, 5
        %v3339 = vsel %vm1763, %v3337, %v3338
        %v3340 = vrot.slane %v3258, 5
        %v3341 = vrot.slane %v3340, 4
        %v3342 = vrot.slane %v2540, 5
        %v3343 = vsel %vm1763, %v3341, %v3342
        %v3344 = vrot.slane %v3342, 4
        %v3345 = vrot.slane %v2541, 5
        %v3346 = vsel %vm1763, %v3344, %v3345
        %v3347 = vrot.slane %v3259, 5
        %v3348 = vrot.slane %v3347, 4
        %v3349 = vrot.slane %v2543, 5
        %v3350 = vsel %vm1763, %v3348, %v3349
        %v3351 = vrot.slane %v3349, 4
        %v3352 = vrot.slane %v2544, 5
        %v3353 = vsel %vm1763, %v3351, %v3352
        %v3354 = vrot.slane %v3260, 5
        %v3355 = vrot.slane %v3354, 4
        %v3356 = vrot.slane %v2546, 5
        %v3357 = vsel %vm1763, %v3355, %v3356
        %v3358 = vrot.slane %v3356, 4
        %v3359 = vrot.slane %v2547, 5
        %v3360 = vsel %vm1763, %v3358, %v3359
        %v3361 = vrot.slane %v3261, 5
        %v3362 = vrot.slane %v3361, 4
        %v3363 = vrot.slane %v2549, 5
        %v3364 = vsel %vm1763, %v3362, %v3363
        %v3365 = vrot.slane %v3363, 4
        %v3366 = vrot.slane %v2550, 5
        %v3367 = vsel %vm1763, %v3365, %v3366
        %v3368 = vrot.slane %v3262, 5
        %v3369 = vrot.slane %v3368, 4
        %v3370 = vrot.slane %v2552, 5
        %v3371 = vsel %vm1763, %v3369, %v3370
        %v3372 = vrot.slane %v3370, 4
        %v3373 = vrot.slane %v2553, 5
        %v3374 = vsel %vm1763, %v3372, %v3373
        %v3375 = vrot.slane %v3263, 5
        %v3376 = vrot.slane %v3375, 4
        %v3377 = vrot.slane %v2555, 5
        %v3378 = vsel %vm1763, %v3376, %v3377
        %v3379 = vrot.slane %v3377, 4
        %v3380 = vrot.slane %v2556, 5
        %v3381 = vsel %vm1763, %v3379, %v3380
        %v3382 = vrot.slane %v3264, 5
        %v3383 = vrot.slane %v3382, 4
        %v3384 = vrot.slane %v2558, 5
        %v3385 = vsel %vm1763, %v3383, %v3384
        %v3386 = vrot.slane %v3384, 4
        %v3387 = vrot.slane %v2559, 5
        %v3388 = vsel %vm1763, %v3386, %v3387
        %v3389 = vrot.slane %v3265, 5
        %v3390 = vrot.slane %v3389, 4
        %v3391 = vrot.slane %v2561, 5
        %v3392 = vsel %vm1763, %v3390, %v3391
        %v3393 = vrot.slane %v3391, 4
        %v3394 = vrot.slane %v2562, 5
        %v3395 = vsel %vm1763, %v3393, %v3394
        %v3396 = vrot.slane %v3266, 5
        %v3397 = vrot.slane %v3396, 4
        %v3398 = vrot.slane %v2564, 5
        %v3399 = vsel %vm1763, %v3397, %v3398
        %v3400 = vrot.slane %v3398, 4
        %v3401 = vrot.slane %v2565, 5
        %v3402 = vsel %vm1763, %v3400, %v3401
        %v3403 = vrot.slane %v3267, 5
        %v3404 = vrot.slane %v3403, 4
        %v3405 = vrot.slane %v2567, 5
        %v3406 = vsel %vm1763, %v3404, %v3405
        %v3407 = vrot.slane %v3405, 4
        %v3408 = vrot.slane %v2568, 5
        %v3409 = vsel %vm1763, %v3407, %v3408
        %v3410 = vrot.slane %v3268, 5
        %v3411 = vrot.slane %v3410, 4
        %v3412 = vrot.slane %v2570, 5
        %v3413 = vsel %vm1763, %v3411, %v3412
        %v3414 = vrot.slane %v3412, 4
        %v3415 = vrot.slane %v2571, 5
        %v3416 = vsel %vm1763, %v3414, %v3415
        %v3417 = vrot.slane %v3269, 5
        %v3418 = vrot.slane %v3417, 4
        %v3419 = vrot.slane %v2573, 5
        %v3420 = vsel %vm1763, %v3418, %v3419
        %v3421 = vrot.slane %v3419, 4
        %v3422 = vrot.slane %v2574, 5
        %v3423 = vsel %vm1763, %v3421, %v3422
        %v3424 = vrot.slane %v3270, 5
        %v3425 = vrot.slane %v3424, 4
        %v3426 = vrot.slane %v2576, 5
        %v3427 = vsel %vm1763, %v3425, %v3426
        %v3428 = vrot.slane %v3426, 4
        %v3429 = vrot.slane %v2577, 5
        %v3430 = vsel %vm1763, %v3428, %v3429
        %v3431 = vld [vmem:[%s1 + $0x14] sm:$0xf]
        %v3432 = vunpack.c.l.b16 %v3322
        %v3433 = vunpack.c.l.b16 %v3325
        %v3434 = vunpack.c.l.b16 %v3329
        %v3435 = vunpack.c.l.b16 %v3332
        %v3436 = vunpack.c.l.b16 %v3336
        %v3437 = vunpack.c.l.b16 %v3339
        %v3438 = vunpack.c.l.b16 %v3343
        %v3439 = vunpack.c.l.b16 %v3346
        %v3440 = vunpack.c.l.b16 %v3350
        %v3441 = vunpack.c.l.b16 %v3353
        %v3442 = vunpack.c.l.b16 %v3357
        %v3443 = vunpack.c.l.b16 %v3360
        %v3444 = vunpack.c.l.b16 %v3364
        %v3445 = vunpack.c.l.b16 %v3367
        %v3446 = vunpack.c.l.b16 %v3371
        %v3447 = vunpack.c.l.b16 %v3374
        %v3448 = vunpack.c.l.b16 %v3378
        %v3449 = vunpack.c.l.b16 %v3381
        %v3450 = vunpack.c.l.b16 %v3385
        %v3451 = vunpack.c.l.b16 %v3388
        %v3452 = vunpack.c.l.b16 %v3392
        %v3453 = vunpack.c.l.b16 %v3395
        %v3454 = vunpack.c.l.b16 %v3399
        %v3455 = vunpack.c.l.b16 %v3402
        %v3456 = vunpack.c.l.b16 %v3406
        %v3457 = vunpack.c.l.b16 %v3409
        %v3458 = vunpack.c.l.b16 %v3413
        %v3459 = vunpack.c.l.b16 %v3416
        %v3460 = vunpack.c.l.b16 %v3420
        %v3461 = vunpack.c.l.b16 %v3423
        %v3462 = vunpack.c.l.b16 %v3427
        %v3463 = vunpack.c.l.b16 %v3430
        %v3464 = vpack.c.b16 %v3433, %v3432
        %v3465 = vpack.c.b16 %v3435, %v3434
        %v3466 = vpack.c.b16 %v3437, %v3436
        %v3467 = vpack.c.b16 %v3439, %v3438
        %v3468 = vpack.c.b16 %v3441, %v3440
        %v3469 = vpack.c.b16 %v3443, %v3442
        %v3470 = vpack.c.b16 %v3445, %v3444
        %v3471 = vpack.c.b16 %v3447, %v3446
        %v3472 = vpack.c.b16 %v3449, %v3448
        %v3473 = vpack.c.b16 %v3451, %v3450
        %v3474 = vpack.c.b16 %v3453, %v3452
        %v3475 = vpack.c.b16 %v3455, %v3454
        %v3476 = vpack.c.b16 %v3457, %v3456
        %v3477 = vpack.c.b16 %v3459, %v3458
        %v3478 = vpack.c.b16 %v3461, %v3460
        %v3479 = vpack.c.b16 %v3463, %v3462
        %v3481 = vsel %vm1207, %v3464, 0
        %v3484 = vsel %vm1207, %v3465, 0
        %v3487 = vsel %vm1207, %v3466, 0
        %v3490 = vsel %vm1207, %v3467, 0
        %v3493 = vsel %vm1207, %v3468, 0
        %v3496 = vsel %vm1207, %v3469, 0
        %v3499 = vsel %vm1207, %v3470, 0
        %v3502 = vsel %vm1207, %v3471, 0
        %v3505 = vsel %vm1207, %v3472, 0
        %v3508 = vsel %vm1207, %v3473, 0
        %v3511 = vsel %vm1207, %v3474, 0
        %v3514 = vsel %vm1207, %v3475, 0
        %v3517 = vsel %vm1207, %v3476, 0
        %v3520 = vsel %vm1207, %v3477, 0
        %v3523 = vsel %vm1207, %v3478, 0
        %v3526 = vsel %vm1207, %v3479, 0
        %v3529 = vsel %vm1256, %v3431, 0
        %3531 = vmatprep.subr.bf16.mxu0 0
        %3532 = vmatpush1.bf16.msra.mxu0 %v3529
        %3533 = vmatprep.subr.bf16.mxu0 0
        %3534 = vmatpush1.bf16.msra.mxu0 0
        %3535 = vmatprep.subr.bf16.mxu0 0
        %3536 = vmatpush1.bf16.msra.mxu0 0
        %3537 = vmatprep.subr.bf16.mxu0 0
        %3538 = vmatpush1.bf16.msra.mxu0 0
        %3539 = vmatprep.subr.bf16.mxu0 0
        %3540 = vmatpush1.bf16.msra.mxu0 0
        %3541 = vmatprep.subr.bf16.mxu0 0
        %3542 = vmatpush1.bf16.msra.mxu0 0
        %3543 = vmatprep.subr.bf16.mxu0 0
        %3544 = vmatpush1.bf16.msra.mxu0 0
        %3545 = vmatprep.subr.bf16.mxu0 0
        %3546 = vmatpush1.bf16.msra.mxu0 0
        %3547 = vmatprep.subr.bf16.mxu0 0
        %3548 = vmatpush1.bf16.msra.mxu0 0
        %3549 = vmatprep.subr.bf16.mxu0 0
        %3550 = vmatpush1.bf16.msra.mxu0 0
        %3551 = vmatprep.subr.bf16.mxu0 0
        %3552 = vmatpush1.bf16.msra.mxu0 0
        %3553 = vmatprep.subr.bf16.mxu0 0
        %3554 = vmatpush1.bf16.msra.mxu0 0
        %3555 = vmatprep.subr.bf16.mxu0 0
        %3556 = vmatpush1.bf16.msra.mxu0 0
        %3557 = vmatprep.subr.bf16.mxu0 0
        %3558 = vmatpush1.bf16.msra.mxu0 0
        %3559 = vmatprep.subr.bf16.mxu0 0
        %3560 = vmatpush1.bf16.msra.mxu0 0
        %3561 = vmatprep.subr.bf16.mxu0 0
        %3562 = vmatpush1.bf16.msra.mxu0 0
        %3563 = vmatprep.mubr.bf16.mxu0 0
        %3564 = vmatmul.mubr.bf16.gmra.mrb[0].mxu0 %v3481
        %v3565 = vpop.f32.mrb[0].mxu0
        %v3566 = vadd.f32 0.0, %v3565
        %v3567 = vpop.f32.mrb[0].mxu0
        %v3568 = vpop.f32.mrb[0].mxu0
        %v3569 = vadd.f32 0.0, %v3568
        %v3570 = vpop.f32.mrb[0].mxu0
        %3571 = vmatprep.mubr.bf16.mxu0 0
        %3572 = vmatmul.mubr.bf16.gmra.mrb[0].mxu0 %v3484
        %v3573 = vpop.f32.mrb[0].mxu0
        %v3574 = vadd.f32 0.0, %v3573
        %v3575 = vpop.f32.mrb[0].mxu0
        %v3576 = vpop.f32.mrb[0].mxu0
        %v3577 = vadd.f32 0.0, %v3576
        %v3578 = vpop.f32.mrb[0].mxu0
        %3579 = vmatprep.mubr.bf16.mxu0 0
        %3580 = vmatmul.mubr.bf16.gmra.mrb[0].mxu0 %v3487
        %v3581 = vpop.f32.mrb[0].mxu0
        %v3582 = vadd.f32 0.0, %v3581
        %v3583 = vpop.f32.mrb[0].mxu0
        %v3584 = vpop.f32.mrb[0].mxu0
        %v3585 = vadd.f32 0.0, %v3584
        %v3586 = vpop.f32.mrb[0].mxu0
        %3587 = vmatprep.mubr.bf16.mxu0 0
        %3588 = vmatmul.mubr.bf16.gmra.mrb[0].mxu0 %v3490
        %v3589 = vpop.f32.mrb[0].mxu0
        %v3590 = vadd.f32 0.0, %v3589
        %v3591 = vpop.f32.mrb[0].mxu0
        %v3592 = vpop.f32.mrb[0].mxu0
        %v3593 = vadd.f32 0.0, %v3592
        %v3594 = vpop.f32.mrb[0].mxu0
        %3595 = vmatprep.mubr.bf16.mxu0 0
        %3596 = vmatmul.mubr.bf16.gmra.mrb[0].mxu0 %v3493
        %v3597 = vpop.f32.mrb[0].mxu0
        %v3598 = vadd.f32 0.0, %v3597
        %v3599 = vpop.f32.mrb[0].mxu0
        %v3600 = vpop.f32.mrb[0].mxu0
        %v3601 = vadd.f32 0.0, %v3600
        %v3602 = vpop.f32.mrb[0].mxu0
        %3603 = vmatprep.mubr.bf16.mxu0 0
        %3604 = vmatmul.mubr.bf16.gmra.mrb[0].mxu0 %v3496
        %v3605 = vpop.f32.mrb[0].mxu0
        %v3606 = vadd.f32 0.0, %v3605
        %v3607 = vpop.f32.mrb[0].mxu0
        %v3608 = vpop.f32.mrb[0].mxu0
        %v3609 = vadd.f32 0.0, %v3608
        %v3610 = vpop.f32.mrb[0].mxu0
        %3611 = vmatprep.mubr.bf16.mxu0 0
        %3612 = vmatmul.mubr.bf16.gmra.mrb[0].mxu0 %v3499
        %v3613 = vpop.f32.mrb[0].mxu0
        %v3614 = vadd.f32 0.0, %v3613
        %v3615 = vpop.f32.mrb[0].mxu0
        %v3616 = vpop.f32.mrb[0].mxu0
        %v3617 = vadd.f32 0.0, %v3616
        %v3618 = vpop.f32.mrb[0].mxu0
        %3619 = vmatprep.mubr.bf16.mxu0 0
        %3620 = vmatmul.mubr.bf16.gmra.mrb[0].mxu0 %v3502
        %v3621 = vpop.f32.mrb[0].mxu0
        %v3622 = vadd.f32 0.0, %v3621
        %v3623 = vpop.f32.mrb[0].mxu0
        %v3624 = vpop.f32.mrb[0].mxu0
        %v3625 = vadd.f32 0.0, %v3624
        %v3626 = vpop.f32.mrb[0].mxu0
        %3627 = vmatprep.mubr.bf16.mxu0 0
        %3628 = vmatmul.mubr.bf16.gmra.mrb[0].mxu0 %v3505
        %v3629 = vpop.f32.mrb[0].mxu0
        %v3630 = vadd.f32 0.0, %v3629
        %v3631 = vpop.f32.mrb[0].mxu0
        %v3632 = vpop.f32.mrb[0].mxu0
        %v3633 = vadd.f32 0.0, %v3632
        %v3634 = vpop.f32.mrb[0].mxu0
        %3635 = vmatprep.mubr.bf16.mxu0 0
        %3636 = vmatmul.mubr.bf16.gmra.mrb[0].mxu0 %v3508
        %v3637 = vpop.f32.mrb[0].mxu0
        %v3638 = vadd.f32 0.0, %v3637
        %v3639 = vpop.f32.mrb[0].mxu0
        %v3640 = vpop.f32.mrb[0].mxu0
        %v3641 = vadd.f32 0.0, %v3640
        %v3642 = vpop.f32.mrb[0].mxu0
        %3643 = vmatprep.mubr.bf16.mxu0 0
        %3644 = vmatmul.mubr.bf16.gmra.mrb[0].mxu0 %v3511
        %v3645 = vpop.f32.mrb[0].mxu0
        %v3646 = vadd.f32 0.0, %v3645
        %v3647 = vpop.f32.mrb[0].mxu0
        %v3648 = vpop.f32.mrb[0].mxu0
        %v3649 = vadd.f32 0.0, %v3648
        %v3650 = vpop.f32.mrb[0].mxu0
        %3651 = vmatprep.mubr.bf16.mxu0 0
        %3652 = vmatmul.mubr.bf16.gmra.mrb[0].mxu0 %v3514
        %v3653 = vpop.f32.mrb[0].mxu0
        %v3654 = vadd.f32 0.0, %v3653
        %v3655 = vpop.f32.mrb[0].mxu0
        %v3656 = vpop.f32.mrb[0].mxu0
        %v3657 = vadd.f32 0.0, %v3656
        %v3658 = vpop.f32.mrb[0].mxu0
        %3659 = vmatprep.mubr.bf16.mxu0 0
        %3660 = vmatmul.mubr.bf16.gmra.mrb[0].mxu0 %v3517
        %v3661 = vpop.f32.mrb[0].mxu0
        %v3662 = vadd.f32 0.0, %v3661
        %v3663 = vpop.f32.mrb[0].mxu0
        %v3664 = vpop.f32.mrb[0].mxu0
        %v3665 = vadd.f32 0.0, %v3664
        %v3666 = vpop.f32.mrb[0].mxu0
        %3667 = vmatprep.mubr.bf16.mxu0 0
        %3668 = vmatmul.mubr.bf16.gmra.mrb[0].mxu0 %v3520
        %v3669 = vpop.f32.mrb[0].mxu0
        %v3670 = vadd.f32 0.0, %v3669
        %v3671 = vpop.f32.mrb[0].mxu0
        %v3672 = vpop.f32.mrb[0].mxu0
        %v3673 = vadd.f32 0.0, %v3672
        %v3674 = vpop.f32.mrb[0].mxu0
        %3675 = vmatprep.mubr.bf16.mxu0 0
        %3676 = vmatmul.mubr.bf16.gmra.mrb[0].mxu0 %v3523
        %v3677 = vpop.f32.mrb[0].mxu0
        %v3678 = vadd.f32 0.0, %v3677
        %v3679 = vpop.f32.mrb[0].mxu0
        %v3680 = vpop.f32.mrb[0].mxu0
        %v3681 = vadd.f32 0.0, %v3680
        %v3682 = vpop.f32.mrb[0].mxu0
        %3683 = vmatprep.mubr.bf16.mxu0 0
        %3684 = vmatmul.mubr.bf16.gmra.mrb[0].mxu0 %v3526
        %v3685 = vpop.f32.mrb[0].mxu0
        %v3686 = vadd.f32 0.0, %v3685
        %v3687 = vpop.f32.mrb[0].mxu0
        %v3688 = vpop.f32.mrb[0].mxu0
        %v3689 = vadd.f32 0.0, %v3688
        %v3690 = vpop.f32.mrb[0].mxu0
        %3691 = vdwg.mxu0
        %v3692 = vadd.f32 %v3223, %v3566
        %v3693 = vadd.f32 %v3224, %v3569
        %v3694 = vadd.f32 %v3225, %v3574
        %v3695 = vadd.f32 %v3226, %v3577
        %v3696 = vadd.f32 %v3227, %v3582
        %v3697 = vadd.f32 %v3228, %v3585
        %v3698 = vadd.f32 %v3229, %v3590
        %v3699 = vadd.f32 %v3230, %v3593
        %v3700 = vadd.f32 %v3231, %v3598
        %v3701 = vadd.f32 %v3232, %v3601
        %v3702 = vadd.f32 %v3233, %v3606
        %v3703 = vadd.f32 %v3234, %v3609
        %v3704 = vadd.f32 %v3235, %v3614
        %v3705 = vadd.f32 %v3236, %v3617
        %v3706 = vadd.f32 %v3237, %v3622
        %v3707 = vadd.f32 %v3238, %v3625
        %v3708 = vadd.f32 %v3239, %v3630
        %v3709 = vadd.f32 %v3240, %v3633
        %v3710 = vadd.f32 %v3241, %v3638
        %v3711 = vadd.f32 %v3242, %v3641
        %v3712 = vadd.f32 %v3243, %v3646
        %v3713 = vadd.f32 %v3244, %v3649
        %v3714 = vadd.f32 %v3245, %v3654
        %v3715 = vadd.f32 %v3246, %v3657
        %v3716 = vadd.f32 %v3247, %v3662
        %v3717 = vadd.f32 %v3248, %v3665
        %v3718 = vadd.f32 %v3249, %v3670
        %v3719 = vadd.f32 %v3250, %v3673
        %v3720 = vadd.f32 %v3251, %v3678
        %v3721 = vadd.f32 %v3252, %v3681
        %v3722 = vadd.f32 %v3253, %v3686
        %v3723 = vadd.f32 %v3254, %v3689
        %s3724 = sadd.s32 %s718, 2
        %s3725 = smul.u32 %s3724, 3
        %s3726 = smul.addr %s3725, 4
        %s3727 = scalar_lea.vmem [#allocation2], %s3726
        %v3728 = vld [vmem:[%s3727] sm:$0xf]
        %v3729 = vld [vmem:[%s3727 + $0x4] sm:$0xf]
        %v3730 = vld [vmem:[%s3727 + $0xc] sm:$0xf]
        %v3731 = vld [vmem:[%s3727 + $0x10] sm:$0xf]
        %v3732 = vld [vmem:[%s3727 + $0x18] sm:$0xf]
        %v3733 = vld [vmem:[%s3727 + $0x1c] sm:$0xf]
        %v3734 = vld [vmem:[%s3727 + $0x24] sm:$0xf]
        %v3735 = vld [vmem:[%s3727 + $0x28] sm:$0xf]
        %v3736 = vld [vmem:[%s3727 + $0x30] sm:$0xf]
        %v3737 = vld [vmem:[%s3727 + $0x34] sm:$0xf]
        %v3738 = vld [vmem:[%s3727 + $0x3c] sm:$0xf]
        %v3739 = vld [vmem:[%s3727 + $0x40] sm:$0xf]
        %v3740 = vld [vmem:[%s3727 + $0x48] sm:$0xf]
        %v3741 = vld [vmem:[%s3727 + $0x4c] sm:$0xf]
        %v3742 = vld [vmem:[%s3727 + $0x54] sm:$0xf]
        %v3743 = vld [vmem:[%s3727 + $0x58] sm:$0xf]
        %v3744 = vld [vmem:[%s3727 + $0x60] sm:$0xf]
        %v3745 = vld [vmem:[%s3727 + $0x64] sm:$0xf]
        %v3746 = vld [vmem:[%s3727 + $0x6c] sm:$0xf]
        %v3747 = vld [vmem:[%s3727 + $0x70] sm:$0xf]
        %v3748 = vld [vmem:[%s3727 + $0x78] sm:$0xf]
        %v3749 = vld [vmem:[%s3727 + $0x7c] sm:$0xf]
        %v3750 = vld [vmem:[%s3727 + $0x84] sm:$0xf]
        %v3751 = vld [vmem:[%s3727 + $0x88] sm:$0xf]
        %v3752 = vld [vmem:[%s3727 + $0x90] sm:$0xf]
        %v3753 = vld [vmem:[%s3727 + $0x94] sm:$0xf]
        %v3754 = vld [vmem:[%s3727 + $0x9c] sm:$0xf]
        %v3755 = vld [vmem:[%s3727 + $0xa0] sm:$0xf]
        %v3756 = vld [vmem:[%s3727 + $0xa8] sm:$0xf]
        %v3757 = vld [vmem:[%s3727 + $0xac] sm:$0xf]
        %v3758 = vld [vmem:[%s3727 + $0xb4] sm:$0xf]
        %v3759 = vld [vmem:[%s3727 + $0xb8] sm:$0xf]
        %v3760 = vld [vmem:[%s1 + $0x18] sm:$0xf]
        %v3793 = vunpack.c.l.b16 %v3728
        %v3794 = vunpack.c.l.b16 %v3729
        %v3795 = vunpack.c.l.b16 %v3730
        %v3796 = vunpack.c.l.b16 %v3731
        %v3797 = vunpack.c.l.b16 %v3732
        %v3798 = vunpack.c.l.b16 %v3733
        %v3799 = vunpack.c.l.b16 %v3734
        %v3800 = vunpack.c.l.b16 %v3735
        %v3801 = vunpack.c.l.b16 %v3736
        %v3802 = vunpack.c.l.b16 %v3737
        %v3803 = vunpack.c.l.b16 %v3738
        %v3804 = vunpack.c.l.b16 %v3739
        %v3805 = vunpack.c.l.b16 %v3740
        %v3806 = vunpack.c.l.b16 %v3741
        %v3807 = vunpack.c.l.b16 %v3742
        %v3808 = vunpack.c.l.b16 %v3743
        %v3809 = vunpack.c.l.b16 %v3744
        %v3810 = vunpack.c.l.b16 %v3745
        %v3811 = vunpack.c.l.b16 %v3746
        %v3812 = vunpack.c.l.b16 %v3747
        %v3813 = vunpack.c.l.b16 %v3748
        %v3814 = vunpack.c.l.b16 %v3749
        %v3815 = vunpack.c.l.b16 %v3750
        %v3816 = vunpack.c.l.b16 %v3751
        %v3817 = vunpack.c.l.b16 %v3752
        %v3818 = vunpack.c.l.b16 %v3753
        %v3819 = vunpack.c.l.b16 %v3754
        %v3820 = vunpack.c.l.b16 %v3755
        %v3821 = vunpack.c.l.b16 %v3756
        %v3822 = vunpack.c.l.b16 %v3757
        %v3823 = vunpack.c.l.b16 %v3758
        %v3824 = vunpack.c.l.b16 %v3759
        %v3825 = vpack.c.b16 %v3794, %v3793
        %v3826 = vpack.c.b16 %v3796, %v3795
        %v3827 = vpack.c.b16 %v3798, %v3797
        %v3828 = vpack.c.b16 %v3800, %v3799
        %v3829 = vpack.c.b16 %v3802, %v3801
        %v3830 = vpack.c.b16 %v3804, %v3803
        %v3831 = vpack.c.b16 %v3806, %v3805
        %v3832 = vpack.c.b16 %v3808, %v3807
        %v3833 = vpack.c.b16 %v3810, %v3809
        %v3834 = vpack.c.b16 %v3812, %v3811
        %v3835 = vpack.c.b16 %v3814, %v3813
        %v3836 = vpack.c.b16 %v3816, %v3815
        %v3837 = vpack.c.b16 %v3818, %v3817
        %v3838 = vpack.c.b16 %v3820, %v3819
        %v3839 = vpack.c.b16 %v3822, %v3821
        %v3840 = vpack.c.b16 %v3824, %v3823
        %v3842 = vsel %vm1207, %v3825, 0
        %v3845 = vsel %vm1207, %v3826, 0
        %v3848 = vsel %vm1207, %v3827, 0
        %v3851 = vsel %vm1207, %v3828, 0
        %v3854 = vsel %vm1207, %v3829, 0
        %v3857 = vsel %vm1207, %v3830, 0
        %v3860 = vsel %vm1207, %v3831, 0
        %v3863 = vsel %vm1207, %v3832, 0
        %v3866 = vsel %vm1207, %v3833, 0
        %v3869 = vsel %vm1207, %v3834, 0
        %v3872 = vsel %vm1207, %v3835, 0
        %v3875 = vsel %vm1207, %v3836, 0
        %v3878 = vsel %vm1207, %v3837, 0
        %v3881 = vsel %vm1207, %v3838, 0
        %v3884 = vsel %vm1207, %v3839, 0
        %v3887 = vsel %vm1207, %v3840, 0
        %v3890 = vsel %vm1256, %v3760, 0
        %3892 = vmatprep.subr.bf16.mxu0 0
        %3893 = vmatpush1.bf16.msra.mxu0 %v3890
        %3894 = vmatprep.subr.bf16.mxu0 0
        %3895 = vmatpush1.bf16.msra.mxu0 0
        %3896 = vmatprep.subr.bf16.mxu0 0
        %3897 = vmatpush1.bf16.msra.mxu0 0
        %3898 = vmatprep.subr.bf16.mxu0 0
        %3899 = vmatpush1.bf16.msra.mxu0 0
        %3900 = vmatprep.subr.bf16.mxu0 0
        %3901 = vmatpush1.bf16.msra.mxu0 0
        %3902 = vmatprep.subr.bf16.mxu0 0
        %3903 = vmatpush1.bf16.msra.mxu0 0
        %3904 = vmatprep.subr.bf16.mxu0 0
        %3905 = vmatpush1.bf16.msra.mxu0 0
        %3906 = vmatprep.subr.bf16.mxu0 0
        %3907 = vmatpush1.bf16.msra.mxu0 0
        %3908 = vmatprep.subr.bf16.mxu0 0
        %3909 = vmatpush1.bf16.msra.mxu0 0
        %3910 = vmatprep.subr.bf16.mxu0 0
        %3911 = vmatpush1.bf16.msra.mxu0 0
        %3912 = vmatprep.subr.bf16.mxu0 0
        %3913 = vmatpush1.bf16.msra.mxu0 0
        %3914 = vmatprep.subr.bf16.mxu0 0
        %3915 = vmatpush1.bf16.msra.mxu0 0
        %3916 = vmatprep.subr.bf16.mxu0 0
        %3917 = vmatpush1.bf16.msra.mxu0 0
        %3918 = vmatprep.subr.bf16.mxu0 0
        %3919 = vmatpush1.bf16.msra.mxu0 0
        %3920 = vmatprep.subr.bf16.mxu0 0
        %3921 = vmatpush1.bf16.msra.mxu0 0
        %3922 = vmatprep.subr.bf16.mxu0 0
        %3923 = vmatpush1.bf16.msra.mxu0 0
        %3924 = vmatprep.mubr.bf16.mxu0 0
        %3925 = vmatmul.mubr.bf16.gmra.mrb[0].mxu0 %v3842
        %v3926 = vpop.f32.mrb[0].mxu0
        %v3927 = vadd.f32 0.0, %v3926
        %v3928 = vpop.f32.mrb[0].mxu0
        %v3929 = vpop.f32.mrb[0].mxu0
        %v3930 = vadd.f32 0.0, %v3929
        %v3931 = vpop.f32.mrb[0].mxu0
        %3932 = vmatprep.mubr.bf16.mxu0 0
        %3933 = vmatmul.mubr.bf16.gmra.mrb[0].mxu0 %v3845
        %v3934 = vpop.f32.mrb[0].mxu0
        %v3935 = vadd.f32 0.0, %v3934
        %v3936 = vpop.f32.mrb[0].mxu0
        %v3937 = vpop.f32.mrb[0].mxu0
        %v3938 = vadd.f32 0.0, %v3937
        %v3939 = vpop.f32.mrb[0].mxu0
        %3940 = vmatprep.mubr.bf16.mxu0 0
        %3941 = vmatmul.mubr.bf16.gmra.mrb[0].mxu0 %v3848
        %v3942 = vpop.f32.mrb[0].mxu0
        %v3943 = vadd.f32 0.0, %v3942
        %v3944 = vpop.f32.mrb[0].mxu0
        %v3945 = vpop.f32.mrb[0].mxu0
        %v3946 = vadd.f32 0.0, %v3945
        %v3947 = vpop.f32.mrb[0].mxu0
        %3948 = vmatprep.mubr.bf16.mxu0 0
        %3949 = vmatmul.mubr.bf16.gmra.mrb[0].mxu0 %v3851
        %v3950 = vpop.f32.mrb[0].mxu0
        %v3951 = vadd.f32 0.0, %v3950
        %v3952 = vpop.f32.mrb[0].mxu0
        %v3953 = vpop.f32.mrb[0].mxu0
        %v3954 = vadd.f32 0.0, %v3953
        %v3955 = vpop.f32.mrb[0].mxu0
        %3956 = vmatprep.mubr.bf16.mxu0 0
        %3957 = vmatmul.mubr.bf16.gmra.mrb[0].mxu0 %v3854
        %v3958 = vpop.f32.mrb[0].mxu0
        %v3959 = vadd.f32 0.0, %v3958
        %v3960 = vpop.f32.mrb[0].mxu0
        %v3961 = vpop.f32.mrb[0].mxu0
        %v3962 = vadd.f32 0.0, %v3961
        %v3963 = vpop.f32.mrb[0].mxu0
        %3964 = vmatprep.mubr.bf16.mxu0 0
        %3965 = vmatmul.mubr.bf16.gmra.mrb[0].mxu0 %v3857
        %v3966 = vpop.f32.mrb[0].mxu0
        %v3967 = vadd.f32 0.0, %v3966
        %v3968 = vpop.f32.mrb[0].mxu0
        %v3969 = vpop.f32.mrb[0].mxu0
        %v3970 = vadd.f32 0.0, %v3969
        %v3971 = vpop.f32.mrb[0].mxu0
        %3972 = vmatprep.mubr.bf16.mxu0 0
        %3973 = vmatmul.mubr.bf16.gmra.mrb[0].mxu0 %v3860
        %v3974 = vpop.f32.mrb[0].mxu0
        %v3975 = vadd.f32 0.0, %v3974
        %v3976 = vpop.f32.mrb[0].mxu0
        %v3977 = vpop.f32.mrb[0].mxu0
        %v3978 = vadd.f32 0.0, %v3977
        %v3979 = vpop.f32.mrb[0].mxu0
        %3980 = vmatprep.mubr.bf16.mxu0 0
        %3981 = vmatmul.mubr.bf16.gmra.mrb[0].mxu0 %v3863
        %v3982 = vpop.f32.mrb[0].mxu0
        %v3983 = vadd.f32 0.0, %v3982
        %v3984 = vpop.f32.mrb[0].mxu0
        %v3985 = vpop.f32.mrb[0].mxu0
        %v3986 = vadd.f32 0.0, %v3985
        %v3987 = vpop.f32.mrb[0].mxu0
        %3988 = vmatprep.mubr.bf16.mxu0 0
        %3989 = vmatmul.mubr.bf16.gmra.mrb[0].mxu0 %v3866
        %v3990 = vpop.f32.mrb[0].mxu0
        %v3991 = vadd.f32 0.0, %v3990
        %v3992 = vpop.f32.mrb[0].mxu0
        %v3993 = vpop.f32.mrb[0].mxu0
        %v3994 = vadd.f32 0.0, %v3993
        %v3995 = vpop.f32.mrb[0].mxu0
        %3996 = vmatprep.mubr.bf16.mxu0 0
        %3997 = vmatmul.mubr.bf16.gmra.mrb[0].mxu0 %v3869
        %v3998 = vpop.f32.mrb[0].mxu0
        %v3999 = vadd.f32 0.0, %v3998
        %v4000 = vpop.f32.mrb[0].mxu0
        %v4001 = vpop.f32.mrb[0].mxu0
        %v4002 = vadd.f32 0.0, %v4001
        %v4003 = vpop.f32.mrb[0].mxu0
        %4004 = vmatprep.mubr.bf16.mxu0 0
        %4005 = vmatmul.mubr.bf16.gmra.mrb[0].mxu0 %v3872
        %v4006 = vpop.f32.mrb[0].mxu0
        %v4007 = vadd.f32 0.0, %v4006
        %v4008 = vpop.f32.mrb[0].mxu0
        %v4009 = vpop.f32.mrb[0].mxu0
        %v4010 = vadd.f32 0.0, %v4009
        %v4011 = vpop.f32.mrb[0].mxu0
        %4012 = vmatprep.mubr.bf16.mxu0 0
        %4013 = vmatmul.mubr.bf16.gmra.mrb[0].mxu0 %v3875
        %v4014 = vpop.f32.mrb[0].mxu0
        %v4015 = vadd.f32 0.0, %v4014
        %v4016 = vpop.f32.mrb[0].mxu0
        %v4017 = vpop.f32.mrb[0].mxu0
        %v4018 = vadd.f32 0.0, %v4017
        %v4019 = vpop.f32.mrb[0].mxu0
        %4020 = vmatprep.mubr.bf16.mxu0 0
        %4021 = vmatmul.mubr.bf16.gmra.mrb[0].mxu0 %v3878
        %v4022 = vpop.f32.mrb[0].mxu0
        %v4023 = vadd.f32 0.0, %v4022
        %v4024 = vpop.f32.mrb[0].mxu0
        %v4025 = vpop.f32.mrb[0].mxu0
        %v4026 = vadd.f32 0.0, %v4025
        %v4027 = vpop.f32.mrb[0].mxu0
        %4028 = vmatprep.mubr.bf16.mxu0 0
        %4029 = vmatmul.mubr.bf16.gmra.mrb[0].mxu0 %v3881
        %v4030 = vpop.f32.mrb[0].mxu0
        %v4031 = vadd.f32 0.0, %v4030
        %v4032 = vpop.f32.mrb[0].mxu0
        %v4033 = vpop.f32.mrb[0].mxu0
        %v4034 = vadd.f32 0.0, %v4033
        %v4035 = vpop.f32.mrb[0].mxu0
        %4036 = vmatprep.mubr.bf16.mxu0 0
        %4037 = vmatmul.mubr.bf16.gmra.mrb[0].mxu0 %v3884
        %v4038 = vpop.f32.mrb[0].mxu0
        %v4039 = vadd.f32 0.0, %v4038
        %v4040 = vpop.f32.mrb[0].mxu0
        %v4041 = vpop.f32.mrb[0].mxu0
        %v4042 = vadd.f32 0.0, %v4041
        %v4043 = vpop.f32.mrb[0].mxu0
        %4044 = vmatprep.mubr.bf16.mxu0 0
        %4045 = vmatmul.mubr.bf16.gmra.mrb[0].mxu0 %v3887
        %v4046 = vpop.f32.mrb[0].mxu0
        %v4047 = vadd.f32 0.0, %v4046
        %v4048 = vpop.f32.mrb[0].mxu0
        %v4049 = vpop.f32.mrb[0].mxu0
        %v4050 = vadd.f32 0.0, %v4049
        %v4051 = vpop.f32.mrb[0].mxu0
        %4052 = vdwg.mxu0
        %v4053 = vadd.f32 %v3692, %v3927
        %v4054 = vadd.f32 %v3693, %v3930
        %v4055 = vadd.f32 %v3694, %v3935
        %v4056 = vadd.f32 %v3695, %v3938
        %v4057 = vadd.f32 %v3696, %v3943
        %v4058 = vadd.f32 %v3697, %v3946
        %v4059 = vadd.f32 %v3698, %v3951
        %v4060 = vadd.f32 %v3699, %v3954
        %v4061 = vadd.f32 %v3700, %v3959
        %v4062 = vadd.f32 %v3701, %v3962
        %v4063 = vadd.f32 %v3702, %v3967
        %v4064 = vadd.f32 %v3703, %v3970
        %v4065 = vadd.f32 %v3704, %v3975
        %v4066 = vadd.f32 %v3705, %v3978
        %v4067 = vadd.f32 %v3706, %v3983
        %v4068 = vadd.f32 %v3707, %v3986
        %v4069 = vadd.f32 %v3708, %v3991
        %v4070 = vadd.f32 %v3709, %v3994
        %v4071 = vadd.f32 %v3710, %v3999
        %v4072 = vadd.f32 %v3711, %v4002
        %v4073 = vadd.f32 %v3712, %v4007
        %v4074 = vadd.f32 %v3713, %v4010
        %v4075 = vadd.f32 %v3714, %v4015
        %v4076 = vadd.f32 %v3715, %v4018
        %v4077 = vadd.f32 %v3716, %v4023
        %v4078 = vadd.f32 %v3717, %v4026
        %v4079 = vadd.f32 %v3718, %v4031
        %v4080 = vadd.f32 %v3719, %v4034
        %v4081 = vadd.f32 %v3720, %v4039
        %v4082 = vadd.f32 %v3721, %v4042
        %v4083 = vadd.f32 %v3722, %v4047
        %v4084 = vadd.f32 %v3723, %v4050
        %v4085 = vld [vmem:[%s3727] sm:$0xf]
        %v4086 = vld [vmem:[%s3727 + $0x4] sm:$0xf]
        %v4087 = vld [vmem:[%s3727 + $0x8] sm:$0x1]
        %v4088 = vld [vmem:[%s3727 + $0xc] sm:$0xf]
        %v4089 = vld [vmem:[%s3727 + $0x10] sm:$0xf]
        %v4090 = vld [vmem:[%s3727 + $0x14] sm:$0x1]
        %v4091 = vld [vmem:[%s3727 + $0x18] sm:$0xf]
        %v4092 = vld [vmem:[%s3727 + $0x1c] sm:$0xf]
        %v4093 = vld [vmem:[%s3727 + $0x20] sm:$0x1]
        %v4094 = vld [vmem:[%s3727 + $0x24] sm:$0xf]
        %v4095 = vld [vmem:[%s3727 + $0x28] sm:$0xf]
        %v4096 = vld [vmem:[%s3727 + $0x2c] sm:$0x1]
        %v4097 = vld [vmem:[%s3727 + $0x30] sm:$0xf]
        %v4098 = vld [vmem:[%s3727 + $0x34] sm:$0xf]
        %v4099 = vld [vmem:[%s3727 + $0x38] sm:$0x1]
        %v4100 = vld [vmem:[%s3727 + $0x3c] sm:$0xf]
        %v4101 = vld [vmem:[%s3727 + $0x40] sm:$0xf]
        %v4102 = vld [vmem:[%s3727 + $0x44] sm:$0x1]
        %v4103 = vld [vmem:[%s3727 + $0x48] sm:$0xf]
        %v4104 = vld [vmem:[%s3727 + $0x4c] sm:$0xf]
        %v4105 = vld [vmem:[%s3727 + $0x50] sm:$0x1]
        %v4106 = vld [vmem:[%s3727 + $0x54] sm:$0xf]
        %v4107 = vld [vmem:[%s3727 + $0x58] sm:$0xf]
        %v4108 = vld [vmem:[%s3727 + $0x5c] sm:$0x1]
        %v4109 = vld [vmem:[%s3727 + $0x60] sm:$0xf]
        %v4110 = vld [vmem:[%s3727 + $0x64] sm:$0xf]
        %v4111 = vld [vmem:[%s3727 + $0x68] sm:$0x1]
        %v4112 = vld [vmem:[%s3727 + $0x6c] sm:$0xf]
        %v4113 = vld [vmem:[%s3727 + $0x70] sm:$0xf]
        %v4114 = vld [vmem:[%s3727 + $0x74] sm:$0x1]
        %v4115 = vld [vmem:[%s3727 + $0x78] sm:$0xf]
        %v4116 = vld [vmem:[%s3727 + $0x7c] sm:$0xf]
        %v4117 = vld [vmem:[%s3727 + $0x80] sm:$0x1]
        %v4118 = vld [vmem:[%s3727 + $0x84] sm:$0xf]
        %v4119 = vld [vmem:[%s3727 + $0x88] sm:$0xf]
        %v4120 = vld [vmem:[%s3727 + $0x8c] sm:$0x1]
        %v4121 = vld [vmem:[%s3727 + $0x90] sm:$0xf]
        %v4122 = vld [vmem:[%s3727 + $0x94] sm:$0xf]
        %v4123 = vld [vmem:[%s3727 + $0x98] sm:$0x1]
        %v4124 = vld [vmem:[%s3727 + $0x9c] sm:$0xf]
        %v4125 = vld [vmem:[%s3727 + $0xa0] sm:$0xf]
        %v4126 = vld [vmem:[%s3727 + $0xa4] sm:$0x1]
        %v4127 = vld [vmem:[%s3727 + $0xa8] sm:$0xf]
        %v4128 = vld [vmem:[%s3727 + $0xac] sm:$0xf]
        %v4129 = vld [vmem:[%s3727 + $0xb0] sm:$0x1]
        %v4130 = vld [vmem:[%s3727 + $0xb4] sm:$0xf]
        %v4131 = vld [vmem:[%s3727 + $0xb8] sm:$0xf]
        %v4132 = vld [vmem:[%s3727 + $0xbc] sm:$0x1]
        %v4134 = vshrl.u32 %v4085, 16
        %v4136 = vrot.slane %v4134, 4
        %v4137 = vshll.u32 %v4085, 16
        %v4139 = vrot.slane %v4137, 5
        %v4140 = vor.u32 %v4136, %v4139
        %v4141 = vrot.slane %v4140, 4
        %v4143 = vshll.u32 %v4086, 16
        %v4145 = vrot.slane %v4143, 5
        %v4146 = vsel %vm773, %v4141, %v4145
        %v4147 = vshrl.u32 %v4086, 16
        %v4149 = vrot.slane %v4147, 4
        %v4150 = vor.u32 %v4149, %v4145
        %v4151 = vrot.slane %v4150, 4
        %v4153 = vshll.u32 %v4087, 16
        %v4155 = vrot.slane %v4153, 5
        %v4156 = vsel %vm773, %v4151, %v4155
        %v4158 = vshrl.u32 %v4088, 16
        %v4160 = vrot.slane %v4158, 4
        %v4161 = vshll.u32 %v4088, 16
        %v4163 = vrot.slane %v4161, 5
        %v4164 = vor.u32 %v4160, %v4163
        %v4165 = vrot.slane %v4164, 4
        %v4167 = vshll.u32 %v4089, 16
        %v4169 = vrot.slane %v4167, 5
        %v4170 = vsel %vm773, %v4165, %v4169
        %v4171 = vshrl.u32 %v4089, 16
        %v4173 = vrot.slane %v4171, 4
        %v4174 = vor.u32 %v4173, %v4169
        %v4175 = vrot.slane %v4174, 4
        %v4177 = vshll.u32 %v4090, 16
        %v4179 = vrot.slane %v4177, 5
        %v4180 = vsel %vm773, %v4175, %v4179
        %v4182 = vshrl.u32 %v4091, 16
        %v4184 = vrot.slane %v4182, 4
        %v4185 = vshll.u32 %v4091, 16
        %v4187 = vrot.slane %v4185, 5
        %v4188 = vor.u32 %v4184, %v4187
        %v4189 = vrot.slane %v4188, 4
        %v4191 = vshll.u32 %v4092, 16
        %v4193 = vrot.slane %v4191, 5
        %v4194 = vsel %vm773, %v4189, %v4193
        %v4195 = vshrl.u32 %v4092, 16
        %v4197 = vrot.slane %v4195, 4
        %v4198 = vor.u32 %v4197, %v4193
        %v4199 = vrot.slane %v4198, 4
        %v4201 = vshll.u32 %v4093, 16
        %v4203 = vrot.slane %v4201, 5
        %v4204 = vsel %vm773, %v4199, %v4203
        %v4206 = vshrl.u32 %v4094, 16
        %v4208 = vrot.slane %v4206, 4
        %v4209 = vshll.u32 %v4094, 16
        %v4211 = vrot.slane %v4209, 5
        %v4212 = vor.u32 %v4208, %v4211
        %v4213 = vrot.slane %v4212, 4
        %v4215 = vshll.u32 %v4095, 16
        %v4217 = vrot.slane %v4215, 5
        %v4218 = vsel %vm773, %v4213, %v4217
        %v4219 = vshrl.u32 %v4095, 16
        %v4221 = vrot.slane %v4219, 4
        %v4222 = vor.u32 %v4221, %v4217
        %v4223 = vrot.slane %v4222, 4
        %v4225 = vshll.u32 %v4096, 16
        %v4227 = vrot.slane %v4225, 5
        %v4228 = vsel %vm773, %v4223, %v4227
        %v4230 = vshrl.u32 %v4097, 16
        %v4232 = vrot.slane %v4230, 4
        %v4233 = vshll.u32 %v4097, 16
        %v4235 = vrot.slane %v4233, 5
        %v4236 = vor.u32 %v4232, %v4235
        %v4237 = vrot.slane %v4236, 4
        %v4239 = vshll.u32 %v4098, 16
        %v4241 = vrot.slane %v4239, 5
        %v4242 = vsel %vm773, %v4237, %v4241
        %v4243 = vshrl.u32 %v4098, 16
        %v4245 = vrot.slane %v4243, 4
        %v4246 = vor.u32 %v4245, %v4241
        %v4247 = vrot.slane %v4246, 4
        %v4249 = vshll.u32 %v4099, 16
        %v4251 = vrot.slane %v4249, 5
        %v4252 = vsel %vm773, %v4247, %v4251
        %v4254 = vshrl.u32 %v4100, 16
        %v4256 = vrot.slane %v4254, 4
        %v4257 = vshll.u32 %v4100, 16
        %v4259 = vrot.slane %v4257, 5
        %v4260 = vor.u32 %v4256, %v4259
        %v4261 = vrot.slane %v4260, 4
        %v4263 = vshll.u32 %v4101, 16
        %v4265 = vrot.slane %v4263, 5
        %v4266 = vsel %vm773, %v4261, %v4265
        %v4267 = vshrl.u32 %v4101, 16
        %v4269 = vrot.slane %v4267, 4
        %v4270 = vor.u32 %v4269, %v4265
        %v4271 = vrot.slane %v4270, 4
        %v4273 = vshll.u32 %v4102, 16
        %v4275 = vrot.slane %v4273, 5
        %v4276 = vsel %vm773, %v4271, %v4275
        %v4278 = vshrl.u32 %v4103, 16
        %v4280 = vrot.slane %v4278, 4
        %v4281 = vshll.u32 %v4103, 16
        %v4283 = vrot.slane %v4281, 5
        %v4284 = vor.u32 %v4280, %v4283
        %v4285 = vrot.slane %v4284, 4
        %v4287 = vshll.u32 %v4104, 16
        %v4289 = vrot.slane %v4287, 5
        %v4290 = vsel %vm773, %v4285, %v4289
        %v4291 = vshrl.u32 %v4104, 16
        %v4293 = vrot.slane %v4291, 4
        %v4294 = vor.u32 %v4293, %v4289
        %v4295 = vrot.slane %v4294, 4
        %v4297 = vshll.u32 %v4105, 16
        %v4299 = vrot.slane %v4297, 5
        %v4300 = vsel %vm773, %v4295, %v4299
        %v4302 = vshrl.u32 %v4106, 16
        %v4304 = vrot.slane %v4302, 4
        %v4305 = vshll.u32 %v4106, 16
        %v4307 = vrot.slane %v4305, 5
        %v4308 = vor.u32 %v4304, %v4307
        %v4309 = vrot.slane %v4308, 4
        %v4311 = vshll.u32 %v4107, 16
        %v4313 = vrot.slane %v4311, 5
        %v4314 = vsel %vm773, %v4309, %v4313
        %v4315 = vshrl.u32 %v4107, 16
        %v4317 = vrot.slane %v4315, 4
        %v4318 = vor.u32 %v4317, %v4313
        %v4319 = vrot.slane %v4318, 4
        %v4321 = vshll.u32 %v4108, 16
        %v4323 = vrot.slane %v4321, 5
        %v4324 = vsel %vm773, %v4319, %v4323
        %v4326 = vshrl.u32 %v4109, 16
        %v4328 = vrot.slane %v4326, 4
        %v4329 = vshll.u32 %v4109, 16
        %v4331 = vrot.slane %v4329, 5
        %v4332 = vor.u32 %v4328, %v4331
        %v4333 = vrot.slane %v4332, 4
        %v4335 = vshll.u32 %v4110, 16
        %v4337 = vrot.slane %v4335, 5
        %v4338 = vsel %vm773, %v4333, %v4337
        %v4339 = vshrl.u32 %v4110, 16
        %v4341 = vrot.slane %v4339, 4
        %v4342 = vor.u32 %v4341, %v4337
        %v4343 = vrot.slane %v4342, 4
        %v4345 = vshll.u32 %v4111, 16
        %v4347 = vrot.slane %v4345, 5
        %v4348 = vsel %vm773, %v4343, %v4347
        %v4350 = vshrl.u32 %v4112, 16
        %v4352 = vrot.slane %v4350, 4
        %v4353 = vshll.u32 %v4112, 16
        %v4355 = vrot.slane %v4353, 5
        %v4356 = vor.u32 %v4352, %v4355
        %v4357 = vrot.slane %v4356, 4
        %v4359 = vshll.u32 %v4113, 16
        %v4361 = vrot.slane %v4359, 5
        %v4362 = vsel %vm773, %v4357, %v4361
        %v4363 = vshrl.u32 %v4113, 16
        %v4365 = vrot.slane %v4363, 4
        %v4366 = vor.u32 %v4365, %v4361
        %v4367 = vrot.slane %v4366, 4
        %v4369 = vshll.u32 %v4114, 16
        %v4371 = vrot.slane %v4369, 5
        %v4372 = vsel %vm773, %v4367, %v4371
        %v4374 = vshrl.u32 %v4115, 16
        %v4376 = vrot.slane %v4374, 4
        %v4377 = vshll.u32 %v4115, 16
        %v4379 = vrot.slane %v4377, 5
        %v4380 = vor.u32 %v4376, %v4379
        %v4381 = vrot.slane %v4380, 4
        %v4383 = vshll.u32 %v4116, 16
        %v4385 = vrot.slane %v4383, 5
        %v4386 = vsel %vm773, %v4381, %v4385
        %v4387 = vshrl.u32 %v4116, 16
        %v4389 = vrot.slane %v4387, 4
        %v4390 = vor.u32 %v4389, %v4385
        %v4391 = vrot.slane %v4390, 4
        %v4393 = vshll.u32 %v4117, 16
        %v4395 = vrot.slane %v4393, 5
        %v4396 = vsel %vm773, %v4391, %v4395
        %v4398 = vshrl.u32 %v4118, 16
        %v4400 = vrot.slane %v4398, 4
        %v4401 = vshll.u32 %v4118, 16
        %v4403 = vrot.slane %v4401, 5
        %v4404 = vor.u32 %v4400, %v4403
        %v4405 = vrot.slane %v4404, 4
        %v4407 = vshll.u32 %v4119, 16
        %v4409 = vrot.slane %v4407, 5
        %v4410 = vsel %vm773, %v4405, %v4409
        %v4411 = vshrl.u32 %v4119, 16
        %v4413 = vrot.slane %v4411, 4
        %v4414 = vor.u32 %v4413, %v4409
        %v4415 = vrot.slane %v4414, 4
        %v4417 = vshll.u32 %v4120, 16
        %v4419 = vrot.slane %v4417, 5
        %v4420 = vsel %vm773, %v4415, %v4419
        %v4422 = vshrl.u32 %v4121, 16
        %v4424 = vrot.slane %v4422, 4
        %v4425 = vshll.u32 %v4121, 16
        %v4427 = vrot.slane %v4425, 5
        %v4428 = vor.u32 %v4424, %v4427
        %v4429 = vrot.slane %v4428, 4
        %v4431 = vshll.u32 %v4122, 16
        %v4433 = vrot.slane %v4431, 5
        %v4434 = vsel %vm773, %v4429, %v4433
        %v4435 = vshrl.u32 %v4122, 16
        %v4437 = vrot.slane %v4435, 4
        %v4438 = vor.u32 %v4437, %v4433
        %v4439 = vrot.slane %v4438, 4
        %v4441 = vshll.u32 %v4123, 16
        %v4443 = vrot.slane %v4441, 5
        %v4444 = vsel %vm773, %v4439, %v4443
        %v4446 = vshrl.u32 %v4124, 16
        %v4448 = vrot.slane %v4446, 4
        %v4449 = vshll.u32 %v4124, 16
        %v4451 = vrot.slane %v4449, 5
        %v4452 = vor.u32 %v4448, %v4451
        %v4453 = vrot.slane %v4452, 4
        %v4455 = vshll.u32 %v4125, 16
        %v4457 = vrot.slane %v4455, 5
        %v4458 = vsel %vm773, %v4453, %v4457
        %v4459 = vshrl.u32 %v4125, 16
        %v4461 = vrot.slane %v4459, 4
        %v4462 = vor.u32 %v4461, %v4457
        %v4463 = vrot.slane %v4462, 4
        %v4465 = vshll.u32 %v4126, 16
        %v4467 = vrot.slane %v4465, 5
        %v4468 = vsel %vm773, %v4463, %v4467
        %v4470 = vshrl.u32 %v4127, 16
        %v4472 = vrot.slane %v4470, 4
        %v4473 = vshll.u32 %v4127, 16
        %v4475 = vrot.slane %v4473, 5
        %v4476 = vor.u32 %v4472, %v4475
        %v4477 = vrot.slane %v4476, 4
        %v4479 = vshll.u32 %v4128, 16
        %v4481 = vrot.slane %v4479, 5
        %v4482 = vsel %vm773, %v4477, %v4481
        %v4483 = vshrl.u32 %v4128, 16
        %v4485 = vrot.slane %v4483, 4
        %v4486 = vor.u32 %v4485, %v4481
        %v4487 = vrot.slane %v4486, 4
        %v4489 = vshll.u32 %v4129, 16
        %v4491 = vrot.slane %v4489, 5
        %v4492 = vsel %vm773, %v4487, %v4491
        %v4494 = vshrl.u32 %v4130, 16
        %v4496 = vrot.slane %v4494, 4
        %v4497 = vshll.u32 %v4130, 16
        %v4499 = vrot.slane %v4497, 5
        %v4500 = vor.u32 %v4496, %v4499
        %v4501 = vrot.slane %v4500, 4
        %v4503 = vshll.u32 %v4131, 16
        %v4505 = vrot.slane %v4503, 5
        %v4506 = vsel %vm773, %v4501, %v4505
        %v4507 = vshrl.u32 %v4131, 16
        %v4509 = vrot.slane %v4507, 4
        %v4510 = vor.u32 %v4509, %v4505
        %v4511 = vrot.slane %v4510, 4
        %v4513 = vshll.u32 %v4132, 16
        %v4515 = vrot.slane %v4513, 5
        %v4516 = vsel %vm773, %v4511, %v4515
        %v4517 = vld [vmem:[%s1 + $0x1c] sm:$0xf]
        %v4518 = vunpack.c.l.b16 %v4146
        %v4519 = vunpack.c.l.b16 %v4156
        %v4520 = vunpack.c.l.b16 %v4170
        %v4521 = vunpack.c.l.b16 %v4180
        %v4522 = vunpack.c.l.b16 %v4194
        %v4523 = vunpack.c.l.b16 %v4204
        %v4524 = vunpack.c.l.b16 %v4218
        %v4525 = vunpack.c.l.b16 %v4228
        %v4526 = vunpack.c.l.b16 %v4242
        %v4527 = vunpack.c.l.b16 %v4252
        %v4528 = vunpack.c.l.b16 %v4266
        %v4529 = vunpack.c.l.b16 %v4276
        %v4530 = vunpack.c.l.b16 %v4290
        %v4531 = vunpack.c.l.b16 %v4300
        %v4532 = vunpack.c.l.b16 %v4314
        %v4533 = vunpack.c.l.b16 %v4324
        %v4534 = vunpack.c.l.b16 %v4338
        %v4535 = vunpack.c.l.b16 %v4348
        %v4536 = vunpack.c.l.b16 %v4362
        %v4537 = vunpack.c.l.b16 %v4372
        %v4538 = vunpack.c.l.b16 %v4386
        %v4539 = vunpack.c.l.b16 %v4396
        %v4540 = vunpack.c.l.b16 %v4410
        %v4541 = vunpack.c.l.b16 %v4420
        %v4542 = vunpack.c.l.b16 %v4434
        %v4543 = vunpack.c.l.b16 %v4444
        %v4544 = vunpack.c.l.b16 %v4458
        %v4545 = vunpack.c.l.b16 %v4468
        %v4546 = vunpack.c.l.b16 %v4482
        %v4547 = vunpack.c.l.b16 %v4492
        %v4548 = vunpack.c.l.b16 %v4506
        %v4549 = vunpack.c.l.b16 %v4516
        %v4550 = vpack.c.b16 %v4519, %v4518
        %v4551 = vpack.c.b16 %v4521, %v4520
        %v4552 = vpack.c.b16 %v4523, %v4522
        %v4553 = vpack.c.b16 %v4525, %v4524
        %v4554 = vpack.c.b16 %v4527, %v4526
        %v4555 = vpack.c.b16 %v4529, %v4528
        %v4556 = vpack.c.b16 %v4531, %v4530
        %v4557 = vpack.c.b16 %v4533, %v4532
        %v4558 = vpack.c.b16 %v4535, %v4534
        %v4559 = vpack.c.b16 %v4537, %v4536
        %v4560 = vpack.c.b16 %v4539, %v4538
        %v4561 = vpack.c.b16 %v4541, %v4540
        %v4562 = vpack.c.b16 %v4543, %v4542
        %v4563 = vpack.c.b16 %v4545, %v4544
        %v4564 = vpack.c.b16 %v4547, %v4546
        %v4565 = vpack.c.b16 %v4549, %v4548
        %v4567 = vsel %vm1207, %v4550, 0
        %v4570 = vsel %vm1207, %v4551, 0
        %v4573 = vsel %vm1207, %v4552, 0
        %v4576 = vsel %vm1207, %v4553, 0
        %v4579 = vsel %vm1207, %v4554, 0
        %v4582 = vsel %vm1207, %v4555, 0
        %v4585 = vsel %vm1207, %v4556, 0
        %v4588 = vsel %vm1207, %v4557, 0
        %v4591 = vsel %vm1207, %v4558, 0
        %v4594 = vsel %vm1207, %v4559, 0
        %v4597 = vsel %vm1207, %v4560, 0
        %v4600 = vsel %vm1207, %v4561, 0
        %v4603 = vsel %vm1207, %v4562, 0
        %v4606 = vsel %vm1207, %v4563, 0
        %v4609 = vsel %vm1207, %v4564, 0
        %v4612 = vsel %vm1207, %v4565, 0
        %v4615 = vsel %vm1256, %v4517, 0
        %4617 = vmatprep.subr.bf16.mxu0 0
        %4618 = vmatpush1.bf16.msra.mxu0 %v4615
        %4619 = vmatprep.subr.bf16.mxu0 0
        %4620 = vmatpush1.bf16.msra.mxu0 0
        %4621 = vmatprep.subr.bf16.mxu0 0
        %4622 = vmatpush1.bf16.msra.mxu0 0
        %4623 = vmatprep.subr.bf16.mxu0 0
        %4624 = vmatpush1.bf16.msra.mxu0 0
        %4625 = vmatprep.subr.bf16.mxu0 0
        %4626 = vmatpush1.bf16.msra.mxu0 0
        %4627 = vmatprep.subr.bf16.mxu0 0
        %4628 = vmatpush1.bf16.msra.mxu0 0
        %4629 = vmatprep.subr.bf16.mxu0 0
        %4630 = vmatpush1.bf16.msra.mxu0 0
        %4631 = vmatprep.subr.bf16.mxu0 0
        %4632 = vmatpush1.bf16.msra.mxu0 0
        %4633 = vmatprep.subr.bf16.mxu0 0
        %4634 = vmatpush1.bf16.msra.mxu0 0
        %4635 = vmatprep.subr.bf16.mxu0 0
        %4636 = vmatpush1.bf16.msra.mxu0 0
        %4637 = vmatprep.subr.bf16.mxu0 0
        %4638 = vmatpush1.bf16.msra.mxu0 0
        %4639 = vmatprep.subr.bf16.mxu0 0
        %4640 = vmatpush1.bf16.msra.mxu0 0
        %4641 = vmatprep.subr.bf16.mxu0 0
        %4642 = vmatpush1.bf16.msra.mxu0 0
        %4643 = vmatprep.subr.bf16.mxu0 0
        %4644 = vmatpush1.bf16.msra.mxu0 0
        %4645 = vmatprep.subr.bf16.mxu0 0
        %4646 = vmatpush1.bf16.msra.mxu0 0
        %4647 = vmatprep.subr.bf16.mxu0 0
        %4648 = vmatpush1.bf16.msra.mxu0 0
        %4649 = vmatprep.mubr.bf16.mxu0 0
        %4650 = vmatmul.mubr.bf16.gmra.mrb[0].mxu0 %v4567
        %v4651 = vpop.f32.mrb[0].mxu0
        %v4652 = vadd.f32 0.0, %v4651
        %v4653 = vpop.f32.mrb[0].mxu0
        %v4654 = vpop.f32.mrb[0].mxu0
        %v4655 = vadd.f32 0.0, %v4654
        %v4656 = vpop.f32.mrb[0].mxu0
        %4657 = vmatprep.mubr.bf16.mxu0 0
        %4658 = vmatmul.mubr.bf16.gmra.mrb[0].mxu0 %v4570
        %v4659 = vpop.f32.mrb[0].mxu0
        %v4660 = vadd.f32 0.0, %v4659
        %v4661 = vpop.f32.mrb[0].mxu0
        %v4662 = vpop.f32.mrb[0].mxu0
        %v4663 = vadd.f32 0.0, %v4662
        %v4664 = vpop.f32.mrb[0].mxu0
        %4665 = vmatprep.mubr.bf16.mxu0 0
        %4666 = vmatmul.mubr.bf16.gmra.mrb[0].mxu0 %v4573
        %v4667 = vpop.f32.mrb[0].mxu0
        %v4668 = vadd.f32 0.0, %v4667
        %v4669 = vpop.f32.mrb[0].mxu0
        %v4670 = vpop.f32.mrb[0].mxu0
        %v4671 = vadd.f32 0.0, %v4670
        %v4672 = vpop.f32.mrb[0].mxu0
        %4673 = vmatprep.mubr.bf16.mxu0 0
        %4674 = vmatmul.mubr.bf16.gmra.mrb[0].mxu0 %v4576
        %v4675 = vpop.f32.mrb[0].mxu0
        %v4676 = vadd.f32 0.0, %v4675
        %v4677 = vpop.f32.mrb[0].mxu0
        %v4678 = vpop.f32.mrb[0].mxu0
        %v4679 = vadd.f32 0.0, %v4678
        %v4680 = vpop.f32.mrb[0].mxu0
        %4681 = vmatprep.mubr.bf16.mxu0 0
        %4682 = vmatmul.mubr.bf16.gmra.mrb[0].mxu0 %v4579
        %v4683 = vpop.f32.mrb[0].mxu0
        %v4684 = vadd.f32 0.0, %v4683
        %v4685 = vpop.f32.mrb[0].mxu0
        %v4686 = vpop.f32.mrb[0].mxu0
        %v4687 = vadd.f32 0.0, %v4686
        %v4688 = vpop.f32.mrb[0].mxu0
        %4689 = vmatprep.mubr.bf16.mxu0 0
        %4690 = vmatmul.mubr.bf16.gmra.mrb[0].mxu0 %v4582
        %v4691 = vpop.f32.mrb[0].mxu0
        %v4692 = vadd.f32 0.0, %v4691
        %v4693 = vpop.f32.mrb[0].mxu0
        %v4694 = vpop.f32.mrb[0].mxu0
        %v4695 = vadd.f32 0.0, %v4694
        %v4696 = vpop.f32.mrb[0].mxu0
        %4697 = vmatprep.mubr.bf16.mxu0 0
        %4698 = vmatmul.mubr.bf16.gmra.mrb[0].mxu0 %v4585
        %v4699 = vpop.f32.mrb[0].mxu0
        %v4700 = vadd.f32 0.0, %v4699
        %v4701 = vpop.f32.mrb[0].mxu0
        %v4702 = vpop.f32.mrb[0].mxu0
        %v4703 = vadd.f32 0.0, %v4702
        %v4704 = vpop.f32.mrb[0].mxu0
        %4705 = vmatprep.mubr.bf16.mxu0 0
        %4706 = vmatmul.mubr.bf16.gmra.mrb[0].mxu0 %v4588
        %v4707 = vpop.f32.mrb[0].mxu0
        %v4708 = vadd.f32 0.0, %v4707
        %v4709 = vpop.f32.mrb[0].mxu0
        %v4710 = vpop.f32.mrb[0].mxu0
        %v4711 = vadd.f32 0.0, %v4710
        %v4712 = vpop.f32.mrb[0].mxu0
        %4713 = vmatprep.mubr.bf16.mxu0 0
        %4714 = vmatmul.mubr.bf16.gmra.mrb[0].mxu0 %v4591
        %v4715 = vpop.f32.mrb[0].mxu0
        %v4716 = vadd.f32 0.0, %v4715
        %v4717 = vpop.f32.mrb[0].mxu0
        %v4718 = vpop.f32.mrb[0].mxu0
        %v4719 = vadd.f32 0.0, %v4718
        %v4720 = vpop.f32.mrb[0].mxu0
        %4721 = vmatprep.mubr.bf16.mxu0 0
        %4722 = vmatmul.mubr.bf16.gmra.mrb[0].mxu0 %v4594
        %v4723 = vpop.f32.mrb[0].mxu0
        %v4724 = vadd.f32 0.0, %v4723
        %v4725 = vpop.f32.mrb[0].mxu0
        %v4726 = vpop.f32.mrb[0].mxu0
        %v4727 = vadd.f32 0.0, %v4726
        %v4728 = vpop.f32.mrb[0].mxu0
        %4729 = vmatprep.mubr.bf16.mxu0 0
        %4730 = vmatmul.mubr.bf16.gmra.mrb[0].mxu0 %v4597
        %v4731 = vpop.f32.mrb[0].mxu0
        %v4732 = vadd.f32 0.0, %v4731
        %v4733 = vpop.f32.mrb[0].mxu0
        %v4734 = vpop.f32.mrb[0].mxu0
        %v4735 = vadd.f32 0.0, %v4734
        %v4736 = vpop.f32.mrb[0].mxu0
        %4737 = vmatprep.mubr.bf16.mxu0 0
        %4738 = vmatmul.mubr.bf16.gmra.mrb[0].mxu0 %v4600
        %v4739 = vpop.f32.mrb[0].mxu0
        %v4740 = vadd.f32 0.0, %v4739
        %v4741 = vpop.f32.mrb[0].mxu0
        %v4742 = vpop.f32.mrb[0].mxu0
        %v4743 = vadd.f32 0.0, %v4742
        %v4744 = vpop.f32.mrb[0].mxu0
        %4745 = vmatprep.mubr.bf16.mxu0 0
        %4746 = vmatmul.mubr.bf16.gmra.mrb[0].mxu0 %v4603
        %v4747 = vpop.f32.mrb[0].mxu0
        %v4748 = vadd.f32 0.0, %v4747
        %v4749 = vpop.f32.mrb[0].mxu0
        %v4750 = vpop.f32.mrb[0].mxu0
        %v4751 = vadd.f32 0.0, %v4750
        %v4752 = vpop.f32.mrb[0].mxu0
        %4753 = vmatprep.mubr.bf16.mxu0 0
        %4754 = vmatmul.mubr.bf16.gmra.mrb[0].mxu0 %v4606
        %v4755 = vpop.f32.mrb[0].mxu0
        %v4756 = vadd.f32 0.0, %v4755
        %v4757 = vpop.f32.mrb[0].mxu0
        %v4758 = vpop.f32.mrb[0].mxu0
        %v4759 = vadd.f32 0.0, %v4758
        %v4760 = vpop.f32.mrb[0].mxu0
        %4761 = vmatprep.mubr.bf16.mxu0 0
        %4762 = vmatmul.mubr.bf16.gmra.mrb[0].mxu0 %v4609
        %v4763 = vpop.f32.mrb[0].mxu0
        %v4764 = vadd.f32 0.0, %v4763
        %v4765 = vpop.f32.mrb[0].mxu0
        %v4766 = vpop.f32.mrb[0].mxu0
        %v4767 = vadd.f32 0.0, %v4766
        %v4768 = vpop.f32.mrb[0].mxu0
        %4769 = vmatprep.mubr.bf16.mxu0 0
        %4770 = vmatmul.mubr.bf16.gmra.mrb[0].mxu0 %v4612
        %v4771 = vpop.f32.mrb[0].mxu0
        %v4772 = vadd.f32 0.0, %v4771
        %v4773 = vpop.f32.mrb[0].mxu0
        %v4774 = vpop.f32.mrb[0].mxu0
        %v4775 = vadd.f32 0.0, %v4774
        %v4776 = vpop.f32.mrb[0].mxu0
        %4777 = vdwg.mxu0
        %v4778 = vadd.f32 %v4053, %v4652
        %v4779 = vadd.f32 %v4054, %v4655
        %v4780 = vadd.f32 %v4055, %v4660
        %v4781 = vadd.f32 %v4056, %v4663
        %v4782 = vadd.f32 %v4057, %v4668
        %v4783 = vadd.f32 %v4058, %v4671
        %v4784 = vadd.f32 %v4059, %v4676
        %v4785 = vadd.f32 %v4060, %v4679
        %v4786 = vadd.f32 %v4061, %v4684
        %v4787 = vadd.f32 %v4062, %v4687
        %v4788 = vadd.f32 %v4063, %v4692
        %v4789 = vadd.f32 %v4064, %v4695
        %v4790 = vadd.f32 %v4065, %v4700
        %v4791 = vadd.f32 %v4066, %v4703
        %v4792 = vadd.f32 %v4067, %v4708
        %v4793 = vadd.f32 %v4068, %v4711
        %v4794 = vadd.f32 %v4069, %v4716
        %v4795 = vadd.f32 %v4070, %v4719
        %v4796 = vadd.f32 %v4071, %v4724
        %v4797 = vadd.f32 %v4072, %v4727
        %v4798 = vadd.f32 %v4073, %v4732
        %v4799 = vadd.f32 %v4074, %v4735
        %v4800 = vadd.f32 %v4075, %v4740
        %v4801 = vadd.f32 %v4076, %v4743
        %v4802 = vadd.f32 %v4077, %v4748
        %v4803 = vadd.f32 %v4078, %v4751
        %v4804 = vadd.f32 %v4079, %v4756
        %v4805 = vadd.f32 %v4080, %v4759
        %v4806 = vadd.f32 %v4081, %v4764
        %v4807 = vadd.f32 %v4082, %v4767
        %v4808 = vadd.f32 %v4083, %v4772
        %v4809 = vadd.f32 %v4084, %v4775
        %v4810 = vld [vmem:[%s3727] sm:$0xe]
        %v4811 = vld [vmem:[%s3727 + $0xc] sm:$0xe]
        %v4812 = vld [vmem:[%s3727 + $0x18] sm:$0xe]
        %v4813 = vld [vmem:[%s3727 + $0x24] sm:$0xe]
        %v4814 = vld [vmem:[%s3727 + $0x30] sm:$0xe]
        %v4815 = vld [vmem:[%s3727 + $0x3c] sm:$0xe]
        %v4816 = vld [vmem:[%s3727 + $0x48] sm:$0xe]
        %v4817 = vld [vmem:[%s3727 + $0x54] sm:$0xe]
        %v4818 = vld [vmem:[%s3727 + $0x60] sm:$0xe]
        %v4819 = vld [vmem:[%s3727 + $0x6c] sm:$0xe]
        %v4820 = vld [vmem:[%s3727 + $0x78] sm:$0xe]
        %v4821 = vld [vmem:[%s3727 + $0x84] sm:$0xe]
        %v4822 = vld [vmem:[%s3727 + $0x90] sm:$0xe]
        %v4823 = vld [vmem:[%s3727 + $0x9c] sm:$0xe]
        %v4824 = vld [vmem:[%s3727 + $0xa8] sm:$0xe]
        %v4825 = vld [vmem:[%s3727 + $0xb4] sm:$0xe]
        %v4874 = vrot.slane %v4810, 5
        %v4875 = vrot.slane %v4874, 4
        %v4876 = vrot.slane %v4086, 5
        %v4877 = vsel %vm1763, %v4875, %v4876
        %v4878 = vrot.slane %v4876, 4
        %v4879 = vrot.slane %v4087, 5
        %v4880 = vsel %vm1763, %v4878, %v4879
        %v4881 = vrot.slane %v4811, 5
        %v4882 = vrot.slane %v4881, 4
        %v4883 = vrot.slane %v4089, 5
        %v4884 = vsel %vm1763, %v4882, %v4883
        %v4885 = vrot.slane %v4883, 4
        %v4886 = vrot.slane %v4090, 5
        %v4887 = vsel %vm1763, %v4885, %v4886
        %v4888 = vrot.slane %v4812, 5
        %v4889 = vrot.slane %v4888, 4
        %v4890 = vrot.slane %v4092, 5
        %v4891 = vsel %vm1763, %v4889, %v4890
        %v4892 = vrot.slane %v4890, 4
        %v4893 = vrot.slane %v4093, 5
        %v4894 = vsel %vm1763, %v4892, %v4893
        %v4895 = vrot.slane %v4813, 5
        %v4896 = vrot.slane %v4895, 4
        %v4897 = vrot.slane %v4095, 5
        %v4898 = vsel %vm1763, %v4896, %v4897
        %v4899 = vrot.slane %v4897, 4
        %v4900 = vrot.slane %v4096, 5
        %v4901 = vsel %vm1763, %v4899, %v4900
        %v4902 = vrot.slane %v4814, 5
        %v4903 = vrot.slane %v4902, 4
        %v4904 = vrot.slane %v4098, 5
        %v4905 = vsel %vm1763, %v4903, %v4904
        %v4906 = vrot.slane %v4904, 4
        %v4907 = vrot.slane %v4099, 5
        %v4908 = vsel %vm1763, %v4906, %v4907
        %v4909 = vrot.slane %v4815, 5
        %v4910 = vrot.slane %v4909, 4
        %v4911 = vrot.slane %v4101, 5
        %v4912 = vsel %vm1763, %v4910, %v4911
        %v4913 = vrot.slane %v4911, 4
        %v4914 = vrot.slane %v4102, 5
        %v4915 = vsel %vm1763, %v4913, %v4914
        %v4916 = vrot.slane %v4816, 5
        %v4917 = vrot.slane %v4916, 4
        %v4918 = vrot.slane %v4104, 5
        %v4919 = vsel %vm1763, %v4917, %v4918
        %v4920 = vrot.slane %v4918, 4
        %v4921 = vrot.slane %v4105, 5
        %v4922 = vsel %vm1763, %v4920, %v4921
        %v4923 = vrot.slane %v4817, 5
        %v4924 = vrot.slane %v4923, 4
        %v4925 = vrot.slane %v4107, 5
        %v4926 = vsel %vm1763, %v4924, %v4925
        %v4927 = vrot.slane %v4925, 4
        %v4928 = vrot.slane %v4108, 5
        %v4929 = vsel %vm1763, %v4927, %v4928
        %v4930 = vrot.slane %v4818, 5
        %v4931 = vrot.slane %v4930, 4
        %v4932 = vrot.slane %v4110, 5
        %v4933 = vsel %vm1763, %v4931, %v4932
        %v4934 = vrot.slane %v4932, 4
        %v4935 = vrot.slane %v4111, 5
        %v4936 = vsel %vm1763, %v4934, %v4935
        %v4937 = vrot.slane %v4819, 5
        %v4938 = vrot.slane %v4937, 4
        %v4939 = vrot.slane %v4113, 5
        %v4940 = vsel %vm1763, %v4938, %v4939
        %v4941 = vrot.slane %v4939, 4
        %v4942 = vrot.slane %v4114, 5
        %v4943 = vsel %vm1763, %v4941, %v4942
        %v4944 = vrot.slane %v4820, 5
        %v4945 = vrot.slane %v4944, 4
        %v4946 = vrot.slane %v4116, 5
        %v4947 = vsel %vm1763, %v4945, %v4946
        %v4948 = vrot.slane %v4946, 4
        %v4949 = vrot.slane %v4117, 5
        %v4950 = vsel %vm1763, %v4948, %v4949
        %v4951 = vrot.slane %v4821, 5
        %v4952 = vrot.slane %v4951, 4
        %v4953 = vrot.slane %v4119, 5
        %v4954 = vsel %vm1763, %v4952, %v4953
        %v4955 = vrot.slane %v4953, 4
        %v4956 = vrot.slane %v4120, 5
        %v4957 = vsel %vm1763, %v4955, %v4956
        %v4958 = vrot.slane %v4822, 5
        %v4959 = vrot.slane %v4958, 4
        %v4960 = vrot.slane %v4122, 5
        %v4961 = vsel %vm1763, %v4959, %v4960
        %v4962 = vrot.slane %v4960, 4
        %v4963 = vrot.slane %v4123, 5
        %v4964 = vsel %vm1763, %v4962, %v4963
        %v4965 = vrot.slane %v4823, 5
        %v4966 = vrot.slane %v4965, 4
        %v4967 = vrot.slane %v4125, 5
        %v4968 = vsel %vm1763, %v4966, %v4967
        %v4969 = vrot.slane %v4967, 4
        %v4970 = vrot.slane %v4126, 5
        %v4971 = vsel %vm1763, %v4969, %v4970
        %v4972 = vrot.slane %v4824, 5
        %v4973 = vrot.slane %v4972, 4
        %v4974 = vrot.slane %v4128, 5
        %v4975 = vsel %vm1763, %v4973, %v4974
        %v4976 = vrot.slane %v4974, 4
        %v4977 = vrot.slane %v4129, 5
        %v4978 = vsel %vm1763, %v4976, %v4977
        %v4979 = vrot.slane %v4825, 5
        %v4980 = vrot.slane %v4979, 4
        %v4981 = vrot.slane %v4131, 5
        %v4982 = vsel %vm1763, %v4980, %v4981
        %v4983 = vrot.slane %v4981, 4
        %v4984 = vrot.slane %v4132, 5
        %v4985 = vsel %vm1763, %v4983, %v4984
        %v4986 = vld [vmem:[%s1 + $0x20] sm:$0xf]
        %v4987 = vunpack.c.l.b16 %v4877
        %v4988 = vunpack.c.l.b16 %v4880
        %v4989 = vunpack.c.l.b16 %v4884
        %v4990 = vunpack.c.l.b16 %v4887
        %v4991 = vunpack.c.l.b16 %v4891
        %v4992 = vunpack.c.l.b16 %v4894
        %v4993 = vunpack.c.l.b16 %v4898
        %v4994 = vunpack.c.l.b16 %v4901
        %v4995 = vunpack.c.l.b16 %v4905
        %v4996 = vunpack.c.l.b16 %v4908
        %v4997 = vunpack.c.l.b16 %v4912
        %v4998 = vunpack.c.l.b16 %v4915
        %v4999 = vunpack.c.l.b16 %v4919
        %v5000 = vunpack.c.l.b16 %v4922
        %v5001 = vunpack.c.l.b16 %v4926
        %v5002 = vunpack.c.l.b16 %v4929
        %v5003 = vunpack.c.l.b16 %v4933
        %v5004 = vunpack.c.l.b16 %v4936
        %v5005 = vunpack.c.l.b16 %v4940
        %v5006 = vunpack.c.l.b16 %v4943
        %v5007 = vunpack.c.l.b16 %v4947
        %v5008 = vunpack.c.l.b16 %v4950
        %v5009 = vunpack.c.l.b16 %v4954
        %v5010 = vunpack.c.l.b16 %v4957
        %v5011 = vunpack.c.l.b16 %v4961
        %v5012 = vunpack.c.l.b16 %v4964
        %v5013 = vunpack.c.l.b16 %v4968
        %v5014 = vunpack.c.l.b16 %v4971
        %v5015 = vunpack.c.l.b16 %v4975
        %v5016 = vunpack.c.l.b16 %v4978
        %v5017 = vunpack.c.l.b16 %v4982
        %v5018 = vunpack.c.l.b16 %v4985
        %v5019 = vpack.c.b16 %v4988, %v4987
        %v5020 = vpack.c.b16 %v4990, %v4989
        %v5021 = vpack.c.b16 %v4992, %v4991
        %v5022 = vpack.c.b16 %v4994, %v4993
        %v5023 = vpack.c.b16 %v4996, %v4995
        %v5024 = vpack.c.b16 %v4998, %v4997
        %v5025 = vpack.c.b16 %v5000, %v4999
        %v5026 = vpack.c.b16 %v5002, %v5001
        %v5027 = vpack.c.b16 %v5004, %v5003
        %v5028 = vpack.c.b16 %v5006, %v5005
        %v5029 = vpack.c.b16 %v5008, %v5007
        %v5030 = vpack.c.b16 %v5010, %v5009
        %v5031 = vpack.c.b16 %v5012, %v5011
        %v5032 = vpack.c.b16 %v5014, %v5013
        %v5033 = vpack.c.b16 %v5016, %v5015
        %v5034 = vpack.c.b16 %v5018, %v5017
        %v5036 = vsel %vm1207, %v5019, 0
        %v5039 = vsel %vm1207, %v5020, 0
        %v5042 = vsel %vm1207, %v5021, 0
        %v5045 = vsel %vm1207, %v5022, 0
        %v5048 = vsel %vm1207, %v5023, 0
        %v5051 = vsel %vm1207, %v5024, 0
        %v5054 = vsel %vm1207, %v5025, 0
        %v5057 = vsel %vm1207, %v5026, 0
        %v5060 = vsel %vm1207, %v5027, 0
        %v5063 = vsel %vm1207, %v5028, 0
        %v5066 = vsel %vm1207, %v5029, 0
        %v5069 = vsel %vm1207, %v5030, 0
        %v5072 = vsel %vm1207, %v5031, 0
        %v5075 = vsel %vm1207, %v5032, 0
        %v5078 = vsel %vm1207, %v5033, 0
        %v5081 = vsel %vm1207, %v5034, 0
        %v5084 = vsel %vm1256, %v4986, 0
        %5086 = vmatprep.subr.bf16.mxu0 0
        %5087 = vmatpush1.bf16.msra.mxu0 %v5084
        %5088 = vmatprep.subr.bf16.mxu0 0
        %5089 = vmatpush1.bf16.msra.mxu0 0
        %5090 = vmatprep.subr.bf16.mxu0 0
        %5091 = vmatpush1.bf16.msra.mxu0 0
        %5092 = vmatprep.subr.bf16.mxu0 0
        %5093 = vmatpush1.bf16.msra.mxu0 0
        %5094 = vmatprep.subr.bf16.mxu0 0
        %5095 = vmatpush1.bf16.msra.mxu0 0
        %5096 = vmatprep.subr.bf16.mxu0 0
        %5097 = vmatpush1.bf16.msra.mxu0 0
        %5098 = vmatprep.subr.bf16.mxu0 0
        %5099 = vmatpush1.bf16.msra.mxu0 0
        %5100 = vmatprep.subr.bf16.mxu0 0
        %5101 = vmatpush1.bf16.msra.mxu0 0
        %5102 = vmatprep.subr.bf16.mxu0 0
        %5103 = vmatpush1.bf16.msra.mxu0 0
        %5104 = vmatprep.subr.bf16.mxu0 0
        %5105 = vmatpush1.bf16.msra.mxu0 0
        %5106 = vmatprep.subr.bf16.mxu0 0
        %5107 = vmatpush1.bf16.msra.mxu0 0
        %5108 = vmatprep.subr.bf16.mxu0 0
        %5109 = vmatpush1.bf16.msra.mxu0 0
        %5110 = vmatprep.subr.bf16.mxu0 0
        %5111 = vmatpush1.bf16.msra.mxu0 0
        %5112 = vmatprep.subr.bf16.mxu0 0
        %5113 = vmatpush1.bf16.msra.mxu0 0
        %5114 = vmatprep.subr.bf16.mxu0 0
        %5115 = vmatpush1.bf16.msra.mxu0 0
        %5116 = vmatprep.subr.bf16.mxu0 0
        %5117 = vmatpush1.bf16.msra.mxu0 0
        %5118 = vmatprep.mubr.bf16.mxu0 0
        %5119 = vmatmul.mubr.bf16.gmra.mrb[0].mxu0 %v5036
        %v5120 = vpop.f32.mrb[0].mxu0
        %v5121 = vadd.f32 0.0, %v5120
        %v5122 = vpop.f32.mrb[0].mxu0
        %v5123 = vpop.f32.mrb[0].mxu0
        %v5124 = vadd.f32 0.0, %v5123
        %v5125 = vpop.f32.mrb[0].mxu0
        %5126 = vmatprep.mubr.bf16.mxu0 0
        %5127 = vmatmul.mubr.bf16.gmra.mrb[0].mxu0 %v5039
        %v5128 = vpop.f32.mrb[0].mxu0
        %v5129 = vadd.f32 0.0, %v5128
        %v5130 = vpop.f32.mrb[0].mxu0
        %v5131 = vpop.f32.mrb[0].mxu0
        %v5132 = vadd.f32 0.0, %v5131
        %v5133 = vpop.f32.mrb[0].mxu0
        %5134 = vmatprep.mubr.bf16.mxu0 0
        %5135 = vmatmul.mubr.bf16.gmra.mrb[0].mxu0 %v5042
        %v5136 = vpop.f32.mrb[0].mxu0
        %v5137 = vadd.f32 0.0, %v5136
        %v5138 = vpop.f32.mrb[0].mxu0
        %v5139 = vpop.f32.mrb[0].mxu0
        %v5140 = vadd.f32 0.0, %v5139
        %v5141 = vpop.f32.mrb[0].mxu0
        %5142 = vmatprep.mubr.bf16.mxu0 0
        %5143 = vmatmul.mubr.bf16.gmra.mrb[0].mxu0 %v5045
        %v5144 = vpop.f32.mrb[0].mxu0
        %v5145 = vadd.f32 0.0, %v5144
        %v5146 = vpop.f32.mrb[0].mxu0
        %v5147 = vpop.f32.mrb[0].mxu0
        %v5148 = vadd.f32 0.0, %v5147
        %v5149 = vpop.f32.mrb[0].mxu0
        %5150 = vmatprep.mubr.bf16.mxu0 0
        %5151 = vmatmul.mubr.bf16.gmra.mrb[0].mxu0 %v5048
        %v5152 = vpop.f32.mrb[0].mxu0
        %v5153 = vadd.f32 0.0, %v5152
        %v5154 = vpop.f32.mrb[0].mxu0
        %v5155 = vpop.f32.mrb[0].mxu0
        %v5156 = vadd.f32 0.0, %v5155
        %v5157 = vpop.f32.mrb[0].mxu0
        %5158 = vmatprep.mubr.bf16.mxu0 0
        %5159 = vmatmul.mubr.bf16.gmra.mrb[0].mxu0 %v5051
        %v5160 = vpop.f32.mrb[0].mxu0
        %v5161 = vadd.f32 0.0, %v5160
        %v5162 = vpop.f32.mrb[0].mxu0
        %v5163 = vpop.f32.mrb[0].mxu0
        %v5164 = vadd.f32 0.0, %v5163
        %v5165 = vpop.f32.mrb[0].mxu0
        %5166 = vmatprep.mubr.bf16.mxu0 0
        %5167 = vmatmul.mubr.bf16.gmra.mrb[0].mxu0 %v5054
        %v5168 = vpop.f32.mrb[0].mxu0
        %v5169 = vadd.f32 0.0, %v5168
        %v5170 = vpop.f32.mrb[0].mxu0
        %v5171 = vpop.f32.mrb[0].mxu0
        %v5172 = vadd.f32 0.0, %v5171
        %v5173 = vpop.f32.mrb[0].mxu0
        %5174 = vmatprep.mubr.bf16.mxu0 0
        %5175 = vmatmul.mubr.bf16.gmra.mrb[0].mxu0 %v5057
        %v5176 = vpop.f32.mrb[0].mxu0
        %v5177 = vadd.f32 0.0, %v5176
        %v5178 = vpop.f32.mrb[0].mxu0
        %v5179 = vpop.f32.mrb[0].mxu0
        %v5180 = vadd.f32 0.0, %v5179
        %v5181 = vpop.f32.mrb[0].mxu0
        %5182 = vmatprep.mubr.bf16.mxu0 0
        %5183 = vmatmul.mubr.bf16.gmra.mrb[0].mxu0 %v5060
        %v5184 = vpop.f32.mrb[0].mxu0
        %v5185 = vadd.f32 0.0, %v5184
        %v5186 = vpop.f32.mrb[0].mxu0
        %v5187 = vpop.f32.mrb[0].mxu0
        %v5188 = vadd.f32 0.0, %v5187
        %v5189 = vpop.f32.mrb[0].mxu0
        %5190 = vmatprep.mubr.bf16.mxu0 0
        %5191 = vmatmul.mubr.bf16.gmra.mrb[0].mxu0 %v5063
        %v5192 = vpop.f32.mrb[0].mxu0
        %v5193 = vadd.f32 0.0, %v5192
        %v5194 = vpop.f32.mrb[0].mxu0
        %v5195 = vpop.f32.mrb[0].mxu0
        %v5196 = vadd.f32 0.0, %v5195
        %v5197 = vpop.f32.mrb[0].mxu0
        %5198 = vmatprep.mubr.bf16.mxu0 0
        %5199 = vmatmul.mubr.bf16.gmra.mrb[0].mxu0 %v5066
        %v5200 = vpop.f32.mrb[0].mxu0
        %v5201 = vadd.f32 0.0, %v5200
        %v5202 = vpop.f32.mrb[0].mxu0
        %v5203 = vpop.f32.mrb[0].mxu0
        %v5204 = vadd.f32 0.0, %v5203
        %v5205 = vpop.f32.mrb[0].mxu0
        %5206 = vmatprep.mubr.bf16.mxu0 0
        %5207 = vmatmul.mubr.bf16.gmra.mrb[0].mxu0 %v5069
        %v5208 = vpop.f32.mrb[0].mxu0
        %v5209 = vadd.f32 0.0, %v5208
        %v5210 = vpop.f32.mrb[0].mxu0
        %v5211 = vpop.f32.mrb[0].mxu0
        %v5212 = vadd.f32 0.0, %v5211
        %v5213 = vpop.f32.mrb[0].mxu0
        %5214 = vmatprep.mubr.bf16.mxu0 0
        %5215 = vmatmul.mubr.bf16.gmra.mrb[0].mxu0 %v5072
        %v5216 = vpop.f32.mrb[0].mxu0
        %v5217 = vadd.f32 0.0, %v5216
        %v5218 = vpop.f32.mrb[0].mxu0
        %v5219 = vpop.f32.mrb[0].mxu0
        %v5220 = vadd.f32 0.0, %v5219
        %v5221 = vpop.f32.mrb[0].mxu0
        %5222 = vmatprep.mubr.bf16.mxu0 0
        %5223 = vmatmul.mubr.bf16.gmra.mrb[0].mxu0 %v5075
        %v5224 = vpop.f32.mrb[0].mxu0
        %v5225 = vadd.f32 0.0, %v5224
        %v5226 = vpop.f32.mrb[0].mxu0
        %v5227 = vpop.f32.mrb[0].mxu0
        %v5228 = vadd.f32 0.0, %v5227
        %v5229 = vpop.f32.mrb[0].mxu0
        %5230 = vmatprep.mubr.bf16.mxu0 0
        %5231 = vmatmul.mubr.bf16.gmra.mrb[0].mxu0 %v5078
        %v5232 = vpop.f32.mrb[0].mxu0
        %v5233 = vadd.f32 0.0, %v5232
        %v5234 = vpop.f32.mrb[0].mxu0
        %v5235 = vpop.f32.mrb[0].mxu0
        %v5236 = vadd.f32 0.0, %v5235
        %v5237 = vpop.f32.mrb[0].mxu0
        %5238 = vmatprep.mubr.bf16.mxu0 0
        %5239 = vmatmul.mubr.bf16.gmra.mrb[0].mxu0 %v5081
        %v5240 = vpop.f32.mrb[0].mxu0
        %v5241 = vadd.f32 0.0, %v5240
        %v5242 = vpop.f32.mrb[0].mxu0
        %v5243 = vpop.f32.mrb[0].mxu0
        %v5244 = vadd.f32 0.0, %v5243
        %v5245 = vpop.f32.mrb[0].mxu0
        %5246 = vdwg.mxu0
        %v5247 = vadd.f32 %v4778, %v5121
        %v5248 = vadd.f32 %v4779, %v5124
        %v5249 = vadd.f32 %v4780, %v5129
        %v5250 = vadd.f32 %v4781, %v5132
        %v5251 = vadd.f32 %v4782, %v5137
        %v5252 = vadd.f32 %v4783, %v5140
        %v5253 = vadd.f32 %v4784, %v5145
        %v5254 = vadd.f32 %v4785, %v5148
        %v5255 = vadd.f32 %v4786, %v5153
        %v5256 = vadd.f32 %v4787, %v5156
        %v5257 = vadd.f32 %v4788, %v5161
        %v5258 = vadd.f32 %v4789, %v5164
        %v5259 = vadd.f32 %v4790, %v5169
        %v5260 = vadd.f32 %v4791, %v5172
        %v5261 = vadd.f32 %v4792, %v5177
        %v5262 = vadd.f32 %v4793, %v5180
        %v5263 = vadd.f32 %v4794, %v5185
        %v5264 = vadd.f32 %v4795, %v5188
        %v5265 = vadd.f32 %v4796, %v5193
        %v5266 = vadd.f32 %v4797, %v5196
        %v5267 = vadd.f32 %v4798, %v5201
        %v5268 = vadd.f32 %v4799, %v5204
        %v5269 = vadd.f32 %v4800, %v5209
        %v5270 = vadd.f32 %v4801, %v5212
        %v5271 = vadd.f32 %v4802, %v5217
        %v5272 = vadd.f32 %v4803, %v5220
        %v5273 = vadd.f32 %v4804, %v5225
        %v5274 = vadd.f32 %v4805, %v5228
        %v5275 = vadd.f32 %v4806, %v5233
        %v5276 = vadd.f32 %v4807, %v5236
        %v5277 = vadd.f32 %v4808, %v5241
        %v5278 = vadd.f32 %v4809, %v5244
        %v5279 = vld [vmem:[%s2] sm:$0x1]
        %v5281 = vlaneseq
        %v5282 = vshrl.u32 %v5281, 7
        %v5283 = vsub.s32 0, %v5282
        %v5284 = vrot.slane %v5279, %v5283
        %v5286 = vadd.f32 %v5247, %v5284
        %v5287 = vadd.f32 %v5248, %v5284
        %v5288 = vadd.f32 %v5249, %v5284
        %v5289 = vadd.f32 %v5250, %v5284
        %v5290 = vadd.f32 %v5251, %v5284
        %v5291 = vadd.f32 %v5252, %v5284
        %v5292 = vadd.f32 %v5253, %v5284
        %v5293 = vadd.f32 %v5254, %v5284
        %v5294 = vadd.f32 %v5255, %v5284
        %v5295 = vadd.f32 %v5256, %v5284
        %v5296 = vadd.f32 %v5257, %v5284
        %v5297 = vadd.f32 %v5258, %v5284
        %v5298 = vadd.f32 %v5259, %v5284
        %v5299 = vadd.f32 %v5260, %v5284
        %v5300 = vadd.f32 %v5261, %v5284
        %v5301 = vadd.f32 %v5262, %v5284
        %v5302 = vadd.f32 %v5263, %v5284
        %v5303 = vadd.f32 %v5264, %v5284
        %v5304 = vadd.f32 %v5265, %v5284
        %v5305 = vadd.f32 %v5266, %v5284
        %v5306 = vadd.f32 %v5267, %v5284
        %v5307 = vadd.f32 %v5268, %v5284
        %v5308 = vadd.f32 %v5269, %v5284
        %v5309 = vadd.f32 %v5270, %v5284
        %v5310 = vadd.f32 %v5271, %v5284
        %v5311 = vadd.f32 %v5272, %v5284
        %v5312 = vadd.f32 %v5273, %v5284
        %v5313 = vadd.f32 %v5274, %v5284
        %v5314 = vadd.f32 %v5275, %v5284
        %v5315 = vadd.f32 %v5276, %v5284
        %v5316 = vadd.f32 %v5277, %v5284
        %v5317 = vadd.f32 %v5278, %v5284
        %v5318 = vmax.f32 %v5286, 0.0
        %v5319 = vmax.f32 %v5287, 0.0
        %v5320 = vmax.f32 %v5288, 0.0
        %v5321 = vmax.f32 %v5289, 0.0
        %v5322 = vmax.f32 %v5290, 0.0
        %v5323 = vmax.f32 %v5291, 0.0
        %v5324 = vmax.f32 %v5292, 0.0
        %v5325 = vmax.f32 %v5293, 0.0
        %v5326 = vmax.f32 %v5294, 0.0
        %v5327 = vmax.f32 %v5295, 0.0
        %v5328 = vmax.f32 %v5296, 0.0
        %v5329 = vmax.f32 %v5297, 0.0
        %v5330 = vmax.f32 %v5298, 0.0
        %v5331 = vmax.f32 %v5299, 0.0
        %v5332 = vmax.f32 %v5300, 0.0
        %v5333 = vmax.f32 %v5301, 0.0
        %v5334 = vmax.f32 %v5302, 0.0
        %v5335 = vmax.f32 %v5303, 0.0
        %v5336 = vmax.f32 %v5304, 0.0
        %v5337 = vmax.f32 %v5305, 0.0
        %v5338 = vmax.f32 %v5306, 0.0
        %v5339 = vmax.f32 %v5307, 0.0
        %v5340 = vmax.f32 %v5308, 0.0
        %v5341 = vmax.f32 %v5309, 0.0
        %v5342 = vmax.f32 %v5310, 0.0
        %v5343 = vmax.f32 %v5311, 0.0
        %v5344 = vmax.f32 %v5312, 0.0
        %v5345 = vmax.f32 %v5313, 0.0
        %v5346 = vmax.f32 %v5314, 0.0
        %v5347 = vmax.f32 %v5315, 0.0
        %v5348 = vmax.f32 %v5316, 0.0
        %v5349 = vmax.f32 %v5317, 0.0
        %v5350 = vpack.c.bf16 %v5319, %v5318
        %v5351 = vpack.c.bf16 %v5321, %v5320
        %v5352 = vpack.c.bf16 %v5323, %v5322
        %v5353 = vpack.c.bf16 %v5325, %v5324
        %v5354 = vpack.c.bf16 %v5327, %v5326
        %v5355 = vpack.c.bf16 %v5329, %v5328
        %v5356 = vpack.c.bf16 %v5331, %v5330
        %v5357 = vpack.c.bf16 %v5333, %v5332
        %v5358 = vpack.c.bf16 %v5335, %v5334
        %v5359 = vpack.c.bf16 %v5337, %v5336
        %v5360 = vpack.c.bf16 %v5339, %v5338
        %v5361 = vpack.c.bf16 %v5341, %v5340
        %v5362 = vpack.c.bf16 %v5343, %v5342
        %v5363 = vpack.c.bf16 %v5345, %v5344
        %v5364 = vpack.c.bf16 %v5347, %v5346
        %v5365 = vpack.c.bf16 %v5349, %v5348
        %v5382 = vunpack.c.l.b16 %v5350
        %v5383 = vunpack.c.h.b16 %v5350
        %v5384 = vunpack.c.l.b16 %v5351
        %v5385 = vunpack.c.h.b16 %v5351
        %v5386 = vunpack.c.l.b16 %v5352
        %v5387 = vunpack.c.h.b16 %v5352
        %v5388 = vunpack.c.l.b16 %v5353
        %v5389 = vunpack.c.h.b16 %v5353
        %v5390 = vunpack.c.l.b16 %v5354
        %v5391 = vunpack.c.h.b16 %v5354
        %v5392 = vunpack.c.l.b16 %v5355
        %v5393 = vunpack.c.h.b16 %v5355
        %v5394 = vunpack.c.l.b16 %v5356
        %v5395 = vunpack.c.h.b16 %v5356
        %v5396 = vunpack.c.l.b16 %v5357
        %v5397 = vunpack.c.h.b16 %v5357
        %v5398 = vunpack.c.l.b16 %v5358
        %v5399 = vunpack.c.h.b16 %v5358
        %v5400 = vunpack.c.l.b16 %v5359
        %v5401 = vunpack.c.h.b16 %v5359
        %v5402 = vunpack.c.l.b16 %v5360
        %v5403 = vunpack.c.h.b16 %v5360
        %v5404 = vunpack.c.l.b16 %v5361
        %v5405 = vunpack.c.h.b16 %v5361
        %v5406 = vunpack.c.l.b16 %v5362
        %v5407 = vunpack.c.h.b16 %v5362
        %v5408 = vunpack.c.l.b16 %v5363
        %v5409 = vunpack.c.h.b16 %v5363
        %v5410 = vunpack.c.l.b16 %v5364
        %v5411 = vunpack.c.h.b16 %v5364
        %v5412 = vunpack.c.l.b16 %v5365
        %v5413 = vunpack.c.h.b16 %v5365
        %v5414 = vpack.c.b16 %v5382, %v5382
        %v5415 = vpack.c.b16 %v5383, %v5383
        %v5416 = vpack.c.b16 %v5384, %v5384
        %v5417 = vpack.c.b16 %v5385, %v5385
        %v5418 = vpack.c.b16 %v5386, %v5386
        %v5419 = vpack.c.b16 %v5387, %v5387
        %v5420 = vpack.c.b16 %v5388, %v5388
        %v5421 = vpack.c.b16 %v5389, %v5389
        %v5422 = vpack.c.b16 %v5390, %v5390
        %v5423 = vpack.c.b16 %v5391, %v5391
        %v5424 = vpack.c.b16 %v5392, %v5392
        %v5425 = vpack.c.b16 %v5393, %v5393
        %v5426 = vpack.c.b16 %v5394, %v5394
        %v5427 = vpack.c.b16 %v5395, %v5395
        %v5428 = vpack.c.b16 %v5396, %v5396
        %v5429 = vpack.c.b16 %v5397, %v5397
        %v5430 = vpack.c.b16 %v5398, %v5398
        %v5431 = vpack.c.b16 %v5399, %v5399
        %v5432 = vpack.c.b16 %v5400, %v5400
        %v5433 = vpack.c.b16 %v5401, %v5401
        %v5434 = vpack.c.b16 %v5402, %v5402
        %v5435 = vpack.c.b16 %v5403, %v5403
        %v5436 = vpack.c.b16 %v5404, %v5404
        %v5437 = vpack.c.b16 %v5405, %v5405
        %v5438 = vpack.c.b16 %v5406, %v5406
        %v5439 = vpack.c.b16 %v5407, %v5407
        %v5440 = vpack.c.b16 %v5408, %v5408
        %v5441 = vpack.c.b16 %v5409, %v5409
        %v5442 = vpack.c.b16 %v5410, %v5410
        %v5443 = vpack.c.b16 %v5411, %v5411
        %v5444 = vpack.c.b16 %v5412, %v5412
        %v5445 = vpack.c.b16 %v5413, %v5413
        %5478 = vst [vmem:[%s177] sm:$0xf] %v5414
        %5479 = vst [vmem:[%s177 + $0x4] sm:$0xf] %v5415
        %5480 = vst [vmem:[%s177 + $0x8] sm:$0xf] %v5416
        %5481 = vst [vmem:[%s177 + $0xc] sm:$0xf] %v5417
        %5482 = vst [vmem:[%s177 + $0x10] sm:$0xf] %v5418
        %5483 = vst [vmem:[%s177 + $0x14] sm:$0xf] %v5419
        %5484 = vst [vmem:[%s177 + $0x18] sm:$0xf] %v5420
        %5485 = vst [vmem:[%s177 + $0x1c] sm:$0xf] %v5421
        %5486 = vst [vmem:[%s177 + $0x20] sm:$0xf] %v5422
        %5487 = vst [vmem:[%s177 + $0x24] sm:$0xf] %v5423
        %5488 = vst [vmem:[%s177 + $0x28] sm:$0xf] %v5424
        %5489 = vst [vmem:[%s177 + $0x2c] sm:$0xf] %v5425
        %5490 = vst [vmem:[%s177 + $0x30] sm:$0xf] %v5426
        %5491 = vst [vmem:[%s177 + $0x34] sm:$0xf] %v5427
        %5492 = vst [vmem:[%s177 + $0x38] sm:$0xf] %v5428
        %5493 = vst [vmem:[%s177 + $0x3c] sm:$0xf] %v5429
        %5494 = vst [vmem:[%s177 + $0x40] sm:$0xf] %v5430
        %5495 = vst [vmem:[%s177 + $0x44] sm:$0xf] %v5431
        %5496 = vst [vmem:[%s177 + $0x48] sm:$0xf] %v5432
        %5497 = vst [vmem:[%s177 + $0x4c] sm:$0xf] %v5433
        %5498 = vst [vmem:[%s177 + $0x50] sm:$0xf] %v5434
        %5499 = vst [vmem:[%s177 + $0x54] sm:$0xf] %v5435
        %5500 = vst [vmem:[%s177 + $0x58] sm:$0xf] %v5436
        %5501 = vst [vmem:[%s177 + $0x5c] sm:$0xf] %v5437
        %5502 = vst [vmem:[%s177 + $0x60] sm:$0xf] %v5438
        %5503 = vst [vmem:[%s177 + $0x64] sm:$0xf] %v5439
        %5504 = vst [vmem:[%s177 + $0x68] sm:$0xf] %v5440
        %5505 = vst [vmem:[%s177 + $0x6c] sm:$0xf] %v5441
        %5506 = vst [vmem:[%s177 + $0x70] sm:$0xf] %v5442
        %5507 = vst [vmem:[%s177 + $0x74] sm:$0xf] %v5443
        %5508 = vst [vmem:[%s177 + $0x78] sm:$0xf] %v5444
        %5509 = vst [vmem:[%s177 + $0x7c] sm:$0xf] %v5445
        %s5510 = sand.u32 %s107, 1
        %s5511 = scalar_lea.sflag [#allocation4], %s5510
        %s5512 = sand.u32 %s107, 1
        %s5513 = smul.addr %s5512, 128
        %s5514 = scalar_lea.vmem [#allocation3], %s5513
        // Predicated region
        $region37: #{tpu_custom_call.1} parent=31 // pred_check
          %p5515 = pneg %p117
        $region38: #{tpu_custom_call.1} parent=31 // pred_check_branch
          %5517 = sbr.rel (%p5515) target = $region40
        $region39: #{tpu_custom_call.1} parent=31 // pred_region
          %s5518 = smul.u32 16, %s22
          %s5520 = ssub.s32 2048, 2048
          %5521 = vsyncadd %s5511, %s5520
          %s5522 = smul.addr %s5518, 2
          %s5523 = smul.addr %s21, 32
          %s5524 = sadd.s32 %s5522, %s5523
          %s5525 = smul.addr %s5524, 64
          %s5526 = scalar_lea.hbm %s3, %s5525
          %s5527 = sshll.u32 %s5514, 4
          %s5528 = int_to_ptr.vmem [resolvable:$true] %s5527
          %5533 = dma.vmem_to_hbm [thread:$0]  %s5528, 2048, %s5526, %s5511, 64, 64, 4
        $region40: #{tpu_custom_call.1} parent=31 // pred_fallthru
          _
      $region32: #{tpu_custom_call.1} parent=5 // pred_fallthru
        _
      %p5534 = scmp.le.s32.totalorder 2, %s12
      // Predicated region
      $region41: #{tpu_custom_call.1} parent=5 // pred_check
        %p5535 = pneg %p5534
      $region42: #{tpu_custom_call.1} parent=5 // pred_check_branch
        %5537 = sbr.rel (%p5535) target = $region44
      $region43: #{tpu_custom_call.1} parent=5 // pred_region
        %s5538 = ssub.s32 %s12, 2
        // Predicated region
        $region45: #{tpu_custom_call.1} parent=43 // pred_check
          %p5539 = pneg %p123
        $region46: #{tpu_custom_call.1} parent=43 // pred_check_branch
          %5541 = sbr.rel (%p5539) target = $region48
        $region47: #{tpu_custom_call.1} parent=43 // pred_region
          %s5542 = sand.u32 %s108, 1
          %s5543 = scalar_lea.sflag [#allocation4], %s5542
          %s5544 = sand.u32 %s108, 1
          %s5545 = smul.addr %s5544, 128
          %s5546 = scalar_lea.vmem [#allocation3], %s5545
          %5547 = dma.done %s5543, 2048
        $region48: #{tpu_custom_call.1} parent=43 // pred_fallthru
          _
      $region44: #{tpu_custom_call.1} parent=5 // pred_fallthru
        _
    $region6: #{tpu_custom_call.1} parent=1 // loop_footer
      %s16 = sadd.s32 1, %s12
    $region7: #{tpu_custom_call.1} parent=1 // loop_footer_branch
      %11 = sbr.rel target = $region3
    $region8: #{tpu_custom_call.1} parent=1 // loop_exit
      _
    %5548 = vsyncpa [#allocation4], 1
    %s5549 = scalar_lea.sflag [#allocation4], 1
    %5550 = vsyncpa %s5549, 1

</llo_original>
